<compile_context>
chip_gen: v5e
topology: v5e:2x2
jax: 0.10.0
libtpu: 0.0.40
codegen_flags: <defaults>
</compile_context>

<pallas_src>
import math
import functools

import jax
import jax.numpy as jnp
from jax.experimental import pallas as pl
from jax.experimental.pallas import tpu as pltpu

BF16 = jnp.bfloat16
HP = jax.lax.Precision.HIGHEST   # only used by the pure-JAX reference


def _silu(x):
    return x * jax.nn.sigmoid(x)


def _layernorm(x, gamma, beta, eps=1e-5):
    mu = jnp.mean(x, axis=-1, keepdims=True)
    var = jnp.mean((x - mu) ** 2, axis=-1, keepdims=True)
    return (x - mu) * jax.lax.rsqrt(var + eps) * gamma + beta


# MXU matmuls: bf16 operands, f32 accumulation.  NT/TN dimension numbers are
# the same ones used by jax's own Pallas TPU flash-attention kernels.
def _dot_nn(a, b):
    """(M,K) @ (K,N) -> (M,N)."""
    return jax.lax.dot_general(a.astype(BF16), b.astype(BF16),
                               (((1,), (0,)), ((), ())),
                               preferred_element_type=jnp.float32)


def _dot_nt(a, b):
    """(M,K) x (N,K) -> (M,N)   (contract last dim of both)."""
    return jax.lax.dot_general(a.astype(BF16), b.astype(BF16),
                               (((1,), (1,)), ((), ())),
                               preferred_element_type=jnp.float32)


def _dot_tn(a, b):
    """(K,M) x (K,N) -> (M,N)   (contract first dim of both)."""
    return jax.lax.dot_general(a.astype(BF16), b.astype(BF16),
                               (((0,), (0,)), ((), ())),
                               preferred_element_type=jnp.float32)


# ------------------------------ fused kernel -------------------------------- #

def _fused_kernel(d_k, cutoff,
                  # data / connectivity
                  x_ref, ea_ref, elen_ref, m_bf_ref, mt_j_ref, mt_i_ref,
                  hsel_ref,
                  # edge-processor weights
                  ew1a_ref, ew1b_ref, ew1c_ref, eb1_ref,
                  ew2_ref, eb2_ref, ew3_ref, eb3_ref, eg_ref, ebeta_ref,
                  # attention weights
                  wq_ref, bq_ref, wk_ref, bk_ref, wv_ref, bv_ref,
                  wo_ref, bo_ref,
                  # transformer-layer weights
                  g1_ref, bt1_ref, wf1_ref, bf1_ref, wf2_ref, bf2_ref,
                  g2_ref, bt2_ref,
                  # outputs
                  x_out_ref, ea_out_ref):
    x = x_ref[...]          # (N, D) f32
    ea = ea_ref[...]        # (E, D) f32
    elen = elen_ref[...]    # (E, 1) f32
    m_bf = m_bf_ref[...]    # (N, E) bf16  scatter-add by destination j
    mt_j = mt_j_ref[...]    # (E, N) bf16  gather [j]
    mt_i = mt_i_ref[...]    # (E, N) bf16  gather [i]
    hsel = hsel_ref[...]    # (H, D) bf16  one-hot head membership

    # ------------------------------ EdgeProcessor ---------------------------
    # cat([x_i, x_j, ea]) @ W1 == x[i]@W1a + x[j]@W1b + ea@W1c; node-level
    # products are computed once per node and gathered per edge.
    xa = _dot_nn(x, ew1a_ref[...])                               # (N, D)
    xb = _dot_nn(x, ew1b_ref[...])                               # (N, D)
    h1 = (_dot_nn(mt_i, xa) + _dot_nn(mt_j, xb)
          + _dot_nn(ea, ew1c_ref[...]) + eb1_ref[...])           # (E, D)
    h = _silu(h1)
    h = _silu(_dot_nn(h, ew2_ref[...]) + eb2_ref[...])
    h = _dot_nn(h, ew3_ref[...]) + eb3_ref[...]
    ea_new = ea + _layernorm(h, eg_ref[...], ebeta_ref[...])     # (E, D) f32
    ea_out_ref[...] = ea_new

    # --------------------------- EdgeToNodeAttention ------------------------
    q = _dot_nn(x, wq_ref[...]) + bq_ref[...]                    # (N, D)
    q_e = _dot_nn(mt_j, q)                                       # (E, D) lin_Q(x)[j]
    k = _dot_nn(ea_new, wk_ref[...]) + bk_ref[...]               # (E, D)
    v = _dot_nn(ea_new, wv_ref[...]) + bv_ref[...]               # (E, D)
    phi = 0.5 * (jnp.cos(jnp.pi * elen / cutoff) + 1.0)          # (E, 1)

    # per-head scores, lane-dense (H, E): the d_k reduction runs on the MXU.
    qk = q_e * k                                                 # (E, D) f32
    inv_sqrt_dk = jnp.float32(1.0 / math.sqrt(d_k))
    s_t = _dot_nt(hsel, qk) * inv_sqrt_dk                        # (H, E) f32

    # Segment softmax over edges grouped by destination j, batched over heads.
    # Single global scalar stabilizer (exact: softmax is shift-invariant per
    # segment); clamp the denominator so a fully underflowed segment gives
    # zero attention instead of Inf/NaN.
    c = jnp.max(jnp.max(s_t, axis=1, keepdims=True), axis=0, keepdims=True)
    p_t = jnp.exp(s_t - c)                                       # (H, E) f32
    denom_t = _dot_nn(p_t, mt_j)                                 # (H, N) scatter-add
    denom_e_t = _dot_nn(denom_t, m_bf)                           # (H, E) gather
    alpha_t = p_t * pl.reciprocal(
        jnp.maximum(denom_e_t, jnp.float32(1e-20)), approx=True)  # (H, E)

    # spread alpha per head across its d_k lanes, weight by V and phi, scatter
    alpha_v = _dot_tn(alpha_t, hsel)                             # (E, D)
    weighted = alpha_v * v * phi                                 # (E, D) f32
    attn = _dot_nn(m_bf, weighted)                               # (N, D) scatter by j
    attn = _dot_nn(attn, wo_ref[...]) + bo_ref[...]              # lin_O

    # ----------------------------- TransformerLayer -------------------------
    o1 = _layernorm(x + attn, g1_ref[...], bt1_ref[...])
    f = _dot_nn(_silu(_dot_nn(o1, wf1_ref[...]) + bf1_ref[...]),
                wf2_ref[...]) + bf2_ref[...]
    x_out_ref[...] = _layernorm(o1 + f, g2_ref[...], bt2_ref[...])


# -------------------------------- JAX wrapper -------------------------------- #

def build_connectivity_masks(edge_index, num_nodes):
    """One-hot scatter/gather masks in bf16.  Connectivity is fixed across
    layers/timesteps, so these should be computed once and reused."""
    i = edge_index[0].astype(jnp.int32)
    j = edge_index[1].astype(jnp.int32)
    node = jnp.arange(num_nodes, dtype=jnp.int32)
    m_bf = (node[:, None] == j[None, :]).astype(BF16)   # (N, E) scatter by j
    mt_j = (j[:, None] == node[None, :]).astype(BF16)   # (E, N) gather [j]
    mt_i = (i[:, None] == node[None, :]).astype(BF16)   # (E, N) gather [i]
    return m_bf, mt_j, mt_i


def _vmem_limit_bytes(N, E, D, F, H):
    est = (3 * N * E * 2                 # bf16 connectivity masks
           + 16 * E * D * 4              # edge-sized f32 temporaries
           + 10 * N * D * 4              # node-sized f32 temporaries
           + 8 * H * max(E, N) * 4       # (H,E)/(H,N) softmax path
           + (7 * D * D + 2 * D * F) * 4
           + (1 << 20))                  # bias / misc slack
    # TODO(synk): v7x has only 64 MiB physical VMEM — production sizes must be
    #             tiled; this single-shot budget is capped under v5e/v6e limits.
    return int(min(100 * (1 << 20), max(32 * (1 << 20), 2 * est)))


def mgn_transformer_conv(x, edge_index, edge_attr, edge_len, params,
                         num_heads, cutoff):
    N, D = x.shape
    E = edge_attr.shape[0]
    F = params['wf1'].shape[1]
    d_k = D // num_heads

    m_bf, mt_j, mt_i = build_connectivity_masks(edge_index, N)

    # one-hot head membership: hsel[h, d] = 1 iff d // d_k == h
    hsel = (jnp.arange(D, dtype=jnp.int32)[None, :] // d_k
            == jnp.arange(num_heads, dtype=jnp.int32)[:, None]).astype(BF16)

    # ---- weight plumbing (plain-JAX glue; cast MXU operands to bf16) ----
    ew1a = params['ew1'][:D].astype(BF16)          # x_i block of layer-1
    ew1b = params['ew1'][D:2 * D].astype(BF16)     # x_j block
    ew1c = params['ew1'][2 * D:].astype(BF16)      # edge_attr block

    args = (x, edge_attr, edge_len, m_bf, mt_j, mt_i, hsel,
            ew1a, ew1b, ew1c, params['eb1'],
            params['ew2'].astype(BF16), params['eb2'],
            params['ew3'].astype(BF16), params['eb3'],
            params['eg'], params['ebeta'],
            params['wq'].astype(BF16), params['bq'],
            params['wk'].astype(BF16), params['bk'],
            params['wv'].astype(BF16), params['bv'],
            params['wo'].astype(BF16), params['bo'],
            params['g1'], params['bt1'],
            params['wf1'].astype(BF16), params['bf1'],
            params['wf2'].astype(BF16), params['bf2'],
            params['g2'], params['bt2'])

    vmem = pl.BlockSpec(memory_space=pltpu.MemorySpace.VMEM)
    new_x, new_edge_attr = pl.pallas_call(
        functools.partial(_fused_kernel, d_k, cutoff),
        out_shape=(jax.ShapeDtypeStruct((N, D), jnp.float32),
                   jax.ShapeDtypeStruct((E, D), jnp.float32)),
        in_specs=[vmem] * len(args),
        out_specs=(vmem, vmem),
        compiler_params=pltpu.CompilerParams(
            vmem_limit_bytes=_vmem_limit_bytes(N, E, D, F, num_heads)),
    )(*args)
    return new_x, new_edge_attr


# ------------------------------ pure-JAX reference --------------------------- #

def reference_forward(x, edge_index, edge_attr, edge_len, p, num_heads, cutoff):
    N, D = x.shape
    E = edge_attr.shape[0]
    dk = D // num_heads
    i, j = edge_index[0], edge_index[1]

    def dot(a, b):
        return jnp.dot(a, b, precision=HP)

    # EdgeProcessor
    cat = jnp.concatenate([x[i], x[j], edge_attr], axis=-1)
    h = _silu(dot(cat, p['ew1']) + p['eb1'])
    h = _silu(dot(h, p['ew2']) + p['eb2'])
    h = dot(h, p['ew3']) + p['eb3']
    ea = edge_attr + _layernorm(h, p['eg'], p['ebeta'])

    # EdgeToNodeAttention
    q = dot(x, p['wq']) + p['bq']
    qe = q[j]
    k = dot(ea, p['wk']) + p['bk']
    v = dot(ea, p['wv']) + p['bv']
    phi = 0.5 * (jnp.cos(jnp.pi * edge_len / cutoff) + 1.0)          # (E,1)
    qh = qe.reshape(E, num_heads, dk)
    kh = k.reshape(E, num_heads, dk)
    vh = v.reshape(E, num_heads, dk)
    scores = jnp.sum(qh * kh, axis=-1) / math.sqrt(dk)               # (E,H)
    seg_max = jax.ops.segment_max(scores, j, num_segments=N)
    pexp = jnp.exp(scores - seg_max[j])
    denom = jax.ops.segment_sum(pexp, j, num_segments=N)
    alpha = pexp / denom[j]
    weighted = (alpha[..., None] * vh * phi[:, :, None]).reshape(E, D)
    attn = jax.ops.segment_sum(weighted, j, num_segments=N)
    attn = dot(attn, p['wo']) + p['bo']

    # TransformerLayer residuals
    o1 = _layernorm(x + attn, p['g1'], p['bt1'])
    f = dot(_silu(dot(o1, p['wf1']) + p['bf1']), p['wf2']) + p['bf2']
    out = _layernorm(o1 + f, p['g2'], p['bt2'])
    return out, ea


# --------------------------------- params init ------------------------------- #

def init_params(key, dim, ff_dim):
    ks = jax.random.split(key, 16)

    def w(k, shape, scale=0.1):
        return scale * jax.random.normal(k, shape, dtype=jnp.float32)

    D, F = dim, ff_dim
    return {
        # EdgeProcessor MLP([3D, D, D, D]) + LayerNorm
        'ew1': w(ks[0], (3 * D, D)), 'eb1': w(ks[1], (1, D)),
        'ew2': w(ks[2], (D, D)),     'eb2': w(ks[3], (1, D)),
        'ew3': w(ks[4], (D, D)),     'eb3': w(ks[5], (1, D)),
        'eg': jnp.ones((1, D), jnp.float32), 'ebeta': jnp.zeros((1, D), jnp.float32),
        # EdgeToNodeAttention linears
        'wq': w(ks[6], (D, D)),  'bq': w(ks[7], (1, D)),
        'wk': w(ks[8], (D, D)),  'bk': w(ks[9], (1, D)),
        'wv': w(ks[10], (D, D)), 'bv': w(ks[11], (1, D)),
        'wo': w(ks[12], (D, D)), 'bo': w(ks[13], (1, D)),
        # TransformerLayer norms + FFN
        'g1': jnp.ones((1, D), jnp.float32), 'bt1': jnp.zeros((1, D), jnp.float32),
        'wf1': w(ks[14], (D, F)), 'bf1': jnp.zeros((1, F), jnp.float32),
        'wf2': w(ks[15], (F, D)), 'bf2': jnp.zeros((1, D), jnp.float32),
        'g2': jnp.ones((1, D), jnp.float32), 'bt2': jnp.zeros((1, D), jnp.float32),
    }


if __name__ == "__main__":
    dim, ff_dim, num_heads, cutoff = 32, 64, 4, 5.0
    N, E = 16, 64

    key = jax.random.PRNGKey(0)
    kx, ke, kl, ki, kj, kp = jax.random.split(key, 6)
    x = jax.random.normal(kx, (N, dim), dtype=jnp.float32)
    edge_attr = jax.random.normal(ke, (E, dim), dtype=jnp.float32)
    edge_len = jax.random.uniform(kl, (E, 1), dtype=jnp.float32,
                                  minval=0.1, maxval=cutoff)
    src = jax.random.randint(ki, (E,), 0, N, dtype=jnp.int32)
    dst = jax.random.randint(kj, (E,), 0, N, dtype=jnp.int32)
    edge_index = jnp.stack([src, dst], axis=0)
    params = init_params(kp, dim, ff_dim)

    out_x, out_e = mgn_transformer_conv(x, edge_index, edge_attr, edge_len,
                                        params, num_heads, cutoff)
    out_x = jax.block_until_ready(out_x)
    out_e = jax.block_until_ready(out_e)

    ref_x, ref_e = reference_forward(x, edge_index, edge_attr, edge_len,
                                     params, num_heads, cutoff)

    assert out_x.shape == (N, dim) and out_e.shape == (E, dim)
    assert bool(jnp.all(jnp.isfinite(out_x))) and bool(jnp.all(jnp.isfinite(out_e)))
    err_x = float(jnp.max(jnp.abs(out_x - ref_x)))
    err_e = float(jnp.max(jnp.abs(out_e - ref_e)))
    # kernel uses bf16 MXU operands (f32 accumulation) vs the f32 reference,
    # so allow bf16-level deviation on the ~unit-scale LayerNorm'ed outputs.
    assert err_x < 5e-2 and err_e < 5e-2, (err_x, err_e)
    print("KERNEL_OK")
</pallas_src>

<mosaic_0001>
module attributes {stable_mosaic.version = 11 : i64} {
  func.func @_fused_kernel(%arg0: memref<16x32xf32, #tpu.memory_space<vmem>>, %arg1: memref<64x32xf32, #tpu.memory_space<vmem>>, %arg2: memref<64x1xf32, #tpu.memory_space<vmem>>, %arg3: memref<16x64xbf16, #tpu.memory_space<vmem>>, %arg4: memref<64x16xbf16, #tpu.memory_space<vmem>>, %arg5: memref<64x16xbf16, #tpu.memory_space<vmem>>, %arg6: memref<4x32xbf16, #tpu.memory_space<vmem>>, %arg7: memref<32x32xbf16, #tpu.memory_space<vmem>>, %arg8: memref<32x32xbf16, #tpu.memory_space<vmem>>, %arg9: memref<32x32xbf16, #tpu.memory_space<vmem>>, %arg10: memref<1x32xf32, #tpu.memory_space<vmem>>, %arg11: memref<32x32xbf16, #tpu.memory_space<vmem>>, %arg12: memref<1x32xf32, #tpu.memory_space<vmem>>, %arg13: memref<32x32xbf16, #tpu.memory_space<vmem>>, %arg14: memref<1x32xf32, #tpu.memory_space<vmem>>, %arg15: memref<1x32xf32, #tpu.memory_space<vmem>>, %arg16: memref<1x32xf32, #tpu.memory_space<vmem>>, %arg17: memref<32x32xbf16, #tpu.memory_space<vmem>>, %arg18: memref<1x32xf32, #tpu.memory_space<vmem>>, %arg19: memref<32x32xbf16, #tpu.memory_space<vmem>>, %arg20: memref<1x32xf32, #tpu.memory_space<vmem>>, %arg21: memref<32x32xbf16, #tpu.memory_space<vmem>>, %arg22: memref<1x32xf32, #tpu.memory_space<vmem>>, %arg23: memref<32x32xbf16, #tpu.memory_space<vmem>>, %arg24: memref<1x32xf32, #tpu.memory_space<vmem>>, %arg25: memref<1x32xf32, #tpu.memory_space<vmem>>, %arg26: memref<1x32xf32, #tpu.memory_space<vmem>>, %arg27: memref<32x64xbf16, #tpu.memory_space<vmem>>, %arg28: memref<1x64xf32, #tpu.memory_space<vmem>>, %arg29: memref<64x32xbf16, #tpu.memory_space<vmem>>, %arg30: memref<1x32xf32, #tpu.memory_space<vmem>>, %arg31: memref<1x32xf32, #tpu.memory_space<vmem>>, %arg32: memref<1x32xf32, #tpu.memory_space<vmem>>, %arg33: memref<16x32xf32, #tpu.memory_space<vmem>>, %arg34: memref<64x32xf32, #tpu.memory_space<vmem>>) attributes {dimension_semantics = [], scalar_prefetch = 0 : i64, scratch_operands = 0 : i64, tpu.core_type = #tpu.core_type<tc>} {
    %c0 = arith.constant 0 : index
    %c0_0 = arith.constant 0 : index
    %0 = vector.load %arg0[%c0, %c0_0] : memref<16x32xf32, #tpu.memory_space<vmem>>, vector<16x32xf32>
    %c0_1 = arith.constant 0 : index
    %c0_2 = arith.constant 0 : index
    %1 = vector.load %arg1[%c0_1, %c0_2] : memref<64x32xf32, #tpu.memory_space<vmem>>, vector<64x32xf32>
    %c0_3 = arith.constant 0 : index
    %c0_4 = arith.constant 0 : index
    %2 = vector.load %arg2[%c0_3, %c0_4] : memref<64x1xf32, #tpu.memory_space<vmem>>, vector<64x1xf32>
    %c0_5 = arith.constant 0 : index
    %c0_6 = arith.constant 0 : index
    %3 = vector.load %arg3[%c0_5, %c0_6] : memref<16x64xbf16, #tpu.memory_space<vmem>>, vector<16x64xbf16>
    %c0_7 = arith.constant 0 : index
    %c0_8 = arith.constant 0 : index
    %4 = vector.load %arg4[%c0_7, %c0_8] : memref<64x16xbf16, #tpu.memory_space<vmem>>, vector<64x16xbf16>
    %c0_9 = arith.constant 0 : index
    %c0_10 = arith.constant 0 : index
    %5 = vector.load %arg5[%c0_9, %c0_10] : memref<64x16xbf16, #tpu.memory_space<vmem>>, vector<64x16xbf16>
    %c0_11 = arith.constant 0 : index
    %c0_12 = arith.constant 0 : index
    %6 = vector.load %arg6[%c0_11, %c0_12] : memref<4x32xbf16, #tpu.memory_space<vmem>>, vector<4x32xbf16>
    %c0_13 = arith.constant 0 : index
    %c0_14 = arith.constant 0 : index
    %7 = vector.load %arg7[%c0_13, %c0_14] : memref<32x32xbf16, #tpu.memory_space<vmem>>, vector<32x32xbf16>
    %8 = arith.truncf %0 : vector<16x32xf32> to vector<16x32xbf16>
    %cst = arith.constant dense<0.000000e+00> : vector<16x32xf32>
    %9 = tpu.matmul %8, %7, %cst {dimension_numbers = #tpu.dot_dimension_numbers<[1], [0], [0], [1], [0, 0, 1, 1], [], []>} : vector<16x32xbf16>, vector<32x32xbf16>, vector<16x32xf32> -> vector<16x32xf32>
    %c0_15 = arith.constant 0 : index
    %c0_16 = arith.constant 0 : index
    %10 = vector.load %arg8[%c0_15, %c0_16] : memref<32x32xbf16, #tpu.memory_space<vmem>>, vector<32x32xbf16>
    %11 = arith.truncf %0 : vector<16x32xf32> to vector<16x32xbf16>
    %cst_17 = arith.constant dense<0.000000e+00> : vector<16x32xf32>
    %12 = tpu.matmul %11, %10, %cst_17 {dimension_numbers = #tpu.dot_dimension_numbers<[1], [0], [0], [1], [0, 0, 1, 1], [], []>} : vector<16x32xbf16>, vector<32x32xbf16>, vector<16x32xf32> -> vector<16x32xf32>
    %13 = arith.truncf %9 : vector<16x32xf32> to vector<16x32xbf16>
    %cst_18 = arith.constant dense<0.000000e+00> : vector<64x32xf32>
    %14 = tpu.matmul %5, %13, %cst_18 {dimension_numbers = #tpu.dot_dimension_numbers<[1], [0], [0], [1], [0, 0, 1, 1], [], []>} : vector<64x16xbf16>, vector<16x32xbf16>, vector<64x32xf32> -> vector<64x32xf32>
    %15 = arith.truncf %12 : vector<16x32xf32> to vector<16x32xbf16>
    %cst_19 = arith.constant dense<0.000000e+00> : vector<64x32xf32>
    %16 = tpu.matmul %4, %15, %cst_19 {dimension_numbers = #tpu.dot_dimension_numbers<[1], [0], [0], [1], [0, 0, 1, 1], [], []>} : vector<64x16xbf16>, vector<16x32xbf16>, vector<64x32xf32> -> vector<64x32xf32>
    %17 = arith.addf %14, %16 : vector<64x32xf32>
    %c0_20 = arith.constant 0 : index
    %c0_21 = arith.constant 0 : index
    %18 = vector.load %arg9[%c0_20, %c0_21] : memref<32x32xbf16, #tpu.memory_space<vmem>>, vector<32x32xbf16>
    %19 = arith.truncf %1 : vector<64x32xf32> to vector<64x32xbf16>
    %cst_22 = arith.constant dense<0.000000e+00> : vector<64x32xf32>
    %20 = tpu.matmul %19, %18, %cst_22 {dimension_numbers = #tpu.dot_dimension_numbers<[1], [0], [0], [1], [0, 0, 1, 1], [], []>} : vector<64x32xbf16>, vector<32x32xbf16>, vector<64x32xf32> -> vector<64x32xf32>
    %21 = arith.addf %17, %20 : vector<64x32xf32>
    %c0_23 = arith.constant 0 : index
    %c0_24 = arith.constant 0 : index
    %22 = vector.load %arg10[%c0_23, %c0_24] : memref<1x32xf32, #tpu.memory_space<vmem>>, vector<1x32xf32>
    %23 = vector.broadcast %22 : vector<1x32xf32> to vector<64x32xf32>
    %24 = arith.addf %21, %23 : vector<64x32xf32>
    %25 = arith.negf %24 : vector<64x32xf32>
    %26 = math.exp %25 : vector<64x32xf32>
    %cst_25 = arith.constant 1.000000e+00 : f32
    %27 = vector.broadcast %cst_25 : f32 to vector<64x32xf32>
    %28 = arith.addf %27, %26 : vector<64x32xf32>
    %29 = arith.divf %27, %28 : vector<64x32xf32>
    %30 = arith.mulf %24, %29 : vector<64x32xf32>
    %c0_26 = arith.constant 0 : index
    %c0_27 = arith.constant 0 : index
    %31 = vector.load %arg11[%c0_26, %c0_27] : memref<32x32xbf16, #tpu.memory_space<vmem>>, vector<32x32xbf16>
    %32 = arith.truncf %30 : vector<64x32xf32> to vector<64x32xbf16>
    %cst_28 = arith.constant dense<0.000000e+00> : vector<64x32xf32>
    %33 = tpu.matmul %32, %31, %cst_28 {dimension_numbers = #tpu.dot_dimension_numbers<[1], [0], [0], [1], [0, 0, 1, 1], [], []>} : vector<64x32xbf16>, vector<32x32xbf16>, vector<64x32xf32> -> vector<64x32xf32>
    %c0_29 = arith.constant 0 : index
    %c0_30 = arith.constant 0 : index
    %34 = vector.load %arg12[%c0_29, %c0_30] : memref<1x32xf32, #tpu.memory_space<vmem>>, vector<1x32xf32>
    %35 = vector.broadcast %34 : vector<1x32xf32> to vector<64x32xf32>
    %36 = arith.addf %33, %35 : vector<64x32xf32>
    %37 = arith.negf %36 : vector<64x32xf32>
    %38 = math.exp %37 : vector<64x32xf32>
    %cst_31 = arith.constant 1.000000e+00 : f32
    %39 = vector.broadcast %cst_31 : f32 to vector<64x32xf32>
    %40 = arith.addf %39, %38 : vector<64x32xf32>
    %41 = arith.divf %39, %40 : vector<64x32xf32>
    %42 = arith.mulf %36, %41 : vector<64x32xf32>
    %c0_32 = arith.constant 0 : index
    %c0_33 = arith.constant 0 : index
    %43 = vector.load %arg13[%c0_32, %c0_33] : memref<32x32xbf16, #tpu.memory_space<vmem>>, vector<32x32xbf16>
    %44 = arith.truncf %42 : vector<64x32xf32> to vector<64x32xbf16>
    %cst_34 = arith.constant dense<0.000000e+00> : vector<64x32xf32>
    %45 = tpu.matmul %44, %43, %cst_34 {dimension_numbers = #tpu.dot_dimension_numbers<[1], [0], [0], [1], [0, 0, 1, 1], [], []>} : vector<64x32xbf16>, vector<32x32xbf16>, vector<64x32xf32> -> vector<64x32xf32>
    %c0_35 = arith.constant 0 : index
    %c0_36 = arith.constant 0 : index
    %46 = vector.load %arg14[%c0_35, %c0_36] : memref<1x32xf32, #tpu.memory_space<vmem>>, vector<1x32xf32>
    %47 = vector.broadcast %46 : vector<1x32xf32> to vector<64x32xf32>
    %48 = arith.addf %45, %47 : vector<64x32xf32>
    %c0_37 = arith.constant 0 : index
    %c0_38 = arith.constant 0 : index
    %49 = vector.load %arg15[%c0_37, %c0_38] : memref<1x32xf32, #tpu.memory_space<vmem>>, vector<1x32xf32>
    %c0_39 = arith.constant 0 : index
    %c0_40 = arith.constant 0 : index
    %50 = vector.load %arg16[%c0_39, %c0_40] : memref<1x32xf32, #tpu.memory_space<vmem>>, vector<1x32xf32>
    %cst_41 = arith.constant dense<0.000000e+00> : vector<64xf32>
    %51 = vector.multi_reduction <add>, %48, %cst_41 [1] : vector<64x32xf32> to vector<64xf32>
    %52 = vector.shape_cast %51 : vector<64xf32> to vector<64x1xf32>
    %cst_42 = arith.constant 3.200000e+01 : f32
    %53 = vector.broadcast %cst_42 : f32 to vector<64x1xf32>
    %54 = arith.divf %52, %53 : vector<64x1xf32>
    %55 = vector.broadcast %54 : vector<64x1xf32> to vector<64x32xf32>
    %56 = arith.subf %48, %55 : vector<64x32xf32>
    %57 = arith.mulf %56, %56 : vector<64x32xf32>
    %cst_43 = arith.constant dense<0.000000e+00> : vector<64xf32>
    %58 = vector.multi_reduction <add>, %57, %cst_43 [1] : vector<64x32xf32> to vector<64xf32>
    %59 = vector.shape_cast %58 : vector<64xf32> to vector<64x1xf32>
    %cst_44 = arith.constant 3.200000e+01 : f32
    %60 = vector.broadcast %cst_44 : f32 to vector<64x1xf32>
    %61 = arith.divf %59, %60 : vector<64x1xf32>
    %62 = vector.broadcast %54 : vector<64x1xf32> to vector<64x32xf32>
    %63 = arith.subf %48, %62 : vector<64x32xf32>
    %cst_45 = arith.constant 9.99999974E-6 : f32
    %64 = vector.broadcast %cst_45 : f32 to vector<64x1xf32>
    %65 = arith.addf %61, %64 : vector<64x1xf32>
    %66 = math.rsqrt %65 : vector<64x1xf32>
    %67 = vector.broadcast %66 : vector<64x1xf32> to vector<64x32xf32>
    %68 = arith.mulf %63, %67 : vector<64x32xf32>
    %69 = vector.broadcast %49 : vector<1x32xf32> to vector<64x32xf32>
    %70 = arith.mulf %68, %69 : vector<64x32xf32>
    %71 = vector.broadcast %50 : vector<1x32xf32> to vector<64x32xf32>
    %72 = arith.addf %70, %71 : vector<64x32xf32>
    %73 = arith.addf %1, %72 : vector<64x32xf32>
    %c0_46 = arith.constant 0 : index
    %c0_47 = arith.constant 0 : index
    %74 = vector.load %arg34[%c0_46, %c0_47] : memref<64x32xf32, #tpu.memory_space<vmem>>, vector<64x32xf32>
    tpu.vector_store %arg34[%c0_46, %c0_47], %73 {strides = array<i32>} : memref<64x32xf32, #tpu.memory_space<vmem>>, vector<64x32xf32>,
    %c0_48 = arith.constant 0 : index
    %c0_49 = arith.constant 0 : index
    %75 = vector.load %arg17[%c0_48, %c0_49] : memref<32x32xbf16, #tpu.memory_space<vmem>>, vector<32x32xbf16>
    %76 = arith.truncf %0 : vector<16x32xf32> to vector<16x32xbf16>
    %cst_50 = arith.constant dense<0.000000e+00> : vector<16x32xf32>
    %77 = tpu.matmul %76, %75, %cst_50 {dimension_numbers = #tpu.dot_dimension_numbers<[1], [0], [0], [1], [0, 0, 1, 1], [], []>} : vector<16x32xbf16>, vector<32x32xbf16>, vector<16x32xf32> -> vector<16x32xf32>
    %c0_51 = arith.constant 0 : index
    %c0_52 = arith.constant 0 : index
    %78 = vector.load %arg18[%c0_51, %c0_52] : memref<1x32xf32, #tpu.memory_space<vmem>>, vector<1x32xf32>
    %79 = vector.broadcast %78 : vector<1x32xf32> to vector<16x32xf32>
    %80 = arith.addf %77, %79 : vector<16x32xf32>
    %81 = arith.truncf %80 : vector<16x32xf32> to vector<16x32xbf16>
    %cst_53 = arith.constant dense<0.000000e+00> : vector<64x32xf32>
    %82 = tpu.matmul %4, %81, %cst_53 {dimension_numbers = #tpu.dot_dimension_numbers<[1], [0], [0], [1], [0, 0, 1, 1], [], []>} : vector<64x16xbf16>, vector<16x32xbf16>, vector<64x32xf32> -> vector<64x32xf32>
    %c0_54 = arith.constant 0 : index
    %c0_55 = arith.constant 0 : index
    %83 = vector.load %arg19[%c0_54, %c0_55] : memref<32x32xbf16, #tpu.memory_space<vmem>>, vector<32x32xbf16>
    %84 = arith.truncf %73 : vector<64x32xf32> to vector<64x32xbf16>
    %cst_56 = arith.constant dense<0.000000e+00> : vector<64x32xf32>
    %85 = tpu.matmul %84, %83, %cst_56 {dimension_numbers = #tpu.dot_dimension_numbers<[1], [0], [0], [1], [0, 0, 1, 1], [], []>} : vector<64x32xbf16>, vector<32x32xbf16>, vector<64x32xf32> -> vector<64x32xf32>
    %c0_57 = arith.constant 0 : index
    %c0_58 = arith.constant 0 : index
    %86 = vector.load %arg20[%c0_57, %c0_58] : memref<1x32xf32, #tpu.memory_space<vmem>>, vector<1x32xf32>
    %87 = vector.broadcast %86 : vector<1x32xf32> to vector<64x32xf32>
    %88 = arith.addf %85, %87 : vector<64x32xf32>
    %c0_59 = arith.constant 0 : index
    %c0_60 = arith.constant 0 : index
    %89 = vector.load %arg21[%c0_59, %c0_60] : memref<32x32xbf16, #tpu.memory_space<vmem>>, vector<32x32xbf16>
    %90 = arith.truncf %73 : vector<64x32xf32> to vector<64x32xbf16>
    %cst_61 = arith.constant dense<0.000000e+00> : vector<64x32xf32>
    %91 = tpu.matmul %90, %89, %cst_61 {dimension_numbers = #tpu.dot_dimension_numbers<[1], [0], [0], [1], [0, 0, 1, 1], [], []>} : vector<64x32xbf16>, vector<32x32xbf16>, vector<64x32xf32> -> vector<64x32xf32>
    %c0_62 = arith.constant 0 : index
    %c0_63 = arith.constant 0 : index
    %92 = vector.load %arg22[%c0_62, %c0_63] : memref<1x32xf32, #tpu.memory_space<vmem>>, vector<1x32xf32>
    %93 = vector.broadcast %92 : vector<1x32xf32> to vector<64x32xf32>
    %94 = arith.addf %91, %93 : vector<64x32xf32>
    %cst_64 = arith.constant 3.14159274 : f32
    %95 = vector.broadcast %cst_64 : f32 to vector<64x1xf32>
    %96 = arith.mulf %95, %2 : vector<64x1xf32>
    %cst_65 = arith.constant 5.000000e+00 : f32
    %97 = vector.broadcast %cst_65 : f32 to vector<64x1xf32>
    %98 = arith.divf %96, %97 : vector<64x1xf32>
    %99 = math.cos %98 : vector<64x1xf32>
    %cst_66 = arith.constant 1.000000e+00 : f32
    %100 = vector.broadcast %cst_66 : f32 to vector<64x1xf32>
    %101 = arith.addf %99, %100 : vector<64x1xf32>
    %cst_67 = arith.constant 5.000000e-01 : f32
    %102 = vector.broadcast %cst_67 : f32 to vector<64x1xf32>
    %103 = arith.mulf %102, %101 : vector<64x1xf32>
    %104 = arith.mulf %82, %88 : vector<64x32xf32>
    %105 = arith.truncf %104 : vector<64x32xf32> to vector<64x32xbf16>
    %cst_68 = arith.constant dense<0.000000e+00> : vector<4x64xf32>
    %106 = tpu.matmul %6, %105, %cst_68 {dimension_numbers = #tpu.dot_dimension_numbers<[1], [1], [0], [0], [0, 0, 1, 0], [], []>} : vector<4x32xbf16>, vector<64x32xbf16>, vector<4x64xf32> -> vector<4x64xf32>
    %cst_69 = arith.constant 0.353553385 : f32
    %107 = vector.broadcast %cst_69 : f32 to vector<4x64xf32>
    %108 = arith.mulf %106, %107 : vector<4x64xf32>
    %cst_70 = arith.constant dense<0xFF800000> : vector<4xf32>
    %109 = vector.multi_reduction <maximumf>, %108, %cst_70 [1] : vector<4x64xf32> to vector<4xf32>
    %110 = vector.shape_cast %109 : vector<4xf32> to vector<4x1xf32>
    %cst_71 = arith.constant dense<0xFF800000> : vector<1xf32>
    %111 = vector.multi_reduction <maximumf>, %110, %cst_71 [0] : vector<4x1xf32> to vector<1xf32>
    %112 = vector.shape_cast %111 : vector<1xf32> to vector<1x1xf32>
    %113 = vector.broadcast %112 : vector<1x1xf32> to vector<4x64xf32>
    %114 = arith.subf %108, %113 : vector<4x64xf32>
    %115 = math.exp %114 : vector<4x64xf32>
    %116 = arith.truncf %115 : vector<4x64xf32> to vector<4x64xbf16>
    %cst_72 = arith.constant dense<0.000000e+00> : vector<4x16xf32>
    %117 = tpu.matmul %116, %4, %cst_72 {dimension_numbers = #tpu.dot_dimension_numbers<[1], [0], [0], [1], [0, 0, 1, 1], [], []>} : vector<4x64xbf16>, vector<64x16xbf16>, vector<4x16xf32> -> vector<4x16xf32>
    %118 = arith.truncf %117 : vector<4x16xf32> to vector<4x16xbf16>
    %cst_73 = arith.constant dense<0.000000e+00> : vector<4x64xf32>
    %119 = tpu.matmul %118, %3, %cst_73 {dimension_numbers = #tpu.dot_dimension_numbers<[1], [0], [0], [1], [0, 0, 1, 1], [], []>} : vector<4x16xbf16>, vector<16x64xbf16>, vector<4x64xf32> -> vector<4x64xf32>
    %cst_74 = arith.constant 9.99999968E-21 : f32
    %120 = vector.broadcast %cst_74 : f32 to vector<4x64xf32>
    %121 = arith.maximumf %119, %120 : vector<4x64xf32>
    %122 = tpu.reciprocal %121 {approx = true} : vector<4x64xf32> -> vector<4x64xf32>
    %123 = arith.mulf %115, %122 : vector<4x64xf32>
    %124 = arith.truncf %123 : vector<4x64xf32> to vector<4x64xbf16>
    %cst_75 = arith.constant dense<0.000000e+00> : vector<64x32xf32>
    %125 = tpu.matmul %124, %6, %cst_75 {dimension_numbers = #tpu.dot_dimension_numbers<[0], [0], [1], [1], [0, 1, 1, 1], [], []>} : vector<4x64xbf16>, vector<4x32xbf16>, vector<64x32xf32> -> vector<64x32xf32>
    %126 = arith.mulf %125, %94 : vector<64x32xf32>
    %127 = vector.broadcast %103 : vector<64x1xf32> to vector<64x32xf32>
    %128 = arith.mulf %126, %127 : vector<64x32xf32>
    %129 = arith.truncf %128 : vector<64x32xf32> to vector<64x32xbf16>
    %cst_76 = arith.constant dense<0.000000e+00> : vector<16x32xf32>
    %130 = tpu.matmul %3, %129, %cst_76 {dimension_numbers = #tpu.dot_dimension_numbers<[1], [0], [0], [1], [0, 0, 1, 1], [], []>} : vector<16x64xbf16>, vector<64x32xbf16>, vector<16x32xf32> -> vector<16x32xf32>
    %c0_77 = arith.constant 0 : index
    %c0_78 = arith.constant 0 : index
    %131 = vector.load %arg23[%c0_77, %c0_78] : memref<32x32xbf16, #tpu.memory_space<vmem>>, vector<32x32xbf16>
    %132 = arith.truncf %130 : vector<16x32xf32> to vector<16x32xbf16>
    %cst_79 = arith.constant dense<0.000000e+00> : vector<16x32xf32>
    %133 = tpu.matmul %132, %131, %cst_79 {dimension_numbers = #tpu.dot_dimension_numbers<[1], [0], [0], [1], [0, 0, 1, 1], [], []>} : vector<16x32xbf16>, vector<32x32xbf16>, vector<16x32xf32> -> vector<16x32xf32>
    %c0_80 = arith.constant 0 : index
    %c0_81 = arith.constant 0 : index
    %134 = vector.load %arg24[%c0_80, %c0_81] : memref<1x32xf32, #tpu.memory_space<vmem>>, vector<1x32xf32>
    %135 = vector.broadcast %134 : vector<1x32xf32> to vector<16x32xf32>
    %136 = arith.addf %133, %135 : vector<16x32xf32>
    %137 = arith.addf %0, %136 : vector<16x32xf32>
    %c0_82 = arith.constant 0 : index
    %c0_83 = arith.constant 0 : index
    %138 = vector.load %arg25[%c0_82, %c0_83] : memref<1x32xf32, #tpu.memory_space<vmem>>, vector<1x32xf32>
    %c0_84 = arith.constant 0 : index
    %c0_85 = arith.constant 0 : index
    %139 = vector.load %arg26[%c0_84, %c0_85] : memref<1x32xf32, #tpu.memory_space<vmem>>, vector<1x32xf32>
    %cst_86 = arith.constant dense<0.000000e+00> : vector<16xf32>
    %140 = vector.multi_reduction <add>, %137, %cst_86 [1] : vector<16x32xf32> to vector<16xf32>
    %141 = vector.shape_cast %140 : vector<16xf32> to vector<16x1xf32>
    %cst_87 = arith.constant 3.200000e+01 : f32
    %142 = vector.broadcast %cst_87 : f32 to vector<16x1xf32>
    %143 = arith.divf %141, %142 : vector<16x1xf32>
    %144 = vector.broadcast %143 : vector<16x1xf32> to vector<16x32xf32>
    %145 = arith.subf %137, %144 : vector<16x32xf32>
    %146 = arith.mulf %145, %145 : vector<16x32xf32>
    %cst_88 = arith.constant dense<0.000000e+00> : vector<16xf32>
    %147 = vector.multi_reduction <add>, %146, %cst_88 [1] : vector<16x32xf32> to vector<16xf32>
    %148 = vector.shape_cast %147 : vector<16xf32> to vector<16x1xf32>
    %cst_89 = arith.constant 3.200000e+01 : f32
    %149 = vector.broadcast %cst_89 : f32 to vector<16x1xf32>
    %150 = arith.divf %148, %149 : vector<16x1xf32>
    %151 = vector.broadcast %143 : vector<16x1xf32> to vector<16x32xf32>
    %152 = arith.subf %137, %151 : vector<16x32xf32>
    %cst_90 = arith.constant 9.99999974E-6 : f32
    %153 = vector.broadcast %cst_90 : f32 to vector<16x1xf32>
    %154 = arith.addf %150, %153 : vector<16x1xf32>
    %155 = math.rsqrt %154 : vector<16x1xf32>
    %156 = vector.broadcast %155 : vector<16x1xf32> to vector<16x32xf32>
    %157 = arith.mulf %152, %156 : vector<16x32xf32>
    %158 = vector.broadcast %138 : vector<1x32xf32> to vector<16x32xf32>
    %159 = arith.mulf %157, %158 : vector<16x32xf32>
    %160 = vector.broadcast %139 : vector<1x32xf32> to vector<16x32xf32>
    %161 = arith.addf %159, %160 : vector<16x32xf32>
    %c0_91 = arith.constant 0 : index
    %c0_92 = arith.constant 0 : index
    %162 = vector.load %arg27[%c0_91, %c0_92] : memref<32x64xbf16, #tpu.memory_space<vmem>>, vector<32x64xbf16>
    %163 = arith.truncf %161 : vector<16x32xf32> to vector<16x32xbf16>
    %cst_93 = arith.constant dense<0.000000e+00> : vector<16x64xf32>
    %164 = tpu.matmul %163, %162, %cst_93 {dimension_numbers = #tpu.dot_dimension_numbers<[1], [0], [0], [1], [0, 0, 1, 1], [], []>} : vector<16x32xbf16>, vector<32x64xbf16>, vector<16x64xf32> -> vector<16x64xf32>
    %c0_94 = arith.constant 0 : index
    %c0_95 = arith.constant 0 : index
    %165 = vector.load %arg28[%c0_94, %c0_95] : memref<1x64xf32, #tpu.memory_space<vmem>>, vector<1x64xf32>
    %166 = vector.broadcast %165 : vector<1x64xf32> to vector<16x64xf32>
    %167 = arith.addf %164, %166 : vector<16x64xf32>
    %168 = arith.negf %167 : vector<16x64xf32>
    %169 = math.exp %168 : vector<16x64xf32>
    %cst_96 = arith.constant 1.000000e+00 : f32
    %170 = vector.broadcast %cst_96 : f32 to vector<16x64xf32>
    %171 = arith.addf %170, %169 : vector<16x64xf32>
    %172 = arith.divf %170, %171 : vector<16x64xf32>
    %173 = arith.mulf %167, %172 : vector<16x64xf32>
    %c0_97 = arith.constant 0 : index
    %c0_98 = arith.constant 0 : index
    %174 = vector.load %arg29[%c0_97, %c0_98] : memref<64x32xbf16, #tpu.memory_space<vmem>>, vector<64x32xbf16>
    %175 = arith.truncf %173 : vector<16x64xf32> to vector<16x64xbf16>
    %cst_99 = arith.constant dense<0.000000e+00> : vector<16x32xf32>
    %176 = tpu.matmul %175, %174, %cst_99 {dimension_numbers = #tpu.dot_dimension_numbers<[1], [0], [0], [1], [0, 0, 1, 1], [], []>} : vector<16x64xbf16>, vector<64x32xbf16>, vector<16x32xf32> -> vector<16x32xf32>
    %c0_100 = arith.constant 0 : index
    %c0_101 = arith.constant 0 : index
    %177 = vector.load %arg30[%c0_100, %c0_101] : memref<1x32xf32, #tpu.memory_space<vmem>>, vector<1x32xf32>
    %178 = vector.broadcast %177 : vector<1x32xf32> to vector<16x32xf32>
    %179 = arith.addf %176, %178 : vector<16x32xf32>
    %180 = arith.addf %161, %179 : vector<16x32xf32>
    %c0_102 = arith.constant 0 : index
    %c0_103 = arith.constant 0 : index
    %181 = vector.load %arg31[%c0_102, %c0_103] : memref<1x32xf32, #tpu.memory_space<vmem>>, vector<1x32xf32>
    %c0_104 = arith.constant 0 : index
    %c0_105 = arith.constant 0 : index
    %182 = vector.load %arg32[%c0_104, %c0_105] : memref<1x32xf32, #tpu.memory_space<vmem>>, vector<1x32xf32>
    %cst_106 = arith.constant dense<0.000000e+00> : vector<16xf32>
    %183 = vector.multi_reduction <add>, %180, %cst_106 [1] : vector<16x32xf32> to vector<16xf32>
    %184 = vector.shape_cast %183 : vector<16xf32> to vector<16x1xf32>
    %cst_107 = arith.constant 3.200000e+01 : f32
    %185 = vector.broadcast %cst_107 : f32 to vector<16x1xf32>
    %186 = arith.divf %184, %185 : vector<16x1xf32>
    %187 = vector.broadcast %186 : vector<16x1xf32> to vector<16x32xf32>
    %188 = arith.subf %180, %187 : vector<16x32xf32>
    %189 = arith.mulf %188, %188 : vector<16x32xf32>
    %cst_108 = arith.constant dense<0.000000e+00> : vector<16xf32>
    %190 = vector.multi_reduction <add>, %189, %cst_108 [1] : vector<16x32xf32> to vector<16xf32>
    %191 = vector.shape_cast %190 : vector<16xf32> to vector<16x1xf32>
    %cst_109 = arith.constant 3.200000e+01 : f32
    %192 = vector.broadcast %cst_109 : f32 to vector<16x1xf32>
    %193 = arith.divf %191, %192 : vector<16x1xf32>
    %194 = vector.broadcast %186 : vector<16x1xf32> to vector<16x32xf32>
    %195 = arith.subf %180, %194 : vector<16x32xf32>
    %cst_110 = arith.constant 9.99999974E-6 : f32
    %196 = vector.broadcast %cst_110 : f32 to vector<16x1xf32>
    %197 = arith.addf %193, %196 : vector<16x1xf32>
    %198 = math.rsqrt %197 : vector<16x1xf32>
    %199 = vector.broadcast %198 : vector<16x1xf32> to vector<16x32xf32>
    %200 = arith.mulf %195, %199 : vector<16x32xf32>
    %201 = vector.broadcast %181 : vector<1x32xf32> to vector<16x32xf32>
    %202 = arith.mulf %200, %201 : vector<16x32xf32>
    %203 = vector.broadcast %182 : vector<1x32xf32> to vector<16x32xf32>
    %204 = arith.addf %202, %203 : vector<16x32xf32>
    %c0_111 = arith.constant 0 : index
    %c0_112 = arith.constant 0 : index
    %205 = vector.load %arg33[%c0_111, %c0_112] : memref<16x32xf32, #tpu.memory_space<vmem>>, vector<16x32xf32>
    tpu.vector_store %arg33[%c0_111, %c0_112], %204 {strides = array<i32>} : memref<16x32xf32, #tpu.memory_space<vmem>>, vector<16x32xf32>,
    return
  }
}

</mosaic_0001>

<llo_original>
// kernel: tpu_custom_call.1
$region0: #{tpu_custom_call.1}
  #allocation0 [shape = 'u32[]', space=smem, size = 0x4, offset = 0x4, fixed_abs, tag = 'smem constant byte address 0x4 - core index']
  #allocation1 [shape = 'u32[72,128]{1,0:T(1,128)}', space=vmem, size = 0x9000, scoped, tag = 'internal scratch']
  %s0 = inlined_call_operand.smem [shape: u32[35], index: -1, kind: input, shape index: {}]
  %s1 = sld [smem:[%s0]]
  %s2 = scalar_lea.smem %s0, 1
  %s3 = sld [smem:[%s2]]
  %s4 = scalar_lea.smem %s0, 2
  %s5 = sld [smem:[%s4]]
  %s6 = scalar_lea.smem %s0, 3
  %s7 = sld [smem:[%s6]]
  %s8 = scalar_lea.smem %s0, 4
  %s9 = sld [smem:[%s8]]
  %s10 = scalar_lea.smem %s0, 5
  %s11 = sld [smem:[%s10]]
  %s12 = scalar_lea.smem %s0, 6
  %s13 = sld [smem:[%s12]]
  %s14 = scalar_lea.smem %s0, 7
  %s15 = sld [smem:[%s14]]
  %s16 = scalar_lea.smem %s0, 8
  %s17 = sld [smem:[%s16]]
  %s18 = scalar_lea.smem %s0, 9
  %s19 = sld [smem:[%s18]]
  %s20 = scalar_lea.smem %s0, 10
  %s21 = sld [smem:[%s20]]
  %s22 = scalar_lea.smem %s0, 11
  %s23 = sld [smem:[%s22]]
  %s24 = scalar_lea.smem %s0, 12
  %s25 = sld [smem:[%s24]]
  %s26 = scalar_lea.smem %s0, 13
  %s27 = sld [smem:[%s26]]
  %s28 = scalar_lea.smem %s0, 14
  %s29 = sld [smem:[%s28]]
  %s30 = scalar_lea.smem %s0, 15
  %s31 = sld [smem:[%s30]]
  %s32 = scalar_lea.smem %s0, 16
  %s33 = sld [smem:[%s32]]
  %s34 = scalar_lea.smem %s0, 17
  %s35 = sld [smem:[%s34]]
  %s36 = scalar_lea.smem %s0, 18
  %s37 = sld [smem:[%s36]]
  %s38 = scalar_lea.smem %s0, 19
  %s39 = sld [smem:[%s38]]
  %s40 = scalar_lea.smem %s0, 20
  %s41 = sld [smem:[%s40]]
  %s42 = scalar_lea.smem %s0, 21
  %s43 = sld [smem:[%s42]]
  %s44 = scalar_lea.smem %s0, 22
  %s45 = sld [smem:[%s44]]
  %s46 = scalar_lea.smem %s0, 23
  %s47 = sld [smem:[%s46]]
  %s48 = scalar_lea.smem %s0, 24
  %s49 = sld [smem:[%s48]]
  %s50 = scalar_lea.smem %s0, 25
  %s51 = sld [smem:[%s50]]
  %s52 = scalar_lea.smem %s0, 26
  %s53 = sld [smem:[%s52]]
  %s54 = scalar_lea.smem %s0, 27
  %s55 = sld [smem:[%s54]]
  %s56 = scalar_lea.smem %s0, 28
  %s57 = sld [smem:[%s56]]
  %s58 = scalar_lea.smem %s0, 29
  %s59 = sld [smem:[%s58]]
  %s60 = scalar_lea.smem %s0, 30
  %s61 = sld [smem:[%s60]]
  %s62 = scalar_lea.smem %s0, 31
  %s63 = sld [smem:[%s62]]
  %s64 = scalar_lea.smem %s0, 32
  %s65 = sld [smem:[%s64]]
  %s66 = scalar_lea.smem %s0, 33
  %s67 = sld [smem:[%s66]]
  %s68 = scalar_lea.smem %s0, 34
  %s69 = sld [smem:[%s68]]
  %70 = xla_tuple %s67, %s69
  %s71 = sld [smem:[#allocation0]]
  $region150: #{tpu_custom_call.1} parent=0
    _
  %s73 = ssub.s32 1, %s71
  %s74 = scalar_select 0, %s73, %s71
  $region1: #{tpu_custom_call.1} parent=0
    #allocation2 [shape = 'u8[8192]{0}', space=vmem, size = 0x2000, scoped, tag = 'output window, operand 0, single buffered']
    #allocation3 [shape = 's32[1]{0}', space=sflag, size = 0x4, scoped, tag = 'scoped memory for tpu_custom_call.1']
    %75 = vsyncpa [#allocation3], 0
    // Predicated region
    $region2: #{tpu_custom_call.1} parent=1 // pred_check
      _
    $region3: #{tpu_custom_call.1} parent=1 // pred_check_branch
      %77 = sbr.rel (0) target = $region5
    $region4: #{tpu_custom_call.1} parent=1 // pred_region
      _
    $region5: #{tpu_custom_call.1} parent=1 // pred_fallthru
      _
    // Predicated region
    $region6: #{tpu_custom_call.1} parent=1 // pred_check
      _
    $region7: #{tpu_custom_call.1} parent=1 // pred_check_branch
      %79 = sbr.rel (0) target = $region9
    $region8: #{tpu_custom_call.1} parent=1 // pred_region
      _
    $region9: #{tpu_custom_call.1} parent=1 // pred_fallthru
      _
    // Predicated region
    $region10: #{tpu_custom_call.1} parent=1 // pred_check
      _
    $region11: #{tpu_custom_call.1} parent=1 // pred_check_branch
      %81 = sbr.rel (0) target = $region13
    $region12: #{tpu_custom_call.1} parent=1 // pred_region
      _
    $region13: #{tpu_custom_call.1} parent=1 // pred_fallthru
      _
    // Predicated region
    $region14: #{tpu_custom_call.1} parent=1 // pred_check
      _
    $region15: #{tpu_custom_call.1} parent=1 // pred_check_branch
      %83 = sbr.rel (0) target = $region17
    $region16: #{tpu_custom_call.1} parent=1 // pred_region
      _
    $region17: #{tpu_custom_call.1} parent=1 // pred_fallthru
      _
    // Predicated region
    $region18: #{tpu_custom_call.1} parent=1 // pred_check
      _
    $region19: #{tpu_custom_call.1} parent=1 // pred_check_branch
      %85 = sbr.rel (0) target = $region21
    $region20: #{tpu_custom_call.1} parent=1 // pred_region
      _
    $region21: #{tpu_custom_call.1} parent=1 // pred_fallthru
      _
    // Predicated region
    $region22: #{tpu_custom_call.1} parent=1 // pred_check
      _
    $region23: #{tpu_custom_call.1} parent=1 // pred_check_branch
      %87 = sbr.rel (0) target = $region25
    $region24: #{tpu_custom_call.1} parent=1 // pred_region
      _
    $region25: #{tpu_custom_call.1} parent=1 // pred_fallthru
      _
    // Predicated region
    $region26: #{tpu_custom_call.1} parent=1 // pred_check
      _
    $region27: #{tpu_custom_call.1} parent=1 // pred_check_branch
      %89 = sbr.rel (0) target = $region29
    $region28: #{tpu_custom_call.1} parent=1 // pred_region
      _
    $region29: #{tpu_custom_call.1} parent=1 // pred_fallthru
      _
    // Predicated region
    $region30: #{tpu_custom_call.1} parent=1 // pred_check
      _
    $region31: #{tpu_custom_call.1} parent=1 // pred_check_branch
      %91 = sbr.rel (0) target = $region33
    $region32: #{tpu_custom_call.1} parent=1 // pred_region
      _
    $region33: #{tpu_custom_call.1} parent=1 // pred_fallthru
      _
    // Predicated region
    $region34: #{tpu_custom_call.1} parent=1 // pred_check
      _
    $region35: #{tpu_custom_call.1} parent=1 // pred_check_branch
      %93 = sbr.rel (0) target = $region37
    $region36: #{tpu_custom_call.1} parent=1 // pred_region
      _
    $region37: #{tpu_custom_call.1} parent=1 // pred_fallthru
      _
    // Predicated region
    $region38: #{tpu_custom_call.1} parent=1 // pred_check
      _
    $region39: #{tpu_custom_call.1} parent=1 // pred_check_branch
      %95 = sbr.rel (0) target = $region41
    $region40: #{tpu_custom_call.1} parent=1 // pred_region
      _
    $region41: #{tpu_custom_call.1} parent=1 // pred_fallthru
      _
    // Predicated region
    $region42: #{tpu_custom_call.1} parent=1 // pred_check
      _
    $region43: #{tpu_custom_call.1} parent=1 // pred_check_branch
      %97 = sbr.rel (0) target = $region45
    $region44: #{tpu_custom_call.1} parent=1 // pred_region
      _
    $region45: #{tpu_custom_call.1} parent=1 // pred_fallthru
      _
    // Predicated region
    $region46: #{tpu_custom_call.1} parent=1 // pred_check
      _
    $region47: #{tpu_custom_call.1} parent=1 // pred_check_branch
      %99 = sbr.rel (0) target = $region49
    $region48: #{tpu_custom_call.1} parent=1 // pred_region
      _
    $region49: #{tpu_custom_call.1} parent=1 // pred_fallthru
      _
    // Predicated region
    $region50: #{tpu_custom_call.1} parent=1 // pred_check
      _
    $region51: #{tpu_custom_call.1} parent=1 // pred_check_branch
      %101 = sbr.rel (0) target = $region53
    $region52: #{tpu_custom_call.1} parent=1 // pred_region
      _
    $region53: #{tpu_custom_call.1} parent=1 // pred_fallthru
      _
    // Predicated region
    $region54: #{tpu_custom_call.1} parent=1 // pred_check
      _
    $region55: #{tpu_custom_call.1} parent=1 // pred_check_branch
      %103 = sbr.rel (0) target = $region57
    $region56: #{tpu_custom_call.1} parent=1 // pred_region
      _
    $region57: #{tpu_custom_call.1} parent=1 // pred_fallthru
      _
    // Predicated region
    $region58: #{tpu_custom_call.1} parent=1 // pred_check
      _
    $region59: #{tpu_custom_call.1} parent=1 // pred_check_branch
      %105 = sbr.rel (0) target = $region61
    $region60: #{tpu_custom_call.1} parent=1 // pred_region
      _
    $region61: #{tpu_custom_call.1} parent=1 // pred_fallthru
      _
    // Predicated region
    $region62: #{tpu_custom_call.1} parent=1 // pred_check
      _
    $region63: #{tpu_custom_call.1} parent=1 // pred_check_branch
      %107 = sbr.rel (0) target = $region65
    $region64: #{tpu_custom_call.1} parent=1 // pred_region
      _
    $region65: #{tpu_custom_call.1} parent=1 // pred_fallthru
      _
    // Predicated region
    $region66: #{tpu_custom_call.1} parent=1 // pred_check
      _
    $region67: #{tpu_custom_call.1} parent=1 // pred_check_branch
      %109 = sbr.rel (0) target = $region69
    $region68: #{tpu_custom_call.1} parent=1 // pred_region
      _
    $region69: #{tpu_custom_call.1} parent=1 // pred_fallthru
      _
    // Predicated region
    $region70: #{tpu_custom_call.1} parent=1 // pred_check
      _
    $region71: #{tpu_custom_call.1} parent=1 // pred_check_branch
      %111 = sbr.rel (0) target = $region73
    $region72: #{tpu_custom_call.1} parent=1 // pred_region
      _
    $region73: #{tpu_custom_call.1} parent=1 // pred_fallthru
      _
    // Predicated region
    $region74: #{tpu_custom_call.1} parent=1 // pred_check
      _
    $region75: #{tpu_custom_call.1} parent=1 // pred_check_branch
      %113 = sbr.rel (0) target = $region77
    $region76: #{tpu_custom_call.1} parent=1 // pred_region
      _
    $region77: #{tpu_custom_call.1} parent=1 // pred_fallthru
      _
    // Predicated region
    $region78: #{tpu_custom_call.1} parent=1 // pred_check
      _
    $region79: #{tpu_custom_call.1} parent=1 // pred_check_branch
      %115 = sbr.rel (0) target = $region81
    $region80: #{tpu_custom_call.1} parent=1 // pred_region
      _
    $region81: #{tpu_custom_call.1} parent=1 // pred_fallthru
      _
    // Predicated region
    $region82: #{tpu_custom_call.1} parent=1 // pred_check
      _
    $region83: #{tpu_custom_call.1} parent=1 // pred_check_branch
      %117 = sbr.rel (0) target = $region85
    $region84: #{tpu_custom_call.1} parent=1 // pred_region
      _
    $region85: #{tpu_custom_call.1} parent=1 // pred_fallthru
      _
    // Predicated region
    $region86: #{tpu_custom_call.1} parent=1 // pred_check
      _
    $region87: #{tpu_custom_call.1} parent=1 // pred_check_branch
      %119 = sbr.rel (0) target = $region89
    $region88: #{tpu_custom_call.1} parent=1 // pred_region
      _
    $region89: #{tpu_custom_call.1} parent=1 // pred_fallthru
      _
    // Predicated region
    $region90: #{tpu_custom_call.1} parent=1 // pred_check
      _
    $region91: #{tpu_custom_call.1} parent=1 // pred_check_branch
      %121 = sbr.rel (0) target = $region93
    $region92: #{tpu_custom_call.1} parent=1 // pred_region
      _
    $region93: #{tpu_custom_call.1} parent=1 // pred_fallthru
      _
    // Predicated region
    $region94: #{tpu_custom_call.1} parent=1 // pred_check
      _
    $region95: #{tpu_custom_call.1} parent=1 // pred_check_branch
      %123 = sbr.rel (0) target = $region97
    $region96: #{tpu_custom_call.1} parent=1 // pred_region
      _
    $region97: #{tpu_custom_call.1} parent=1 // pred_fallthru
      _
    // Predicated region
    $region98: #{tpu_custom_call.1} parent=1 // pred_check
      _
    $region99: #{tpu_custom_call.1} parent=1 // pred_check_branch
      %125 = sbr.rel (0) target = $region101
    $region100: #{tpu_custom_call.1} parent=1 // pred_region
      _
    $region101: #{tpu_custom_call.1} parent=1 // pred_fallthru
      _
    // Predicated region
    $region102: #{tpu_custom_call.1} parent=1 // pred_check
      _
    $region103: #{tpu_custom_call.1} parent=1 // pred_check_branch
      %127 = sbr.rel (0) target = $region105
    $region104: #{tpu_custom_call.1} parent=1 // pred_region
      _
    $region105: #{tpu_custom_call.1} parent=1 // pred_fallthru
      _
    // Predicated region
    $region106: #{tpu_custom_call.1} parent=1 // pred_check
      _
    $region107: #{tpu_custom_call.1} parent=1 // pred_check_branch
      %129 = sbr.rel (0) target = $region109
    $region108: #{tpu_custom_call.1} parent=1 // pred_region
      _
    $region109: #{tpu_custom_call.1} parent=1 // pred_fallthru
      _
    // Predicated region
    $region110: #{tpu_custom_call.1} parent=1 // pred_check
      _
    $region111: #{tpu_custom_call.1} parent=1 // pred_check_branch
      %131 = sbr.rel (0) target = $region113
    $region112: #{tpu_custom_call.1} parent=1 // pred_region
      _
    $region113: #{tpu_custom_call.1} parent=1 // pred_fallthru
      _
    // Predicated region
    $region114: #{tpu_custom_call.1} parent=1 // pred_check
      _
    $region115: #{tpu_custom_call.1} parent=1 // pred_check_branch
      %133 = sbr.rel (0) target = $region117
    $region116: #{tpu_custom_call.1} parent=1 // pred_region
      _
    $region117: #{tpu_custom_call.1} parent=1 // pred_fallthru
      _
    // Predicated region
    $region118: #{tpu_custom_call.1} parent=1 // pred_check
      _
    $region119: #{tpu_custom_call.1} parent=1 // pred_check_branch
      %135 = sbr.rel (0) target = $region121
    $region120: #{tpu_custom_call.1} parent=1 // pred_region
      _
    $region121: #{tpu_custom_call.1} parent=1 // pred_fallthru
      _
    // Predicated region
    $region122: #{tpu_custom_call.1} parent=1 // pred_check
      _
    $region123: #{tpu_custom_call.1} parent=1 // pred_check_branch
      %137 = sbr.rel (0) target = $region125
    $region124: #{tpu_custom_call.1} parent=1 // pred_region
      _
    $region125: #{tpu_custom_call.1} parent=1 // pred_fallthru
      _
    // Predicated region
    $region126: #{tpu_custom_call.1} parent=1 // pred_check
      _
    $region127: #{tpu_custom_call.1} parent=1 // pred_check_branch
      %139 = sbr.rel (0) target = $region129
    $region128: #{tpu_custom_call.1} parent=1 // pred_region
      _
    $region129: #{tpu_custom_call.1} parent=1 // pred_fallthru
      _
    // Predicated region
    $region130: #{tpu_custom_call.1} parent=1 // pred_check
      _
    $region131: #{tpu_custom_call.1} parent=1 // pred_check_branch
      %141 = sbr.rel (0) target = $region133
    $region132: #{tpu_custom_call.1} parent=1 // pred_region
      _
    $region133: #{tpu_custom_call.1} parent=1 // pred_fallthru
      _
    %v143 = vld [vmem:[%s1] sm:$0xff]
    %v144 = vld [vmem:[%s1 + $0x8] sm:$0xff]
    %v145 = vld [vmem:[%s3] sm:$0xff]
    %v146 = vld [vmem:[%s3 + $0x8] sm:$0xff]
    %v147 = vld [vmem:[%s3 + $0x10] sm:$0xff]
    %v148 = vld [vmem:[%s3 + $0x18] sm:$0xff]
    %v149 = vld [vmem:[%s3 + $0x20] sm:$0xff]
    %v150 = vld [vmem:[%s3 + $0x28] sm:$0xff]
    %v151 = vld [vmem:[%s3 + $0x30] sm:$0xff]
    %v152 = vld [vmem:[%s3 + $0x38] sm:$0xff]
    %v153 = vld [vmem:[%s5] sm:$0xff]
    %v154 = vld [vmem:[%s5 + $0x8] sm:$0xff]
    %v155 = vld [vmem:[%s5 + $0x10] sm:$0xff]
    %v156 = vld [vmem:[%s5 + $0x18] sm:$0xff]
    %v157 = vld [vmem:[%s5 + $0x20] sm:$0xff]
    %v158 = vld [vmem:[%s5 + $0x28] sm:$0xff]
    %v159 = vld [vmem:[%s5 + $0x30] sm:$0xff]
    %v160 = vld [vmem:[%s5 + $0x38] sm:$0xff]
    %v161 = vld [vmem:[%s7] sm:$0xf]
    %v162 = vld [vmem:[%s7 + $0x4] sm:$0xf]
    %v163 = vld [vmem:[%s9] sm:$0xf]
    %v164 = vld [vmem:[%s9 + $0x4] sm:$0xf]
    %v165 = vld [vmem:[%s9 + $0x8] sm:$0xf]
    %v166 = vld [vmem:[%s9 + $0xc] sm:$0xf]
    %v167 = vld [vmem:[%s9 + $0x10] sm:$0xf]
    %v168 = vld [vmem:[%s9 + $0x14] sm:$0xf]
    %v169 = vld [vmem:[%s9 + $0x18] sm:$0xf]
    %v170 = vld [vmem:[%s9 + $0x1c] sm:$0xf]
    %v171 = vld [vmem:[%s11] sm:$0xf]
    %v172 = vld [vmem:[%s11 + $0x4] sm:$0xf]
    %v173 = vld [vmem:[%s11 + $0x8] sm:$0xf]
    %v174 = vld [vmem:[%s11 + $0xc] sm:$0xf]
    %v175 = vld [vmem:[%s11 + $0x10] sm:$0xf]
    %v176 = vld [vmem:[%s11 + $0x14] sm:$0xf]
    %v177 = vld [vmem:[%s11 + $0x18] sm:$0xf]
    %v178 = vld [vmem:[%s11 + $0x1c] sm:$0xf]
    %v179 = vld [vmem:[%s13] sm:$0x3]
    %v180 = vld [vmem:[%s15] sm:$0xf]
    %v181 = vld [vmem:[%s15 + $0x4] sm:$0xf]
    %v182 = vld [vmem:[%s15 + $0x8] sm:$0xf]
    %v183 = vld [vmem:[%s15 + $0xc] sm:$0xf]
    %v184 = vpack.c.bf16 %v144, %v143
    %v189 = vunpack.c.l.b16 %v180
    %v190 = vunpack.c.l.b16 %v181
    %v191 = vunpack.c.l.b16 %v182
    %v192 = vunpack.c.l.b16 %v183
    %v193 = vpack.c.b16 %v190, %v189
    %v194 = vpack.c.b16 %v192, %v191
    %vm197 = vcmask 261120
    %v199 = vsel %vm197, %v184, 0
    %201 = vmatpush.bf16.msra.mxu0 0
    %202 = vmatpush.bf16.msra.mxu0 0
    %203 = vmatpush.bf16.msra.mxu0 0
    %204 = vmatpush.bf16.msra.mxu0 0
    %205 = vmatpush.bf16.msra.mxu0 0
    %206 = vmatpush.bf16.msra.mxu0 0
    %207 = vmatpush.bf16.msra.mxu0 %v194
    %208 = vmatpush.bf16.msra.mxu0 %v193
    %209 = vmatmul.bf16.gmra.mxu0 %v199
    %v210 = vpop.f32.mrf.mxu0
    %v211 = vadd.f32 0.0, %v210
    %v212 = vpop.f32.mrf.mxu0
    %v213 = vadd.f32 0.0, %v212
    %214 = vdwg.mxu0
    %v215 = vld [vmem:[%s17] sm:$0xf]
    %v216 = vld [vmem:[%s17 + $0x4] sm:$0xf]
    %v217 = vld [vmem:[%s17 + $0x8] sm:$0xf]
    %v218 = vld [vmem:[%s17 + $0xc] sm:$0xf]
    %v223 = vunpack.c.l.b16 %v215
    %v224 = vunpack.c.l.b16 %v216
    %v225 = vunpack.c.l.b16 %v217
    %v226 = vunpack.c.l.b16 %v218
    %v227 = vpack.c.b16 %v224, %v223
    %v228 = vpack.c.b16 %v226, %v225
    %231 = vmatpush.bf16.msra.mxu0 0
    %232 = vmatpush.bf16.msra.mxu0 0
    %233 = vmatpush.bf16.msra.mxu0 0
    %234 = vmatpush.bf16.msra.mxu0 0
    %235 = vmatpush.bf16.msra.mxu0 0
    %236 = vmatpush.bf16.msra.mxu0 0
    %237 = vmatpush.bf16.msra.mxu0 %v228
    %238 = vmatpush.bf16.msra.mxu0 %v227
    %239 = vmatmul.bf16.gmra.mxu0 %v199
    %v240 = vpop.f32.mrf.mxu0
    %v241 = vadd.f32 0.0, %v240
    %v242 = vpop.f32.mrf.mxu0
    %v243 = vadd.f32 0.0, %v242
    %244 = vdwg.mxu0
    %v245 = vpack.c.bf16 %v213, %v211
    %v246 = vpack.c.bf16 %v243, %v241
    %v255 = vunpack.c.l.b16 %v163
    %v256 = vunpack.c.l.b16 %v164
    %v257 = vunpack.c.l.b16 %v165
    %v258 = vunpack.c.l.b16 %v166
    %v259 = vunpack.c.l.b16 %v167
    %v260 = vunpack.c.l.b16 %v168
    %v261 = vunpack.c.l.b16 %v169
    %v262 = vunpack.c.l.b16 %v170
    %v263 = vpack.c.b16 %v256, %v255
    %v264 = vpack.c.b16 %v258, %v257
    %v265 = vpack.c.b16 %v260, %v259
    %v266 = vpack.c.b16 %v262, %v261
    %vm267 = vcmask 130048
    %v269 = vsel %vm267, %v263, 0
    %v272 = vsel %vm267, %v264, 0
    %v275 = vsel %vm267, %v265, 0
    %v278 = vsel %vm267, %v266, 0
    %280 = vmatpush.bf16.msra.mxu0 0
    %281 = vmatpush.bf16.msra.mxu0 0
    %282 = vmatpush.bf16.msra.mxu0 0
    %283 = vmatpush.bf16.msra.mxu0 0
    %284 = vmatpush.bf16.msra.mxu0 0
    %285 = vmatpush.bf16.msra.mxu0 0
    %286 = vmatpush.bf16.msra.mxu0 0
    %287 = vmatpush.bf16.msra.mxu0 %v246
    %288 = vmatmul.bf16.gmra.mxu0 %v269
    %v289 = vpop.f32.mrf.mxu0
    %v290 = vadd.f32 0.0, %v289
    %v291 = vpop.f32.mrf.mxu0
    %v292 = vadd.f32 0.0, %v291
    %293 = vmatmul.bf16.gmra.mxu0 %v272
    %v294 = vpop.f32.mrf.mxu0
    %v295 = vadd.f32 0.0, %v294
    %v296 = vpop.f32.mrf.mxu0
    %v297 = vadd.f32 0.0, %v296
    %298 = vmatmul.bf16.gmra.mxu0 %v275
    %v299 = vpop.f32.mrf.mxu0
    %v300 = vadd.f32 0.0, %v299
    %v301 = vpop.f32.mrf.mxu0
    %v302 = vadd.f32 0.0, %v301
    %303 = vmatmul.bf16.gmra.mxu0 %v278
    %v304 = vpop.f32.mrf.mxu0
    %v305 = vadd.f32 0.0, %v304
    %v306 = vpop.f32.mrf.mxu0
    %v307 = vadd.f32 0.0, %v306
    %308 = vdwg.mxu0
    %v317 = vunpack.c.l.b16 %v171
    %v318 = vunpack.c.l.b16 %v172
    %v319 = vunpack.c.l.b16 %v173
    %v320 = vunpack.c.l.b16 %v174
    %v321 = vunpack.c.l.b16 %v175
    %v322 = vunpack.c.l.b16 %v176
    %v323 = vunpack.c.l.b16 %v177
    %v324 = vunpack.c.l.b16 %v178
    %v325 = vpack.c.b16 %v318, %v317
    %v326 = vpack.c.b16 %v320, %v319
    %v327 = vpack.c.b16 %v322, %v321
    %v328 = vpack.c.b16 %v324, %v323
    %v330 = vsel %vm267, %v325, 0
    %v333 = vsel %vm267, %v326, 0
    %v336 = vsel %vm267, %v327, 0
    %v339 = vsel %vm267, %v328, 0
    %341 = vmatpush.bf16.msra.mxu0 0
    %342 = vmatpush.bf16.msra.mxu0 0
    %343 = vmatpush.bf16.msra.mxu0 0
    %344 = vmatpush.bf16.msra.mxu0 0
    %345 = vmatpush.bf16.msra.mxu0 0
    %346 = vmatpush.bf16.msra.mxu0 0
    %347 = vmatpush.bf16.msra.mxu0 0
    %348 = vmatpush.bf16.msra.mxu0 %v245
    %349 = vmatmul.bf16.gmra.mxu0 %v330
    %v350 = vpop.f32.mrf.mxu0
    %v351 = vadd.f32 %v290, %v350
    %v352 = vpop.f32.mrf.mxu0
    %v353 = vadd.f32 %v292, %v352
    %354 = vmatmul.bf16.gmra.mxu0 %v333
    %v355 = vpop.f32.mrf.mxu0
    %v356 = vadd.f32 %v295, %v355
    %v357 = vpop.f32.mrf.mxu0
    %v358 = vadd.f32 %v297, %v357
    %359 = vmatmul.bf16.gmra.mxu0 %v336
    %v360 = vpop.f32.mrf.mxu0
    %v361 = vadd.f32 %v300, %v360
    %v362 = vpop.f32.mrf.mxu0
    %v363 = vadd.f32 %v302, %v362
    %364 = vmatmul.bf16.gmra.mxu0 %v339
    %v365 = vpop.f32.mrf.mxu0
    %v366 = vadd.f32 %v305, %v365
    %v367 = vpop.f32.mrf.mxu0
    %v368 = vadd.f32 %v307, %v367
    %369 = vdwg.mxu0
    %v370 = vld [vmem:[%s19] sm:$0xf]
    %v371 = vld [vmem:[%s19 + $0x4] sm:$0xf]
    %v372 = vld [vmem:[%s19 + $0x8] sm:$0xf]
    %v373 = vld [vmem:[%s19 + $0xc] sm:$0xf]
    %v374 = vpack.c.bf16 %v146, %v145
    %v375 = vpack.c.bf16 %v148, %v147
    %v376 = vpack.c.bf16 %v150, %v149
    %v377 = vpack.c.bf16 %v152, %v151
    %v382 = vunpack.c.l.b16 %v370
    %v383 = vunpack.c.l.b16 %v371
    %v384 = vunpack.c.l.b16 %v372
    %v385 = vunpack.c.l.b16 %v373
    %v386 = vpack.c.b16 %v383, %v382
    %v387 = vpack.c.b16 %v385, %v384
    %v391 = vsel %vm197, %v374, 0
    %v394 = vsel %vm197, %v375, 0
    %v397 = vsel %vm197, %v376, 0
    %v400 = vsel %vm197, %v377, 0
    %402 = vmatpush.bf16.msra.mxu0 0
    %403 = vmatpush.bf16.msra.mxu0 0
    %404 = vmatpush.bf16.msra.mxu0 0
    %405 = vmatpush.bf16.msra.mxu0 0
    %406 = vmatpush.bf16.msra.mxu0 0
    %407 = vmatpush.bf16.msra.mxu0 0
    %408 = vmatpush.bf16.msra.mxu0 %v387
    %409 = vmatpush.bf16.msra.mxu0 %v386
    %410 = vmatmul.bf16.gmra.mxu0 %v391
    %v411 = vpop.f32.mrf.mxu0
    %v412 = vadd.f32 0.0, %v411
    %v413 = vpop.f32.mrf.mxu0
    %v414 = vadd.f32 0.0, %v413
    %415 = vmatmul.bf16.gmra.mxu0 %v394
    %v416 = vpop.f32.mrf.mxu0
    %v417 = vadd.f32 0.0, %v416
    %v418 = vpop.f32.mrf.mxu0
    %v419 = vadd.f32 0.0, %v418
    %420 = vmatmul.bf16.gmra.mxu0 %v397
    %v421 = vpop.f32.mrf.mxu0
    %v422 = vadd.f32 0.0, %v421
    %v423 = vpop.f32.mrf.mxu0
    %v424 = vadd.f32 0.0, %v423
    %425 = vmatmul.bf16.gmra.mxu0 %v400
    %v426 = vpop.f32.mrf.mxu0
    %v427 = vadd.f32 0.0, %v426
    %v428 = vpop.f32.mrf.mxu0
    %v429 = vadd.f32 0.0, %v428
    %430 = vdwg.mxu0
    %v431 = vadd.f32 %v351, %v412
    %v432 = vadd.f32 %v353, %v414
    %v433 = vadd.f32 %v356, %v417
    %v434 = vadd.f32 %v358, %v419
    %v435 = vadd.f32 %v361, %v422
    %v436 = vadd.f32 %v363, %v424
    %v437 = vadd.f32 %v366, %v427
    %v438 = vadd.f32 %v368, %v429
    %v439 = vld [vmem:[%s21] sm:$0x1]
    %v441 = vperm.slane %v439, 0
    %v443 = vadd.f32 %v431, %v441
    %v444 = vadd.f32 %v432, %v441
    %v445 = vadd.f32 %v433, %v441
    %v446 = vadd.f32 %v434, %v441
    %v447 = vadd.f32 %v435, %v441
    %v448 = vadd.f32 %v436, %v441
    %v449 = vadd.f32 %v437, %v441
    %v450 = vadd.f32 %v438, %v441
    %v451 = vxor.u32 %v443, 2147483648
    %v452 = vxor.u32 %v444, 2147483648
    %v453 = vxor.u32 %v445, 2147483648
    %v454 = vxor.u32 %v446, 2147483648
    %v455 = vxor.u32 %v447, 2147483648
    %v456 = vxor.u32 %v448, 2147483648
    %v457 = vxor.u32 %v449, 2147483648
    %v458 = vxor.u32 %v450, 2147483648
    %v459 = vmul.f32 %v451, 1.442695
    %v460 = vpow.pop %v459
    %v461 = vmul.f32 %v452, 1.442695
    %v462 = vpow.pop %v461
    %v463 = vmul.f32 %v453, 1.442695
    %v464 = vpow.pop %v463
    %v465 = vmul.f32 %v454, 1.442695
    %v466 = vpow.pop %v465
    %v467 = vmul.f32 %v455, 1.442695
    %v468 = vpow.pop %v467
    %v469 = vmul.f32 %v456, 1.442695
    %v470 = vpow.pop %v469
    %v471 = vmul.f32 %v457, 1.442695
    %v472 = vpow.pop %v471
    %v473 = vmul.f32 %v458, 1.442695
    %v474 = vpow.pop %v473
    %v475 = vadd.f32 %v460, 1.0
    %v476 = vadd.f32 %v462, 1.0
    %v477 = vadd.f32 %v464, 1.0
    %v478 = vadd.f32 %v466, 1.0
    %v479 = vadd.f32 %v468, 1.0
    %v480 = vadd.f32 %v470, 1.0
    %v481 = vadd.f32 %v472, 1.0
    %v482 = vadd.f32 %v474, 1.0
    %v483 = vrcp.pop %v475
    %v484 = vmul.f32 %v475, %v483
    %v485 = vsub.f32 1.0, %v484
    %v486 = vmul.f32 %v483, %v485
    %v487 = vadd.f32 %v483, %v486
    %vm488 = vweird.f32 %v475
    %vm489 = vweird.f32 %v483
    %vm490 = vmor %vm488, %vm489
    %v491 = vsel %vm490, %v483, %v487
    %v492 = vand.u32 2147483647, %v475
    %vm493 = vcmp.eq.f32.partialorder %v492, 8.507059e+37
    %v494 = vand.u32 %v475, 2147483648
    %v495 = vor.u32 1.1754944e-38, %v494
    %v496 = vsel %vm493, %v495, %v491
    %v497 = vmul.f32 1.0, %v496
    %v498 = vrcp.pop %v476
    %v499 = vmul.f32 %v476, %v498
    %v500 = vsub.f32 1.0, %v499
    %v501 = vmul.f32 %v498, %v500
    %v502 = vadd.f32 %v498, %v501
    %vm503 = vweird.f32 %v476
    %vm504 = vweird.f32 %v498
    %vm505 = vmor %vm503, %vm504
    %v506 = vsel %vm505, %v498, %v502
    %v507 = vand.u32 2147483647, %v476
    %vm508 = vcmp.eq.f32.partialorder %v507, 8.507059e+37
    %v509 = vand.u32 %v476, 2147483648
    %v510 = vor.u32 1.1754944e-38, %v509
    %v511 = vsel %vm508, %v510, %v506
    %v512 = vmul.f32 1.0, %v511
    %v513 = vrcp.pop %v477
    %v514 = vmul.f32 %v477, %v513
    %v515 = vsub.f32 1.0, %v514
    %v516 = vmul.f32 %v513, %v515
    %v517 = vadd.f32 %v513, %v516
    %vm518 = vweird.f32 %v477
    %vm519 = vweird.f32 %v513
    %vm520 = vmor %vm518, %vm519
    %v521 = vsel %vm520, %v513, %v517
    %v522 = vand.u32 2147483647, %v477
    %vm523 = vcmp.eq.f32.partialorder %v522, 8.507059e+37
    %v524 = vand.u32 %v477, 2147483648
    %v525 = vor.u32 1.1754944e-38, %v524
    %v526 = vsel %vm523, %v525, %v521
    %v527 = vmul.f32 1.0, %v526
    %v528 = vrcp.pop %v478
    %v529 = vmul.f32 %v478, %v528
    %v530 = vsub.f32 1.0, %v529
    %v531 = vmul.f32 %v528, %v530
    %v532 = vadd.f32 %v528, %v531
    %vm533 = vweird.f32 %v478
    %vm534 = vweird.f32 %v528
    %vm535 = vmor %vm533, %vm534
    %v536 = vsel %vm535, %v528, %v532
    %v537 = vand.u32 2147483647, %v478
    %vm538 = vcmp.eq.f32.partialorder %v537, 8.507059e+37
    %v539 = vand.u32 %v478, 2147483648
    %v540 = vor.u32 1.1754944e-38, %v539
    %v541 = vsel %vm538, %v540, %v536
    %v542 = vmul.f32 1.0, %v541
    %v543 = vrcp.pop %v479
    %v544 = vmul.f32 %v479, %v543
    %v545 = vsub.f32 1.0, %v544
    %v546 = vmul.f32 %v543, %v545
    %v547 = vadd.f32 %v543, %v546
    %vm548 = vweird.f32 %v479
    %vm549 = vweird.f32 %v543
    %vm550 = vmor %vm548, %vm549
    %v551 = vsel %vm550, %v543, %v547
    %v552 = vand.u32 2147483647, %v479
    %vm553 = vcmp.eq.f32.partialorder %v552, 8.507059e+37
    %v554 = vand.u32 %v479, 2147483648
    %v555 = vor.u32 1.1754944e-38, %v554
    %v556 = vsel %vm553, %v555, %v551
    %v557 = vmul.f32 1.0, %v556
    %v558 = vrcp.pop %v480
    %v559 = vmul.f32 %v480, %v558
    %v560 = vsub.f32 1.0, %v559
    %v561 = vmul.f32 %v558, %v560
    %v562 = vadd.f32 %v558, %v561
    %vm563 = vweird.f32 %v480
    %vm564 = vweird.f32 %v558
    %vm565 = vmor %vm563, %vm564
    %v566 = vsel %vm565, %v558, %v562
    %v567 = vand.u32 2147483647, %v480
    %vm568 = vcmp.eq.f32.partialorder %v567, 8.507059e+37
    %v569 = vand.u32 %v480, 2147483648
    %v570 = vor.u32 1.1754944e-38, %v569
    %v571 = vsel %vm568, %v570, %v566
    %v572 = vmul.f32 1.0, %v571
    %v573 = vrcp.pop %v481
    %v574 = vmul.f32 %v481, %v573
    %v575 = vsub.f32 1.0, %v574
    %v576 = vmul.f32 %v573, %v575
    %v577 = vadd.f32 %v573, %v576
    %vm578 = vweird.f32 %v481
    %vm579 = vweird.f32 %v573
    %vm580 = vmor %vm578, %vm579
    %v581 = vsel %vm580, %v573, %v577
    %v582 = vand.u32 2147483647, %v481
    %vm583 = vcmp.eq.f32.partialorder %v582, 8.507059e+37
    %v584 = vand.u32 %v481, 2147483648
    %v585 = vor.u32 1.1754944e-38, %v584
    %v586 = vsel %vm583, %v585, %v581
    %v587 = vmul.f32 1.0, %v586
    %v588 = vrcp.pop %v482
    %v589 = vmul.f32 %v482, %v588
    %v590 = vsub.f32 1.0, %v589
    %v591 = vmul.f32 %v588, %v590
    %v592 = vadd.f32 %v588, %v591
    %vm593 = vweird.f32 %v482
    %vm594 = vweird.f32 %v588
    %vm595 = vmor %vm593, %vm594
    %v596 = vsel %vm595, %v588, %v592
    %v597 = vand.u32 2147483647, %v482
    %vm598 = vcmp.eq.f32.partialorder %v597, 8.507059e+37
    %v599 = vand.u32 %v482, 2147483648
    %v600 = vor.u32 1.1754944e-38, %v599
    %v601 = vsel %vm598, %v600, %v596
    %v602 = vmul.f32 1.0, %v601
    %v603 = vmul.f32 %v443, %v497
    %v604 = vmul.f32 %v444, %v512
    %v605 = vmul.f32 %v445, %v527
    %v606 = vmul.f32 %v446, %v542
    %v607 = vmul.f32 %v447, %v557
    %v608 = vmul.f32 %v448, %v572
    %v609 = vmul.f32 %v449, %v587
    %v610 = vmul.f32 %v450, %v602
    %v611 = vld [vmem:[%s23] sm:$0xf]
    %v612 = vld [vmem:[%s23 + $0x4] sm:$0xf]
    %v613 = vld [vmem:[%s23 + $0x8] sm:$0xf]
    %v614 = vld [vmem:[%s23 + $0xc] sm:$0xf]
    %v615 = vpack.c.bf16 %v604, %v603
    %v616 = vpack.c.bf16 %v606, %v605
    %v617 = vpack.c.bf16 %v608, %v607
    %v618 = vpack.c.bf16 %v610, %v609
    %v619 = vld [vmem:[%s25] sm:$0x1]
    %v621 = vperm.slane %v619, 0
    %v627 = vunpack.c.l.b16 %v611
    %v628 = vunpack.c.l.b16 %v612
    %v629 = vunpack.c.l.b16 %v613
    %v630 = vunpack.c.l.b16 %v614
    %v631 = vpack.c.b16 %v628, %v627
    %v632 = vpack.c.b16 %v630, %v629
    %v636 = vsel %vm197, %v615, 0
    %v639 = vsel %vm197, %v616, 0
    %v642 = vsel %vm197, %v617, 0
    %v645 = vsel %vm197, %v618, 0
    %647 = vmatpush.bf16.msra.mxu0 0
    %648 = vmatpush.bf16.msra.mxu0 0
    %649 = vmatpush.bf16.msra.mxu0 0
    %650 = vmatpush.bf16.msra.mxu0 0
    %651 = vmatpush.bf16.msra.mxu0 0
    %652 = vmatpush.bf16.msra.mxu0 0
    %653 = vmatpush.bf16.msra.mxu0 %v632
    %654 = vmatpush.bf16.msra.mxu0 %v631
    %655 = vmatmul.bf16.gmra.mxu0 %v636
    %v656 = vpop.f32.mrf.mxu0
    %v657 = vadd.f32 %v621, %v656
    %v658 = vpop.f32.mrf.mxu0
    %v659 = vadd.f32 %v621, %v658
    %660 = vmatmul.bf16.gmra.mxu0 %v639
    %v661 = vpop.f32.mrf.mxu0
    %v662 = vadd.f32 %v621, %v661
    %v663 = vpop.f32.mrf.mxu0
    %v664 = vadd.f32 %v621, %v663
    %665 = vmatmul.bf16.gmra.mxu0 %v642
    %v666 = vpop.f32.mrf.mxu0
    %v667 = vadd.f32 %v621, %v666
    %v668 = vpop.f32.mrf.mxu0
    %v669 = vadd.f32 %v621, %v668
    %670 = vmatmul.bf16.gmra.mxu0 %v645
    %v671 = vpop.f32.mrf.mxu0
    %v672 = vadd.f32 %v621, %v671
    %v673 = vpop.f32.mrf.mxu0
    %v674 = vadd.f32 %v621, %v673
    %675 = vdwg.mxu0
    %v676 = vxor.u32 %v657, 2147483648
    %v677 = vxor.u32 %v659, 2147483648
    %v678 = vxor.u32 %v662, 2147483648
    %v679 = vxor.u32 %v664, 2147483648
    %v680 = vxor.u32 %v667, 2147483648
    %v681 = vxor.u32 %v669, 2147483648
    %v682 = vxor.u32 %v672, 2147483648
    %v683 = vxor.u32 %v674, 2147483648
    %v684 = vmul.f32 %v676, 1.442695
    %v685 = vpow.pop %v684
    %v686 = vmul.f32 %v677, 1.442695
    %v687 = vpow.pop %v686
    %v688 = vmul.f32 %v678, 1.442695
    %v689 = vpow.pop %v688
    %v690 = vmul.f32 %v679, 1.442695
    %v691 = vpow.pop %v690
    %v692 = vmul.f32 %v680, 1.442695
    %v693 = vpow.pop %v692
    %v694 = vmul.f32 %v681, 1.442695
    %v695 = vpow.pop %v694
    %v696 = vmul.f32 %v682, 1.442695
    %v697 = vpow.pop %v696
    %v698 = vmul.f32 %v683, 1.442695
    %v699 = vpow.pop %v698
    %v700 = vadd.f32 %v685, 1.0
    %v701 = vadd.f32 %v687, 1.0
    %v702 = vadd.f32 %v689, 1.0
    %v703 = vadd.f32 %v691, 1.0
    %v704 = vadd.f32 %v693, 1.0
    %v705 = vadd.f32 %v695, 1.0
    %v706 = vadd.f32 %v697, 1.0
    %v707 = vadd.f32 %v699, 1.0
    %v708 = vrcp.pop %v700
    %v709 = vmul.f32 %v700, %v708
    %v710 = vsub.f32 1.0, %v709
    %v711 = vmul.f32 %v708, %v710
    %v712 = vadd.f32 %v708, %v711
    %vm713 = vweird.f32 %v700
    %vm714 = vweird.f32 %v708
    %vm715 = vmor %vm713, %vm714
    %v716 = vsel %vm715, %v708, %v712
    %v717 = vand.u32 2147483647, %v700
    %vm718 = vcmp.eq.f32.partialorder %v717, 8.507059e+37
    %v719 = vand.u32 %v700, 2147483648
    %v720 = vor.u32 1.1754944e-38, %v719
    %v721 = vsel %vm718, %v720, %v716
    %v722 = vmul.f32 1.0, %v721
    %v723 = vrcp.pop %v701
    %v724 = vmul.f32 %v701, %v723
    %v725 = vsub.f32 1.0, %v724
    %v726 = vmul.f32 %v723, %v725
    %v727 = vadd.f32 %v723, %v726
    %vm728 = vweird.f32 %v701
    %vm729 = vweird.f32 %v723
    %vm730 = vmor %vm728, %vm729
    %v731 = vsel %vm730, %v723, %v727
    %v732 = vand.u32 2147483647, %v701
    %vm733 = vcmp.eq.f32.partialorder %v732, 8.507059e+37
    %v734 = vand.u32 %v701, 2147483648
    %v735 = vor.u32 1.1754944e-38, %v734
    %v736 = vsel %vm733, %v735, %v731
    %v737 = vmul.f32 1.0, %v736
    %v738 = vrcp.pop %v702
    %v739 = vmul.f32 %v702, %v738
    %v740 = vsub.f32 1.0, %v739
    %v741 = vmul.f32 %v738, %v740
    %v742 = vadd.f32 %v738, %v741
    %vm743 = vweird.f32 %v702
    %vm744 = vweird.f32 %v738
    %vm745 = vmor %vm743, %vm744
    %v746 = vsel %vm745, %v738, %v742
    %v747 = vand.u32 2147483647, %v702
    %vm748 = vcmp.eq.f32.partialorder %v747, 8.507059e+37
    %v749 = vand.u32 %v702, 2147483648
    %v750 = vor.u32 1.1754944e-38, %v749
    %v751 = vsel %vm748, %v750, %v746
    %v752 = vmul.f32 1.0, %v751
    %v753 = vrcp.pop %v703
    %v754 = vmul.f32 %v703, %v753
    %v755 = vsub.f32 1.0, %v754
    %v756 = vmul.f32 %v753, %v755
    %v757 = vadd.f32 %v753, %v756
    %vm758 = vweird.f32 %v703
    %vm759 = vweird.f32 %v753
    %vm760 = vmor %vm758, %vm759
    %v761 = vsel %vm760, %v753, %v757
    %v762 = vand.u32 2147483647, %v703
    %vm763 = vcmp.eq.f32.partialorder %v762, 8.507059e+37
    %v764 = vand.u32 %v703, 2147483648
    %v765 = vor.u32 1.1754944e-38, %v764
    %v766 = vsel %vm763, %v765, %v761
    %v767 = vmul.f32 1.0, %v766
    %v768 = vrcp.pop %v704
    %v769 = vmul.f32 %v704, %v768
    %v770 = vsub.f32 1.0, %v769
    %v771 = vmul.f32 %v768, %v770
    %v772 = vadd.f32 %v768, %v771
    %vm773 = vweird.f32 %v704
    %vm774 = vweird.f32 %v768
    %vm775 = vmor %vm773, %vm774
    %v776 = vsel %vm775, %v768, %v772
    %v777 = vand.u32 2147483647, %v704
    %vm778 = vcmp.eq.f32.partialorder %v777, 8.507059e+37
    %v779 = vand.u32 %v704, 2147483648
    %v780 = vor.u32 1.1754944e-38, %v779
    %v781 = vsel %vm778, %v780, %v776
    %v782 = vmul.f32 1.0, %v781
    %v783 = vrcp.pop %v705
    %v784 = vmul.f32 %v705, %v783
    %v785 = vsub.f32 1.0, %v784
    %v786 = vmul.f32 %v783, %v785
    %v787 = vadd.f32 %v783, %v786
    %vm788 = vweird.f32 %v705
    %vm789 = vweird.f32 %v783
    %vm790 = vmor %vm788, %vm789
    %v791 = vsel %vm790, %v783, %v787
    %v792 = vand.u32 2147483647, %v705
    %vm793 = vcmp.eq.f32.partialorder %v792, 8.507059e+37
    %v794 = vand.u32 %v705, 2147483648
    %v795 = vor.u32 1.1754944e-38, %v794
    %v796 = vsel %vm793, %v795, %v791
    %v797 = vmul.f32 1.0, %v796
    %v798 = vrcp.pop %v706
    %v799 = vmul.f32 %v706, %v798
    %v800 = vsub.f32 1.0, %v799
    %v801 = vmul.f32 %v798, %v800
    %v802 = vadd.f32 %v798, %v801
    %vm803 = vweird.f32 %v706
    %vm804 = vweird.f32 %v798
    %vm805 = vmor %vm803, %vm804
    %v806 = vsel %vm805, %v798, %v802
    %v807 = vand.u32 2147483647, %v706
    %vm808 = vcmp.eq.f32.partialorder %v807, 8.507059e+37
    %v809 = vand.u32 %v706, 2147483648
    %v810 = vor.u32 1.1754944e-38, %v809
    %v811 = vsel %vm808, %v810, %v806
    %v812 = vmul.f32 1.0, %v811
    %v813 = vrcp.pop %v707
    %v814 = vmul.f32 %v707, %v813
    %v815 = vsub.f32 1.0, %v814
    %v816 = vmul.f32 %v813, %v815
    %v817 = vadd.f32 %v813, %v816
    %vm818 = vweird.f32 %v707
    %vm819 = vweird.f32 %v813
    %vm820 = vmor %vm818, %vm819
    %v821 = vsel %vm820, %v813, %v817
    %v822 = vand.u32 2147483647, %v707
    %vm823 = vcmp.eq.f32.partialorder %v822, 8.507059e+37
    %v824 = vand.u32 %v707, 2147483648
    %v825 = vor.u32 1.1754944e-38, %v824
    %v826 = vsel %vm823, %v825, %v821
    %v827 = vmul.f32 1.0, %v826
    %v828 = vmul.f32 %v657, %v722
    %v829 = vmul.f32 %v659, %v737
    %v830 = vmul.f32 %v662, %v752
    %v831 = vmul.f32 %v664, %v767
    %v832 = vmul.f32 %v667, %v782
    %v833 = vmul.f32 %v669, %v797
    %v834 = vmul.f32 %v672, %v812
    %v835 = vmul.f32 %v674, %v827
    %v836 = vld [vmem:[%s27] sm:$0xf]
    %v837 = vld [vmem:[%s27 + $0x4] sm:$0xf]
    %v838 = vld [vmem:[%s27 + $0x8] sm:$0xf]
    %v839 = vld [vmem:[%s27 + $0xc] sm:$0xf]
    %v840 = vpack.c.bf16 %v829, %v828
    %v841 = vpack.c.bf16 %v831, %v830
    %v842 = vpack.c.bf16 %v833, %v832
    %v843 = vpack.c.bf16 %v835, %v834
    %v844 = vld [vmem:[%s29] sm:$0x1]
    %v846 = vperm.slane %v844, 0
    %v852 = vunpack.c.l.b16 %v836
    %v853 = vunpack.c.l.b16 %v837
    %v854 = vunpack.c.l.b16 %v838
    %v855 = vunpack.c.l.b16 %v839
    %v856 = vpack.c.b16 %v853, %v852
    %v857 = vpack.c.b16 %v855, %v854
    %v861 = vsel %vm197, %v840, 0
    %v864 = vsel %vm197, %v841, 0
    %v867 = vsel %vm197, %v842, 0
    %v870 = vsel %vm197, %v843, 0
    %872 = vmatpush.bf16.msra.mxu0 0
    %873 = vmatpush.bf16.msra.mxu0 0
    %874 = vmatpush.bf16.msra.mxu0 0
    %875 = vmatpush.bf16.msra.mxu0 0
    %876 = vmatpush.bf16.msra.mxu0 0
    %877 = vmatpush.bf16.msra.mxu0 0
    %878 = vmatpush.bf16.msra.mxu0 %v857
    %879 = vmatpush.bf16.msra.mxu0 %v856
    %880 = vmatmul.bf16.gmra.mxu0 %v861
    %v881 = vpop.f32.mrf.mxu0
    %v882 = vadd.f32 %v846, %v881
    %v883 = vpop.f32.mrf.mxu0
    %v884 = vadd.f32 %v846, %v883
    %885 = vmatmul.bf16.gmra.mxu0 %v864
    %v886 = vpop.f32.mrf.mxu0
    %v887 = vadd.f32 %v846, %v886
    %v888 = vpop.f32.mrf.mxu0
    %v889 = vadd.f32 %v846, %v888
    %890 = vmatmul.bf16.gmra.mxu0 %v867
    %v891 = vpop.f32.mrf.mxu0
    %v892 = vadd.f32 %v846, %v891
    %v893 = vpop.f32.mrf.mxu0
    %v894 = vadd.f32 %v846, %v893
    %895 = vmatmul.bf16.gmra.mxu0 %v870
    %v896 = vpop.f32.mrf.mxu0
    %v897 = vadd.f32 %v846, %v896
    %v898 = vpop.f32.mrf.mxu0
    %v899 = vadd.f32 %v846, %v898
    %900 = vdwg.mxu0
    %v901 = vld [vmem:[%s31] sm:$0x1]
    %v902 = vld [vmem:[%s33] sm:$0x1]
    %v903 = vsel %vm197, %v882, 0.0
    %904 = vadd.xlane.f32.xlu0 %v903
    %v905 = vpop.xlane.xlu0 %904
    %v906 = vsel %vm197, %v884, 0.0
    %907 = vadd.xlane.f32.xlu0 %v906
    %v908 = vpop.xlane.xlu0 %907
    %v909 = vsel %vm197, %v887, 0.0
    %910 = vadd.xlane.f32.xlu0 %v909
    %v911 = vpop.xlane.xlu0 %910
    %v912 = vsel %vm197, %v889, 0.0
    %913 = vadd.xlane.f32.xlu0 %v912
    %v914 = vpop.xlane.xlu0 %913
    %v915 = vsel %vm197, %v892, 0.0
    %916 = vadd.xlane.f32.xlu0 %v915
    %v917 = vpop.xlane.xlu0 %916
    %v918 = vsel %vm197, %v894, 0.0
    %919 = vadd.xlane.f32.xlu0 %v918
    %v920 = vpop.xlane.xlu0 %919
    %v921 = vsel %vm197, %v897, 0.0
    %922 = vadd.xlane.f32.xlu0 %v921
    %v923 = vpop.xlane.xlu0 %922
    %v924 = vsel %vm197, %v899, 0.0
    %925 = vadd.xlane.f32.xlu0 %v924
    %v926 = vpop.xlane.xlu0 %925
    %v927 = vrcp.pop 32.0
    %v928 = vmul.f32 32.0, %v927
    %v929 = vsub.f32 1.0, %v928
    %v930 = vmul.f32 %v927, %v929
    %v931 = vadd.f32 %v927, %v930
    %vm932 = vweird.f32 %v927
    %v933 = vsel %vm932, %v927, %v931
    %v934 = vmul.f32 %v905, %v933
    %v935 = vmul.f32 %v908, %v933
    %v936 = vmul.f32 %v911, %v933
    %v937 = vmul.f32 %v914, %v933
    %v938 = vmul.f32 %v917, %v933
    %v939 = vmul.f32 %v920, %v933
    %v940 = vmul.f32 %v923, %v933
    %v941 = vmul.f32 %v926, %v933
    %v942 = vsub.f32 %v882, %v934
    %v943 = vsub.f32 %v884, %v935
    %v944 = vsub.f32 %v887, %v936
    %v945 = vsub.f32 %v889, %v937
    %v946 = vsub.f32 %v892, %v938
    %v947 = vsub.f32 %v894, %v939
    %v948 = vsub.f32 %v897, %v940
    %v949 = vsub.f32 %v899, %v941
    %v950 = vmul.f32 %v942, %v942
    %v951 = vmul.f32 %v943, %v943
    %v952 = vmul.f32 %v944, %v944
    %v953 = vmul.f32 %v945, %v945
    %v954 = vmul.f32 %v946, %v946
    %v955 = vmul.f32 %v947, %v947
    %v956 = vmul.f32 %v948, %v948
    %v957 = vmul.f32 %v949, %v949
    %v958 = vsel %vm197, %v950, 0.0
    %959 = vadd.xlane.f32.xlu0 %v958
    %v960 = vpop.xlane.xlu0 %959
    %v961 = vsel %vm197, %v951, 0.0
    %962 = vadd.xlane.f32.xlu0 %v961
    %v963 = vpop.xlane.xlu0 %962
    %v964 = vsel %vm197, %v952, 0.0
    %965 = vadd.xlane.f32.xlu0 %v964
    %v966 = vpop.xlane.xlu0 %965
    %v967 = vsel %vm197, %v953, 0.0
    %968 = vadd.xlane.f32.xlu0 %v967
    %v969 = vpop.xlane.xlu0 %968
    %v970 = vsel %vm197, %v954, 0.0
    %971 = vadd.xlane.f32.xlu0 %v970
    %v972 = vpop.xlane.xlu0 %971
    %v973 = vsel %vm197, %v955, 0.0
    %974 = vadd.xlane.f32.xlu0 %v973
    %v975 = vpop.xlane.xlu0 %974
    %v976 = vsel %vm197, %v956, 0.0
    %977 = vadd.xlane.f32.xlu0 %v976
    %v978 = vpop.xlane.xlu0 %977
    %v979 = vsel %vm197, %v957, 0.0
    %980 = vadd.xlane.f32.xlu0 %v979
    %v981 = vpop.xlane.xlu0 %980
    %v982 = vmul.f32 %v960, %v933
    %v983 = vmul.f32 %v963, %v933
    %v984 = vmul.f32 %v966, %v933
    %v985 = vmul.f32 %v969, %v933
    %v986 = vmul.f32 %v972, %v933
    %v987 = vmul.f32 %v975, %v933
    %v988 = vmul.f32 %v978, %v933
    %v989 = vmul.f32 %v981, %v933
    %v990 = vadd.f32 %v982, 1e-05
    %v991 = vadd.f32 %v983, 1e-05
    %v992 = vadd.f32 %v984, 1e-05
    %v993 = vadd.f32 %v985, 1e-05
    %v994 = vadd.f32 %v986, 1e-05
    %v995 = vadd.f32 %v987, 1e-05
    %v996 = vadd.f32 %v988, 1e-05
    %v997 = vadd.f32 %v989, 1e-05
    %v998 = vrsqrt.pop %v990
    %v999 = vmul.f32 %v998, %v990
    %v1000 = vmul.f32 %v999, %v998
    %v1001 = vmul.f32 0.5, %v1000
    %v1002 = vsub.f32 1.5, %v1001
    %v1003 = vmul.f32 %v998, %v1002
    %vm1004 = vweird.f32 %v990
    %vm1005 = vweird.f32 %v998
    %vm1006 = vmor %vm1004, %vm1005
    %v1007 = vsel %vm1006, %v998, %v1003
    %v1008 = vrsqrt.pop %v991
    %v1009 = vmul.f32 %v1008, %v991
    %v1010 = vmul.f32 %v1009, %v1008
    %v1011 = vmul.f32 0.5, %v1010
    %v1012 = vsub.f32 1.5, %v1011
    %v1013 = vmul.f32 %v1008, %v1012
    %vm1014 = vweird.f32 %v991
    %vm1015 = vweird.f32 %v1008
    %vm1016 = vmor %vm1014, %vm1015
    %v1017 = vsel %vm1016, %v1008, %v1013
    %v1018 = vrsqrt.pop %v992
    %v1019 = vmul.f32 %v1018, %v992
    %v1020 = vmul.f32 %v1019, %v1018
    %v1021 = vmul.f32 0.5, %v1020
    %v1022 = vsub.f32 1.5, %v1021
    %v1023 = vmul.f32 %v1018, %v1022
    %vm1024 = vweird.f32 %v992
    %vm1025 = vweird.f32 %v1018
    %vm1026 = vmor %vm1024, %vm1025
    %v1027 = vsel %vm1026, %v1018, %v1023
    %v1028 = vrsqrt.pop %v993
    %v1029 = vmul.f32 %v1028, %v993
    %v1030 = vmul.f32 %v1029, %v1028
    %v1031 = vmul.f32 0.5, %v1030
    %v1032 = vsub.f32 1.5, %v1031
    %v1033 = vmul.f32 %v1028, %v1032
    %vm1034 = vweird.f32 %v993
    %vm1035 = vweird.f32 %v1028
    %vm1036 = vmor %vm1034, %vm1035
    %v1037 = vsel %vm1036, %v1028, %v1033
    %v1038 = vrsqrt.pop %v994
    %v1039 = vmul.f32 %v1038, %v994
    %v1040 = vmul.f32 %v1039, %v1038
    %v1041 = vmul.f32 0.5, %v1040
    %v1042 = vsub.f32 1.5, %v1041
    %v1043 = vmul.f32 %v1038, %v1042
    %vm1044 = vweird.f32 %v994
    %vm1045 = vweird.f32 %v1038
    %vm1046 = vmor %vm1044, %vm1045
    %v1047 = vsel %vm1046, %v1038, %v1043
    %v1048 = vrsqrt.pop %v995
    %v1049 = vmul.f32 %v1048, %v995
    %v1050 = vmul.f32 %v1049, %v1048
    %v1051 = vmul.f32 0.5, %v1050
    %v1052 = vsub.f32 1.5, %v1051
    %v1053 = vmul.f32 %v1048, %v1052
    %vm1054 = vweird.f32 %v995
    %vm1055 = vweird.f32 %v1048
    %vm1056 = vmor %vm1054, %vm1055
    %v1057 = vsel %vm1056, %v1048, %v1053
    %v1058 = vrsqrt.pop %v996
    %v1059 = vmul.f32 %v1058, %v996
    %v1060 = vmul.f32 %v1059, %v1058
    %v1061 = vmul.f32 0.5, %v1060
    %v1062 = vsub.f32 1.5, %v1061
    %v1063 = vmul.f32 %v1058, %v1062
    %vm1064 = vweird.f32 %v996
    %vm1065 = vweird.f32 %v1058
    %vm1066 = vmor %vm1064, %vm1065
    %v1067 = vsel %vm1066, %v1058, %v1063
    %v1068 = vrsqrt.pop %v997
    %v1069 = vmul.f32 %v1068, %v997
    %v1070 = vmul.f32 %v1069, %v1068
    %v1071 = vmul.f32 0.5, %v1070
    %v1072 = vsub.f32 1.5, %v1071
    %v1073 = vmul.f32 %v1068, %v1072
    %vm1074 = vweird.f32 %v997
    %vm1075 = vweird.f32 %v1068
    %vm1076 = vmor %vm1074, %vm1075
    %v1077 = vsel %vm1076, %v1068, %v1073
    %v1078 = vmul.f32 %v942, %v1007
    %v1079 = vmul.f32 %v943, %v1017
    %v1080 = vmul.f32 %v944, %v1027
    %v1081 = vmul.f32 %v945, %v1037
    %v1082 = vmul.f32 %v946, %v1047
    %v1083 = vmul.f32 %v947, %v1057
    %v1084 = vmul.f32 %v948, %v1067
    %v1085 = vmul.f32 %v949, %v1077
    %v1087 = vperm.slane %v901, 0
    %v1089 = vmul.f32 %v1078, %v1087
    %v1090 = vmul.f32 %v1079, %v1087
    %v1091 = vmul.f32 %v1080, %v1087
    %v1092 = vmul.f32 %v1081, %v1087
    %v1093 = vmul.f32 %v1082, %v1087
    %v1094 = vmul.f32 %v1083, %v1087
    %v1095 = vmul.f32 %v1084, %v1087
    %v1096 = vmul.f32 %v1085, %v1087
    %v1098 = vperm.slane %v902, 0
    %v1100 = vadd.f32 %v1089, %v1098
    %v1101 = vadd.f32 %v1090, %v1098
    %v1102 = vadd.f32 %v1091, %v1098
    %v1103 = vadd.f32 %v1092, %v1098
    %v1104 = vadd.f32 %v1093, %v1098
    %v1105 = vadd.f32 %v1094, %v1098
    %v1106 = vadd.f32 %v1095, %v1098
    %v1107 = vadd.f32 %v1096, %v1098
    %v1108 = vadd.f32 %v145, %v1100
    %v1109 = vadd.f32 %v146, %v1101
    %v1110 = vadd.f32 %v147, %v1102
    %v1111 = vadd.f32 %v148, %v1103
    %v1112 = vadd.f32 %v149, %v1104
    %v1113 = vadd.f32 %v150, %v1105
    %v1114 = vadd.f32 %v151, %v1106
    %v1115 = vadd.f32 %v152, %v1107
    %1116 = vst.msk [vmem:[%s69] sm:$0xff] %vm197, %v1108
    %1117 = vst.msk [vmem:[%s69 + $0x8] sm:$0xff] %vm197, %v1109
    %1118 = vst.msk [vmem:[%s69 + $0x10] sm:$0xff] %vm197, %v1110
    %1119 = vst.msk [vmem:[%s69 + $0x18] sm:$0xff] %vm197, %v1111
    %1120 = vst.msk [vmem:[%s69 + $0x20] sm:$0xff] %vm197, %v1112
    %1121 = vst.msk [vmem:[%s69 + $0x28] sm:$0xff] %vm197, %v1113
    %1122 = vst.msk [vmem:[%s69 + $0x30] sm:$0xff] %vm197, %v1114
    %1123 = vst.msk [vmem:[%s69 + $0x38] sm:$0xff] %vm197, %v1115
    %v1124 = vld [vmem:[%s35] sm:$0xf]
    %v1125 = vld [vmem:[%s35 + $0x4] sm:$0xf]
    %v1126 = vld [vmem:[%s35 + $0x8] sm:$0xf]
    %v1127 = vld [vmem:[%s35 + $0xc] sm:$0xf]
    %v1128 = vld [vmem:[%s37] sm:$0x1]
    %v1130 = vperm.slane %v1128, 0
    %v1136 = vunpack.c.l.b16 %v1124
    %v1137 = vunpack.c.l.b16 %v1125
    %v1138 = vunpack.c.l.b16 %v1126
    %v1139 = vunpack.c.l.b16 %v1127
    %v1140 = vpack.c.b16 %v1137, %v1136
    %v1141 = vpack.c.b16 %v1139, %v1138
    %1144 = vmatpush.bf16.msra.mxu0 0
    %1145 = vmatpush.bf16.msra.mxu0 0
    %1146 = vmatpush.bf16.msra.mxu0 0
    %1147 = vmatpush.bf16.msra.mxu0 0
    %1148 = vmatpush.bf16.msra.mxu0 0
    %1149 = vmatpush.bf16.msra.mxu0 0
    %1150 = vmatpush.bf16.msra.mxu0 %v1141
    %1151 = vmatpush.bf16.msra.mxu0 %v1140
    %1152 = vmatmul.bf16.gmra.mxu0 %v199
    %v1153 = vpop.f32.mrf.mxu0
    %v1154 = vadd.f32 %v1130, %v1153
    %v1155 = vpop.f32.mrf.mxu0
    %v1156 = vadd.f32 %v1130, %v1155
    %1157 = vdwg.mxu0
    %v1158 = vpack.c.bf16 %v1156, %v1154
    %1159 = vmatpush.bf16.msra.mxu0 0
    %1160 = vmatpush.bf16.msra.mxu0 0
    %1161 = vmatpush.bf16.msra.mxu0 0
    %1162 = vmatpush.bf16.msra.mxu0 0
    %1163 = vmatpush.bf16.msra.mxu0 0
    %1164 = vmatpush.bf16.msra.mxu0 0
    %1165 = vmatpush.bf16.msra.mxu0 0
    %1166 = vmatpush.bf16.msra.mxu0 %v1158
    %1167 = vmatmul.bf16.gmra.mxu0 %v269
    %v1168 = vpop.f32.mrf.mxu0
    %v1169 = vadd.f32 0.0, %v1168
    %v1170 = vpop.f32.mrf.mxu0
    %v1171 = vadd.f32 0.0, %v1170
    %1172 = vmatmul.bf16.gmra.mxu0 %v272
    %v1173 = vpop.f32.mrf.mxu0
    %v1174 = vadd.f32 0.0, %v1173
    %v1175 = vpop.f32.mrf.mxu0
    %v1176 = vadd.f32 0.0, %v1175
    %1177 = vmatmul.bf16.gmra.mxu0 %v275
    %v1178 = vpop.f32.mrf.mxu0
    %v1179 = vadd.f32 0.0, %v1178
    %v1180 = vpop.f32.mrf.mxu0
    %v1181 = vadd.f32 0.0, %v1180
    %1182 = vmatmul.bf16.gmra.mxu0 %v278
    %v1183 = vpop.f32.mrf.mxu0
    %v1184 = vadd.f32 0.0, %v1183
    %v1185 = vpop.f32.mrf.mxu0
    %v1186 = vadd.f32 0.0, %v1185
    %1187 = vdwg.mxu0
    %v1188 = vld [vmem:[%s39] sm:$0xf]
    %v1189 = vld [vmem:[%s39 + $0x4] sm:$0xf]
    %v1190 = vld [vmem:[%s39 + $0x8] sm:$0xf]
    %v1191 = vld [vmem:[%s39 + $0xc] sm:$0xf]
    %v1192 = vpack.c.bf16 %v1109, %v1108
    %v1193 = vpack.c.bf16 %v1111, %v1110
    %v1194 = vpack.c.bf16 %v1113, %v1112
    %v1195 = vpack.c.bf16 %v1115, %v1114
    %v1196 = vld [vmem:[%s41] sm:$0x1]
    %v1198 = vperm.slane %v1196, 0
    %v1204 = vunpack.c.l.b16 %v1188
    %v1205 = vunpack.c.l.b16 %v1189
    %v1206 = vunpack.c.l.b16 %v1190
    %v1207 = vunpack.c.l.b16 %v1191
    %v1208 = vpack.c.b16 %v1205, %v1204
    %v1209 = vpack.c.b16 %v1207, %v1206
    %v1213 = vsel %vm197, %v1192, 0
    %v1216 = vsel %vm197, %v1193, 0
    %v1219 = vsel %vm197, %v1194, 0
    %v1222 = vsel %vm197, %v1195, 0
    %1224 = vmatpush.bf16.msra.mxu0 0
    %1225 = vmatpush.bf16.msra.mxu0 0
    %1226 = vmatpush.bf16.msra.mxu0 0
    %1227 = vmatpush.bf16.msra.mxu0 0
    %1228 = vmatpush.bf16.msra.mxu0 0
    %1229 = vmatpush.bf16.msra.mxu0 0
    %1230 = vmatpush.bf16.msra.mxu0 %v1209
    %1231 = vmatpush.bf16.msra.mxu0 %v1208
    %1232 = vmatmul.bf16.gmra.mxu0 %v1213
    %v1233 = vpop.f32.mrf.mxu0
    %v1234 = vadd.f32 %v1198, %v1233
    %v1235 = vpop.f32.mrf.mxu0
    %v1236 = vadd.f32 %v1198, %v1235
    %1237 = vmatmul.bf16.gmra.mxu0 %v1216
    %v1238 = vpop.f32.mrf.mxu0
    %v1239 = vadd.f32 %v1198, %v1238
    %v1240 = vpop.f32.mrf.mxu0
    %v1241 = vadd.f32 %v1198, %v1240
    %1242 = vmatmul.bf16.gmra.mxu0 %v1219
    %v1243 = vpop.f32.mrf.mxu0
    %v1244 = vadd.f32 %v1198, %v1243
    %v1245 = vpop.f32.mrf.mxu0
    %v1246 = vadd.f32 %v1198, %v1245
    %1247 = vmatmul.bf16.gmra.mxu0 %v1222
    %v1248 = vpop.f32.mrf.mxu0
    %v1249 = vadd.f32 %v1198, %v1248
    %v1250 = vpop.f32.mrf.mxu0
    %v1251 = vadd.f32 %v1198, %v1250
    %1252 = vdwg.mxu0
    %v1253 = vld [vmem:[%s43] sm:$0xf]
    %v1254 = vld [vmem:[%s43 + $0x4] sm:$0xf]
    %v1255 = vld [vmem:[%s43 + $0x8] sm:$0xf]
    %v1256 = vld [vmem:[%s43 + $0xc] sm:$0xf]
    %v1257 = vld [vmem:[%s45] sm:$0x1]
    %v1259 = vperm.slane %v1257, 0
    %v1265 = vunpack.c.l.b16 %v1253
    %v1266 = vunpack.c.l.b16 %v1254
    %v1267 = vunpack.c.l.b16 %v1255
    %v1268 = vunpack.c.l.b16 %v1256
    %v1269 = vpack.c.b16 %v1266, %v1265
    %v1270 = vpack.c.b16 %v1268, %v1267
    %1273 = vmatpush.bf16.msra.mxu0 0
    %1274 = vmatpush.bf16.msra.mxu0 0
    %1275 = vmatpush.bf16.msra.mxu0 0
    %1276 = vmatpush.bf16.msra.mxu0 0
    %1277 = vmatpush.bf16.msra.mxu0 0
    %1278 = vmatpush.bf16.msra.mxu0 0
    %1279 = vmatpush.bf16.msra.mxu0 %v1270
    %1280 = vmatpush.bf16.msra.mxu0 %v1269
    %1281 = vmatmul.bf16.gmra.mxu0 %v1213
    %v1282 = vpop.f32.mrf.mxu0
    %v1283 = vadd.f32 %v1259, %v1282
    %v1284 = vpop.f32.mrf.mxu0
    %v1285 = vadd.f32 %v1259, %v1284
    %1286 = vmatmul.bf16.gmra.mxu0 %v1216
    %v1287 = vpop.f32.mrf.mxu0
    %v1288 = vadd.f32 %v1259, %v1287
    %v1289 = vpop.f32.mrf.mxu0
    %v1290 = vadd.f32 %v1259, %v1289
    %1291 = vmatmul.bf16.gmra.mxu0 %v1219
    %v1292 = vpop.f32.mrf.mxu0
    %v1293 = vadd.f32 %v1259, %v1292
    %v1294 = vpop.f32.mrf.mxu0
    %v1295 = vadd.f32 %v1259, %v1294
    %1296 = vmatmul.bf16.gmra.mxu0 %v1222
    %v1297 = vpop.f32.mrf.mxu0
    %v1298 = vadd.f32 %v1259, %v1297
    %v1299 = vpop.f32.mrf.mxu0
    %v1300 = vadd.f32 %v1259, %v1299
    %1301 = vdwg.mxu0
    %v1302 = vmul.f32 %v153, 3.1415927
    %v1303 = vmul.f32 %v154, 3.1415927
    %v1304 = vmul.f32 %v155, 3.1415927
    %v1305 = vmul.f32 %v156, 3.1415927
    %v1306 = vmul.f32 %v157, 3.1415927
    %v1307 = vmul.f32 %v158, 3.1415927
    %v1308 = vmul.f32 %v159, 3.1415927
    %v1309 = vmul.f32 %v160, 3.1415927
    %v1310 = vrcp.pop 5.0
    %v1311 = vmul.f32 5.0, %v1310
    %v1312 = vsub.f32 1.0, %v1311
    %v1313 = vmul.f32 %v1310, %v1312
    %v1314 = vadd.f32 %v1310, %v1313
    %vm1315 = vweird.f32 %v1310
    %v1316 = vsel %vm1315, %v1310, %v1314
    %v1317 = vmul.f32 %v1302, %v1316
    %v1318 = vmul.f32 %v1303, %v1316
    %v1319 = vmul.f32 %v1304, %v1316
    %v1320 = vmul.f32 %v1305, %v1316
    %v1321 = vmul.f32 %v1306, %v1316
    %v1322 = vmul.f32 %v1307, %v1316
    %v1323 = vmul.f32 %v1308, %v1316
    %v1324 = vmul.f32 %v1309, %v1316
    %v1325 = vand.u32 2147483647, %v1317
    %vm1326 = vcmp.le.f32.partialorder %v1325, 0.7853982
    %vm1327 = vcmp.lt.s32.totalorder %v1317, 0
    %v1328 = vand.u32 %v1317, 2139095040
    %v1329 = vshrl.u32 %v1328, 23
    %v1330 = vsub.s32 %v1329, 127
    %v1331 = vand.u32 2147483647, %v1317
    %v1332 = vand.u32 %v1331, 8388607
    %v1333 = vor.u32 %v1332, 8388608
    %v1334 = vsub.s32 0, %v1333
    %v1335 = vadd.s32 %v1330, 1
    %vm1336 = vcmp.gt.s32.totalorder %v1335, 0
    %v1337 = vsel %vm1336, %v1335, 0
    %v1338 = vshrl.u32 %v1337, 5
    %v1339 = vand.u32 %v1337, 31
    %v1340 = vsub.s32 32, %v1339
    %v1341 = vshrl.u32 683565275, %v1340
    %v1342 = vshll.u32 683565275, %v1339
    %v1343 = vshrl.u32 2475754826, %v1340
    %v1344 = vor.u32 %v1342, %v1343
    %v1345 = vshll.u32 2475754826, %v1339
    %v1346 = vshrl.u32 2131351028, %v1340
    %v1347 = vor.u32 %v1345, %v1346
    %v1348 = vshll.u32 2131351028, %v1339
    %v1349 = vshrl.u32 2102212464, %v1340
    %v1350 = vor.u32 %v1348, %v1349
    %v1351 = vshll.u32 2102212464, %v1339
    %v1352 = vshrl.u32 920167782, %v1340
    %v1353 = vor.u32 %v1351, %v1352
    %v1354 = vshll.u32 920167782, %v1339
    %v1355 = vshrl.u32 1326507024, %v1340
    %v1356 = vor.u32 %v1354, %v1355
    %vm1357 = vcmp.lt.s32.totalorder %v1338, 1
    %vm1358 = vcmp.lt.s32.totalorder %v1338, 2
    %vm1359 = vcmp.lt.s32.totalorder %v1338, 3
    %vm1360 = vcmp.lt.s32.totalorder %v1338, 4
    %v1361 = vsel %vm1357, %v1341, %v1344
    %v1362 = vsel %vm1360, %v1350, 2102212464
    %v1363 = vsel %vm1359, %v1347, %v1362
    %v1364 = vsel %vm1358, %v1361, %v1363
    %v1365 = vsel %vm1357, %v1344, %v1347
    %v1366 = vsel %vm1360, %v1353, 920167782
    %v1367 = vsel %vm1359, %v1350, %v1366
    %v1368 = vsel %vm1358, %v1365, %v1367
    %v1369 = vsel %vm1357, %v1347, %v1350
    %v1370 = vsel %vm1360, %v1356, 1326507024
    %v1371 = vsel %vm1359, %v1353, %v1370
    %v1372 = vsel %vm1358, %v1369, %v1371
    %v1373 = vshll.u32 %v1333, 8
    %v1374 = vand.u32 %v1373, 65535
    %v1375 = vshrl.u32 %v1373, 16
    %v1376 = vand.u32 %v1372, 65535
    %v1377 = vshrl.u32 %v1372, 16
    %v1378 = vmul.u32 %v1374, %v1376
    %v1379 = vmul.u32 %v1374, %v1377
    %v1380 = vmul.u32 %v1375, %v1376
    %v1381 = vmul.u32 %v1375, %v1377
    %v1382 = vshll.u32 %v1379, 16
    %v1383 = vshrl.u32 %v1379, 16
    %v1384 = vshll.u32 %v1380, 16
    %v1385 = vshrl.u32 %v1380, 16
    %vm1386 = vc.u32 %v1378, %v1382
    %v1387 = vsel %vm1386, 1, 0
    %v1388 = vadd.s32 %v1378, %v1382
    %v1389 = vadd.s32 %v1381, %v1387
    %vm1390 = vc.u32 %v1388, %v1384
    %v1391 = vsel %vm1390, 1, 0
    %v1392 = vadd.s32 %v1388, %v1384
    %v1393 = vadd.s32 %v1389, %v1391
    %v1394 = vadd.s32 %v1393, %v1383
    %v1395 = vadd.s32 %v1394, %v1385
    %v1396 = vand.u32 %v1373, 65535
    %v1397 = vshrl.u32 %v1373, 16
    %v1398 = vand.u32 %v1368, 65535
    %v1399 = vshrl.u32 %v1368, 16
    %v1400 = vmul.u32 %v1396, %v1398
    %v1401 = vmul.u32 %v1396, %v1399
    %v1402 = vmul.u32 %v1397, %v1398
    %v1403 = vmul.u32 %v1397, %v1399
    %v1404 = vshll.u32 %v1401, 16
    %v1405 = vshrl.u32 %v1401, 16
    %v1406 = vshll.u32 %v1402, 16
    %v1407 = vshrl.u32 %v1402, 16
    %vm1408 = vc.u32 %v1400, %v1404
    %v1409 = vsel %vm1408, 1, 0
    %v1410 = vadd.s32 %v1400, %v1404
    %v1411 = vadd.s32 %v1403, %v1409
    %vm1412 = vc.u32 %v1410, %v1406
    %v1413 = vsel %vm1412, 1, 0
    %v1414 = vadd.s32 %v1410, %v1406
    %v1415 = vadd.s32 %v1411, %v1413
    %v1416 = vadd.s32 %v1415, %v1405
    %v1417 = vadd.s32 %v1416, %v1407
    %v1418 = vmul.u32 %v1373, %v1364
    %v1419 = vadd.s32 %v1395, %v1414
    %vm1420 = vc.u32 %v1395, %v1414
    %v1421 = vadd.s32 %v1417, 1
    %v1422 = vsel %vm1420, %v1421, %v1417
    %v1423 = vadd.s32 %v1418, %v1422
    %v1424 = vadd.s32 %v1423, 536870912
    %v1425 = vshrl.u32 %v1424, 30
    %v1426 = vshll.u32 %v1425, 30
    %v1427 = vsub.s32 %v1423, %v1426
    %vm1428 = vcmp.lt.s32.totalorder %v1427, 0
    %v1429 = vsub.s32 0, %v1427
    %v1430 = vsel %vm1428, %v1429, %v1427
    %v1431 = vclz %v1430
    %v1432 = vsub.s32 %v1431, 2
    %vm1433 = vcmp.gt.s32.totalorder 0, %v1432
    %v1434 = vsel %vm1433, 0, %v1432
    %v1435 = vsub.s32 32, %v1434
    %v1436 = vshll.u32 %v1427, %v1434
    %v1437 = vshrl.u32 %v1419, %v1435
    %v1438 = vor.u32 %v1436, %v1437
    %v1439 = vsub.s32 4294967266, %v1434
    %v1440 = vadd.s32 %v1439, 127
    %v1441 = vshll.u32 %v1440, 23
    %v1442 = vor.u32 4788187, %v1441
    %v1443 = vand.u32 2147483647, %v1442
    %v1445 = vcvt.s32.f32 %v1438
    %v1446 = vmul.f32 %v1445, %v1443
    %v1447 = vxor.u32 %v1446, 2147483648
    %v1448 = vsel %vm1327, %v1447, %v1446
    %v1449 = vsub.s32 4, %v1425
    %v1450 = vsel %vm1327, %v1449, %v1425
    %v1451 = vsel %vm1326, %v1317, %v1448
    %v1452 = vsel %vm1326, 0, %v1450
    %v1453 = vmul.f32 %v1451, %v1451
    %v1454 = vmul.f32 %v1453, -0.001358992
    %v1455 = vadd.f32 %v1454, 0.041655596
    %v1456 = vmul.f32 %v1453, %v1455
    %v1457 = vadd.f32 %v1456, -0.4999988
    %v1458 = vmul.f32 %v1453, %v1457
    %v1459 = vadd.f32 1.0, %v1458
    %v1460 = vmul.f32 %v1451, %v1451
    %v1461 = vmul.f32 %v1460, -0.00019511016
    %v1462 = vadd.f32 %v1461, 0.008332121
    %v1463 = vmul.f32 %v1460, %v1462
    %v1464 = vadd.f32 %v1463, -0.16666654
    %v1465 = vmul.f32 %v1460, %v1464
    %v1466 = vadd.f32 %v1465, 1.0
    %v1467 = vmul.f32 %v1466, %v1451
    %vm1468 = vweird.f32 %v1317
    %v1469 = vand.u32 %v1452, 3
    %vm1470 = vcmp.lt.s32.totalorder %v1469, 2
    %vm1471 = vcmp.eq.s32.totalorder %v1469, 0
    %v1472 = vxor.u32 %v1467, 2147483648
    %v1473 = vsel %vm1471, %v1459, %v1472
    %vm1474 = vcmp.eq.s32.totalorder %v1469, 2
    %v1475 = vxor.u32 %v1459, 2147483648
    %v1476 = vsel %vm1474, %v1475, %v1467
    %v1477 = vsel %vm1470, %v1473, %v1476
    %v1478 = vsel %vm1468, nan, %v1477
    %v1479 = vand.u32 2147483647, %v1318
    %vm1480 = vcmp.le.f32.partialorder %v1479, 0.7853982
    %vm1481 = vcmp.lt.s32.totalorder %v1318, 0
    %v1482 = vand.u32 %v1318, 2139095040
    %v1483 = vshrl.u32 %v1482, 23
    %v1484 = vsub.s32 %v1483, 127
    %v1485 = vand.u32 2147483647, %v1318
    %v1486 = vand.u32 %v1485, 8388607
    %v1487 = vor.u32 %v1486, 8388608
    %v1488 = vsub.s32 0, %v1487
    %v1489 = vadd.s32 %v1484, 1
    %vm1490 = vcmp.gt.s32.totalorder %v1489, 0
    %v1491 = vsel %vm1490, %v1489, 0
    %v1492 = vshrl.u32 %v1491, 5
    %v1493 = vand.u32 %v1491, 31
    %v1494 = vsub.s32 32, %v1493
    %v1495 = vshrl.u32 683565275, %v1494
    %v1496 = vshll.u32 683565275, %v1493
    %v1497 = vshrl.u32 2475754826, %v1494
    %v1498 = vor.u32 %v1496, %v1497
    %v1499 = vshll.u32 2475754826, %v1493
    %v1500 = vshrl.u32 2131351028, %v1494
    %v1501 = vor.u32 %v1499, %v1500
    %v1502 = vshll.u32 2131351028, %v1493
    %v1503 = vshrl.u32 2102212464, %v1494
    %v1504 = vor.u32 %v1502, %v1503
    %v1505 = vshll.u32 2102212464, %v1493
    %v1506 = vshrl.u32 920167782, %v1494
    %v1507 = vor.u32 %v1505, %v1506
    %v1508 = vshll.u32 920167782, %v1493
    %v1509 = vshrl.u32 1326507024, %v1494
    %v1510 = vor.u32 %v1508, %v1509
    %vm1511 = vcmp.lt.s32.totalorder %v1492, 1
    %vm1512 = vcmp.lt.s32.totalorder %v1492, 2
    %vm1513 = vcmp.lt.s32.totalorder %v1492, 3
    %vm1514 = vcmp.lt.s32.totalorder %v1492, 4
    %v1515 = vsel %vm1511, %v1495, %v1498
    %v1516 = vsel %vm1514, %v1504, 2102212464
    %v1517 = vsel %vm1513, %v1501, %v1516
    %v1518 = vsel %vm1512, %v1515, %v1517
    %v1519 = vsel %vm1511, %v1498, %v1501
    %v1520 = vsel %vm1514, %v1507, 920167782
    %v1521 = vsel %vm1513, %v1504, %v1520
    %v1522 = vsel %vm1512, %v1519, %v1521
    %v1523 = vsel %vm1511, %v1501, %v1504
    %v1524 = vsel %vm1514, %v1510, 1326507024
    %v1525 = vsel %vm1513, %v1507, %v1524
    %v1526 = vsel %vm1512, %v1523, %v1525
    %v1527 = vshll.u32 %v1487, 8
    %v1528 = vand.u32 %v1527, 65535
    %v1529 = vshrl.u32 %v1527, 16
    %v1530 = vand.u32 %v1526, 65535
    %v1531 = vshrl.u32 %v1526, 16
    %v1532 = vmul.u32 %v1528, %v1530
    %v1533 = vmul.u32 %v1528, %v1531
    %v1534 = vmul.u32 %v1529, %v1530
    %v1535 = vmul.u32 %v1529, %v1531
    %v1536 = vshll.u32 %v1533, 16
    %v1537 = vshrl.u32 %v1533, 16
    %v1538 = vshll.u32 %v1534, 16
    %v1539 = vshrl.u32 %v1534, 16
    %vm1540 = vc.u32 %v1532, %v1536
    %v1541 = vsel %vm1540, 1, 0
    %v1542 = vadd.s32 %v1532, %v1536
    %v1543 = vadd.s32 %v1535, %v1541
    %vm1544 = vc.u32 %v1542, %v1538
    %v1545 = vsel %vm1544, 1, 0
    %v1546 = vadd.s32 %v1542, %v1538
    %v1547 = vadd.s32 %v1543, %v1545
    %v1548 = vadd.s32 %v1547, %v1537
    %v1549 = vadd.s32 %v1548, %v1539
    %v1550 = vand.u32 %v1527, 65535
    %v1551 = vshrl.u32 %v1527, 16
    %v1552 = vand.u32 %v1522, 65535
    %v1553 = vshrl.u32 %v1522, 16
    %v1554 = vmul.u32 %v1550, %v1552
    %v1555 = vmul.u32 %v1550, %v1553
    %v1556 = vmul.u32 %v1551, %v1552
    %v1557 = vmul.u32 %v1551, %v1553
    %v1558 = vshll.u32 %v1555, 16
    %v1559 = vshrl.u32 %v1555, 16
    %v1560 = vshll.u32 %v1556, 16
    %v1561 = vshrl.u32 %v1556, 16
    %vm1562 = vc.u32 %v1554, %v1558
    %v1563 = vsel %vm1562, 1, 0
    %v1564 = vadd.s32 %v1554, %v1558
    %v1565 = vadd.s32 %v1557, %v1563
    %vm1566 = vc.u32 %v1564, %v1560
    %v1567 = vsel %vm1566, 1, 0
    %v1568 = vadd.s32 %v1564, %v1560
    %v1569 = vadd.s32 %v1565, %v1567
    %v1570 = vadd.s32 %v1569, %v1559
    %v1571 = vadd.s32 %v1570, %v1561
    %v1572 = vmul.u32 %v1527, %v1518
    %v1573 = vadd.s32 %v1549, %v1568
    %vm1574 = vc.u32 %v1549, %v1568
    %v1575 = vadd.s32 %v1571, 1
    %v1576 = vsel %vm1574, %v1575, %v1571
    %v1577 = vadd.s32 %v1572, %v1576
    %v1578 = vadd.s32 %v1577, 536870912
    %v1579 = vshrl.u32 %v1578, 30
    %v1580 = vshll.u32 %v1579, 30
    %v1581 = vsub.s32 %v1577, %v1580
    %vm1582 = vcmp.lt.s32.totalorder %v1581, 0
    %v1583 = vsub.s32 0, %v1581
    %v1584 = vsel %vm1582, %v1583, %v1581
    %v1585 = vclz %v1584
    %v1586 = vsub.s32 %v1585, 2
    %vm1587 = vcmp.gt.s32.totalorder 0, %v1586
    %v1588 = vsel %vm1587, 0, %v1586
    %v1589 = vsub.s32 32, %v1588
    %v1590 = vshll.u32 %v1581, %v1588
    %v1591 = vshrl.u32 %v1573, %v1589
    %v1592 = vor.u32 %v1590, %v1591
    %v1593 = vsub.s32 4294967266, %v1588
    %v1594 = vadd.s32 %v1593, 127
    %v1595 = vshll.u32 %v1594, 23
    %v1596 = vor.u32 4788187, %v1595
    %v1597 = vand.u32 2147483647, %v1596
    %v1599 = vcvt.s32.f32 %v1592
    %v1600 = vmul.f32 %v1599, %v1597
    %v1601 = vxor.u32 %v1600, 2147483648
    %v1602 = vsel %vm1481, %v1601, %v1600
    %v1603 = vsub.s32 4, %v1579
    %v1604 = vsel %vm1481, %v1603, %v1579
    %v1605 = vsel %vm1480, %v1318, %v1602
    %v1606 = vsel %vm1480, 0, %v1604
    %v1607 = vmul.f32 %v1605, %v1605
    %v1608 = vmul.f32 %v1607, -0.001358992
    %v1609 = vadd.f32 %v1608, 0.041655596
    %v1610 = vmul.f32 %v1607, %v1609
    %v1611 = vadd.f32 %v1610, -0.4999988
    %v1612 = vmul.f32 %v1607, %v1611
    %v1613 = vadd.f32 1.0, %v1612
    %v1614 = vmul.f32 %v1605, %v1605
    %v1615 = vmul.f32 %v1614, -0.00019511016
    %v1616 = vadd.f32 %v1615, 0.008332121
    %v1617 = vmul.f32 %v1614, %v1616
    %v1618 = vadd.f32 %v1617, -0.16666654
    %v1619 = vmul.f32 %v1614, %v1618
    %v1620 = vadd.f32 %v1619, 1.0
    %v1621 = vmul.f32 %v1620, %v1605
    %vm1622 = vweird.f32 %v1318
    %v1623 = vand.u32 %v1606, 3
    %vm1624 = vcmp.lt.s32.totalorder %v1623, 2
    %vm1625 = vcmp.eq.s32.totalorder %v1623, 0
    %v1626 = vxor.u32 %v1621, 2147483648
    %v1627 = vsel %vm1625, %v1613, %v1626
    %vm1628 = vcmp.eq.s32.totalorder %v1623, 2
    %v1629 = vxor.u32 %v1613, 2147483648
    %v1630 = vsel %vm1628, %v1629, %v1621
    %v1631 = vsel %vm1624, %v1627, %v1630
    %v1632 = vsel %vm1622, nan, %v1631
    %v1633 = vand.u32 2147483647, %v1319
    %vm1634 = vcmp.le.f32.partialorder %v1633, 0.7853982
    %vm1635 = vcmp.lt.s32.totalorder %v1319, 0
    %v1636 = vand.u32 %v1319, 2139095040
    %v1637 = vshrl.u32 %v1636, 23
    %v1638 = vsub.s32 %v1637, 127
    %v1639 = vand.u32 2147483647, %v1319
    %v1640 = vand.u32 %v1639, 8388607
    %v1641 = vor.u32 %v1640, 8388608
    %v1642 = vsub.s32 0, %v1641
    %v1643 = vadd.s32 %v1638, 1
    %vm1644 = vcmp.gt.s32.totalorder %v1643, 0
    %v1645 = vsel %vm1644, %v1643, 0
    %v1646 = vshrl.u32 %v1645, 5
    %v1647 = vand.u32 %v1645, 31
    %v1648 = vsub.s32 32, %v1647
    %v1649 = vshrl.u32 683565275, %v1648
    %v1650 = vshll.u32 683565275, %v1647
    %v1651 = vshrl.u32 2475754826, %v1648
    %v1652 = vor.u32 %v1650, %v1651
    %v1653 = vshll.u32 2475754826, %v1647
    %v1654 = vshrl.u32 2131351028, %v1648
    %v1655 = vor.u32 %v1653, %v1654
    %v1656 = vshll.u32 2131351028, %v1647
    %v1657 = vshrl.u32 2102212464, %v1648
    %v1658 = vor.u32 %v1656, %v1657
    %v1659 = vshll.u32 2102212464, %v1647
    %v1660 = vshrl.u32 920167782, %v1648
    %v1661 = vor.u32 %v1659, %v1660
    %v1662 = vshll.u32 920167782, %v1647
    %v1663 = vshrl.u32 1326507024, %v1648
    %v1664 = vor.u32 %v1662, %v1663
    %vm1665 = vcmp.lt.s32.totalorder %v1646, 1
    %vm1666 = vcmp.lt.s32.totalorder %v1646, 2
    %vm1667 = vcmp.lt.s32.totalorder %v1646, 3
    %vm1668 = vcmp.lt.s32.totalorder %v1646, 4
    %v1669 = vsel %vm1665, %v1649, %v1652
    %v1670 = vsel %vm1668, %v1658, 2102212464
    %v1671 = vsel %vm1667, %v1655, %v1670
    %v1672 = vsel %vm1666, %v1669, %v1671
    %v1673 = vsel %vm1665, %v1652, %v1655
    %v1674 = vsel %vm1668, %v1661, 920167782
    %v1675 = vsel %vm1667, %v1658, %v1674
    %v1676 = vsel %vm1666, %v1673, %v1675
    %v1677 = vsel %vm1665, %v1655, %v1658
    %v1678 = vsel %vm1668, %v1664, 1326507024
    %v1679 = vsel %vm1667, %v1661, %v1678
    %v1680 = vsel %vm1666, %v1677, %v1679
    %v1681 = vshll.u32 %v1641, 8
    %v1682 = vand.u32 %v1681, 65535
    %v1683 = vshrl.u32 %v1681, 16
    %v1684 = vand.u32 %v1680, 65535
    %v1685 = vshrl.u32 %v1680, 16
    %v1686 = vmul.u32 %v1682, %v1684
    %v1687 = vmul.u32 %v1682, %v1685
    %v1688 = vmul.u32 %v1683, %v1684
    %v1689 = vmul.u32 %v1683, %v1685
    %v1690 = vshll.u32 %v1687, 16
    %v1691 = vshrl.u32 %v1687, 16
    %v1692 = vshll.u32 %v1688, 16
    %v1693 = vshrl.u32 %v1688, 16
    %vm1694 = vc.u32 %v1686, %v1690
    %v1695 = vsel %vm1694, 1, 0
    %v1696 = vadd.s32 %v1686, %v1690
    %v1697 = vadd.s32 %v1689, %v1695
    %vm1698 = vc.u32 %v1696, %v1692
    %v1699 = vsel %vm1698, 1, 0
    %v1700 = vadd.s32 %v1696, %v1692
    %v1701 = vadd.s32 %v1697, %v1699
    %v1702 = vadd.s32 %v1701, %v1691
    %v1703 = vadd.s32 %v1702, %v1693
    %v1704 = vand.u32 %v1681, 65535
    %v1705 = vshrl.u32 %v1681, 16
    %v1706 = vand.u32 %v1676, 65535
    %v1707 = vshrl.u32 %v1676, 16
    %v1708 = vmul.u32 %v1704, %v1706
    %v1709 = vmul.u32 %v1704, %v1707
    %v1710 = vmul.u32 %v1705, %v1706
    %v1711 = vmul.u32 %v1705, %v1707
    %v1712 = vshll.u32 %v1709, 16
    %v1713 = vshrl.u32 %v1709, 16
    %v1714 = vshll.u32 %v1710, 16
    %v1715 = vshrl.u32 %v1710, 16
    %vm1716 = vc.u32 %v1708, %v1712
    %v1717 = vsel %vm1716, 1, 0
    %v1718 = vadd.s32 %v1708, %v1712
    %v1719 = vadd.s32 %v1711, %v1717
    %vm1720 = vc.u32 %v1718, %v1714
    %v1721 = vsel %vm1720, 1, 0
    %v1722 = vadd.s32 %v1718, %v1714
    %v1723 = vadd.s32 %v1719, %v1721
    %v1724 = vadd.s32 %v1723, %v1713
    %v1725 = vadd.s32 %v1724, %v1715
    %v1726 = vmul.u32 %v1681, %v1672
    %v1727 = vadd.s32 %v1703, %v1722
    %vm1728 = vc.u32 %v1703, %v1722
    %v1729 = vadd.s32 %v1725, 1
    %v1730 = vsel %vm1728, %v1729, %v1725
    %v1731 = vadd.s32 %v1726, %v1730
    %v1732 = vadd.s32 %v1731, 536870912
    %v1733 = vshrl.u32 %v1732, 30
    %v1734 = vshll.u32 %v1733, 30
    %v1735 = vsub.s32 %v1731, %v1734
    %vm1736 = vcmp.lt.s32.totalorder %v1735, 0
    %v1737 = vsub.s32 0, %v1735
    %v1738 = vsel %vm1736, %v1737, %v1735
    %v1739 = vclz %v1738
    %v1740 = vsub.s32 %v1739, 2
    %vm1741 = vcmp.gt.s32.totalorder 0, %v1740
    %v1742 = vsel %vm1741, 0, %v1740
    %v1743 = vsub.s32 32, %v1742
    %v1744 = vshll.u32 %v1735, %v1742
    %v1745 = vshrl.u32 %v1727, %v1743
    %v1746 = vor.u32 %v1744, %v1745
    %v1747 = vsub.s32 4294967266, %v1742
    %v1748 = vadd.s32 %v1747, 127
    %v1749 = vshll.u32 %v1748, 23
    %v1750 = vor.u32 4788187, %v1749
    %v1751 = vand.u32 2147483647, %v1750
    %v1753 = vcvt.s32.f32 %v1746
    %v1754 = vmul.f32 %v1753, %v1751
    %v1755 = vxor.u32 %v1754, 2147483648
    %v1756 = vsel %vm1635, %v1755, %v1754
    %v1757 = vsub.s32 4, %v1733
    %v1758 = vsel %vm1635, %v1757, %v1733
    %v1759 = vsel %vm1634, %v1319, %v1756
    %v1760 = vsel %vm1634, 0, %v1758
    %v1761 = vmul.f32 %v1759, %v1759
    %v1762 = vmul.f32 %v1761, -0.001358992
    %v1763 = vadd.f32 %v1762, 0.041655596
    %v1764 = vmul.f32 %v1761, %v1763
    %v1765 = vadd.f32 %v1764, -0.4999988
    %v1766 = vmul.f32 %v1761, %v1765
    %v1767 = vadd.f32 1.0, %v1766
    %v1768 = vmul.f32 %v1759, %v1759
    %v1769 = vmul.f32 %v1768, -0.00019511016
    %v1770 = vadd.f32 %v1769, 0.008332121
    %v1771 = vmul.f32 %v1768, %v1770
    %v1772 = vadd.f32 %v1771, -0.16666654
    %v1773 = vmul.f32 %v1768, %v1772
    %v1774 = vadd.f32 %v1773, 1.0
    %v1775 = vmul.f32 %v1774, %v1759
    %vm1776 = vweird.f32 %v1319
    %v1777 = vand.u32 %v1760, 3
    %vm1778 = vcmp.lt.s32.totalorder %v1777, 2
    %vm1779 = vcmp.eq.s32.totalorder %v1777, 0
    %v1780 = vxor.u32 %v1775, 2147483648
    %v1781 = vsel %vm1779, %v1767, %v1780
    %vm1782 = vcmp.eq.s32.totalorder %v1777, 2
    %v1783 = vxor.u32 %v1767, 2147483648
    %v1784 = vsel %vm1782, %v1783, %v1775
    %v1785 = vsel %vm1778, %v1781, %v1784
    %v1786 = vsel %vm1776, nan, %v1785
    %v1787 = vand.u32 2147483647, %v1320
    %vm1788 = vcmp.le.f32.partialorder %v1787, 0.7853982
    %vm1789 = vcmp.lt.s32.totalorder %v1320, 0
    %v1790 = vand.u32 %v1320, 2139095040
    %v1791 = vshrl.u32 %v1790, 23
    %v1792 = vsub.s32 %v1791, 127
    %v1793 = vand.u32 2147483647, %v1320
    %v1794 = vand.u32 %v1793, 8388607
    %v1795 = vor.u32 %v1794, 8388608
    %v1796 = vsub.s32 0, %v1795
    %v1797 = vadd.s32 %v1792, 1
    %vm1798 = vcmp.gt.s32.totalorder %v1797, 0
    %v1799 = vsel %vm1798, %v1797, 0
    %v1800 = vshrl.u32 %v1799, 5
    %v1801 = vand.u32 %v1799, 31
    %v1802 = vsub.s32 32, %v1801
    %v1803 = vshrl.u32 683565275, %v1802
    %v1804 = vshll.u32 683565275, %v1801
    %v1805 = vshrl.u32 2475754826, %v1802
    %v1806 = vor.u32 %v1804, %v1805
    %v1807 = vshll.u32 2475754826, %v1801
    %v1808 = vshrl.u32 2131351028, %v1802
    %v1809 = vor.u32 %v1807, %v1808
    %v1810 = vshll.u32 2131351028, %v1801
    %v1811 = vshrl.u32 2102212464, %v1802
    %v1812 = vor.u32 %v1810, %v1811
    %v1813 = vshll.u32 2102212464, %v1801
    %v1814 = vshrl.u32 920167782, %v1802
    %v1815 = vor.u32 %v1813, %v1814
    %v1816 = vshll.u32 920167782, %v1801
    %v1817 = vshrl.u32 1326507024, %v1802
    %v1818 = vor.u32 %v1816, %v1817
    %vm1819 = vcmp.lt.s32.totalorder %v1800, 1
    %vm1820 = vcmp.lt.s32.totalorder %v1800, 2
    %vm1821 = vcmp.lt.s32.totalorder %v1800, 3
    %vm1822 = vcmp.lt.s32.totalorder %v1800, 4
    %v1823 = vsel %vm1819, %v1803, %v1806
    %v1824 = vsel %vm1822, %v1812, 2102212464
    %v1825 = vsel %vm1821, %v1809, %v1824
    %v1826 = vsel %vm1820, %v1823, %v1825
    %v1827 = vsel %vm1819, %v1806, %v1809
    %v1828 = vsel %vm1822, %v1815, 920167782
    %v1829 = vsel %vm1821, %v1812, %v1828
    %v1830 = vsel %vm1820, %v1827, %v1829
    %v1831 = vsel %vm1819, %v1809, %v1812
    %v1832 = vsel %vm1822, %v1818, 1326507024
    %v1833 = vsel %vm1821, %v1815, %v1832
    %v1834 = vsel %vm1820, %v1831, %v1833
    %v1835 = vshll.u32 %v1795, 8
    %v1836 = vand.u32 %v1835, 65535
    %v1837 = vshrl.u32 %v1835, 16
    %v1838 = vand.u32 %v1834, 65535
    %v1839 = vshrl.u32 %v1834, 16
    %v1840 = vmul.u32 %v1836, %v1838
    %v1841 = vmul.u32 %v1836, %v1839
    %v1842 = vmul.u32 %v1837, %v1838
    %v1843 = vmul.u32 %v1837, %v1839
    %v1844 = vshll.u32 %v1841, 16
    %v1845 = vshrl.u32 %v1841, 16
    %v1846 = vshll.u32 %v1842, 16
    %v1847 = vshrl.u32 %v1842, 16
    %vm1848 = vc.u32 %v1840, %v1844
    %v1849 = vsel %vm1848, 1, 0
    %v1850 = vadd.s32 %v1840, %v1844
    %v1851 = vadd.s32 %v1843, %v1849
    %vm1852 = vc.u32 %v1850, %v1846
    %v1853 = vsel %vm1852, 1, 0
    %v1854 = vadd.s32 %v1850, %v1846
    %v1855 = vadd.s32 %v1851, %v1853
    %v1856 = vadd.s32 %v1855, %v1845
    %v1857 = vadd.s32 %v1856, %v1847
    %v1858 = vand.u32 %v1835, 65535
    %v1859 = vshrl.u32 %v1835, 16
    %v1860 = vand.u32 %v1830, 65535
    %v1861 = vshrl.u32 %v1830, 16
    %v1862 = vmul.u32 %v1858, %v1860
    %v1863 = vmul.u32 %v1858, %v1861
    %v1864 = vmul.u32 %v1859, %v1860
    %v1865 = vmul.u32 %v1859, %v1861
    %v1866 = vshll.u32 %v1863, 16
    %v1867 = vshrl.u32 %v1863, 16
    %v1868 = vshll.u32 %v1864, 16
    %v1869 = vshrl.u32 %v1864, 16
    %vm1870 = vc.u32 %v1862, %v1866
    %v1871 = vsel %vm1870, 1, 0
    %v1872 = vadd.s32 %v1862, %v1866
    %v1873 = vadd.s32 %v1865, %v1871
    %vm1874 = vc.u32 %v1872, %v1868
    %v1875 = vsel %vm1874, 1, 0
    %v1876 = vadd.s32 %v1872, %v1868
    %v1877 = vadd.s32 %v1873, %v1875
    %v1878 = vadd.s32 %v1877, %v1867
    %v1879 = vadd.s32 %v1878, %v1869
    %v1880 = vmul.u32 %v1835, %v1826
    %v1881 = vadd.s32 %v1857, %v1876
    %vm1882 = vc.u32 %v1857, %v1876
    %v1883 = vadd.s32 %v1879, 1
    %v1884 = vsel %vm1882, %v1883, %v1879
    %v1885 = vadd.s32 %v1880, %v1884
    %v1886 = vadd.s32 %v1885, 536870912
    %v1887 = vshrl.u32 %v1886, 30
    %v1888 = vshll.u32 %v1887, 30
    %v1889 = vsub.s32 %v1885, %v1888
    %vm1890 = vcmp.lt.s32.totalorder %v1889, 0
    %v1891 = vsub.s32 0, %v1889
    %v1892 = vsel %vm1890, %v1891, %v1889
    %v1893 = vclz %v1892
    %v1894 = vsub.s32 %v1893, 2
    %vm1895 = vcmp.gt.s32.totalorder 0, %v1894
    %v1896 = vsel %vm1895, 0, %v1894
    %v1897 = vsub.s32 32, %v1896
    %v1898 = vshll.u32 %v1889, %v1896
    %v1899 = vshrl.u32 %v1881, %v1897
    %v1900 = vor.u32 %v1898, %v1899
    %v1901 = vsub.s32 4294967266, %v1896
    %v1902 = vadd.s32 %v1901, 127
    %v1903 = vshll.u32 %v1902, 23
    %v1904 = vor.u32 4788187, %v1903
    %v1905 = vand.u32 2147483647, %v1904
    %v1907 = vcvt.s32.f32 %v1900
    %v1908 = vmul.f32 %v1907, %v1905
    %v1909 = vxor.u32 %v1908, 2147483648
    %v1910 = vsel %vm1789, %v1909, %v1908
    %v1911 = vsub.s32 4, %v1887
    %v1912 = vsel %vm1789, %v1911, %v1887
    %v1913 = vsel %vm1788, %v1320, %v1910
    %v1914 = vsel %vm1788, 0, %v1912
    %v1915 = vmul.f32 %v1913, %v1913
    %v1916 = vmul.f32 %v1915, -0.001358992
    %v1917 = vadd.f32 %v1916, 0.041655596
    %v1918 = vmul.f32 %v1915, %v1917
    %v1919 = vadd.f32 %v1918, -0.4999988
    %v1920 = vmul.f32 %v1915, %v1919
    %v1921 = vadd.f32 1.0, %v1920
    %v1922 = vmul.f32 %v1913, %v1913
    %v1923 = vmul.f32 %v1922, -0.00019511016
    %v1924 = vadd.f32 %v1923, 0.008332121
    %v1925 = vmul.f32 %v1922, %v1924
    %v1926 = vadd.f32 %v1925, -0.16666654
    %v1927 = vmul.f32 %v1922, %v1926
    %v1928 = vadd.f32 %v1927, 1.0
    %v1929 = vmul.f32 %v1928, %v1913
    %vm1930 = vweird.f32 %v1320
    %v1931 = vand.u32 %v1914, 3
    %vm1932 = vcmp.lt.s32.totalorder %v1931, 2
    %vm1933 = vcmp.eq.s32.totalorder %v1931, 0
    %v1934 = vxor.u32 %v1929, 2147483648
    %v1935 = vsel %vm1933, %v1921, %v1934
    %vm1936 = vcmp.eq.s32.totalorder %v1931, 2
    %v1937 = vxor.u32 %v1921, 2147483648
    %v1938 = vsel %vm1936, %v1937, %v1929
    %v1939 = vsel %vm1932, %v1935, %v1938
    %v1940 = vsel %vm1930, nan, %v1939
    %v1941 = vand.u32 2147483647, %v1321
    %vm1942 = vcmp.le.f32.partialorder %v1941, 0.7853982
    %vm1943 = vcmp.lt.s32.totalorder %v1321, 0
    %v1944 = vand.u32 %v1321, 2139095040
    %v1945 = vshrl.u32 %v1944, 23
    %v1946 = vsub.s32 %v1945, 127
    %v1947 = vand.u32 2147483647, %v1321
    %v1948 = vand.u32 %v1947, 8388607
    %v1949 = vor.u32 %v1948, 8388608
    %v1950 = vsub.s32 0, %v1949
    %v1951 = vadd.s32 %v1946, 1
    %vm1952 = vcmp.gt.s32.totalorder %v1951, 0
    %v1953 = vsel %vm1952, %v1951, 0
    %v1954 = vshrl.u32 %v1953, 5
    %v1955 = vand.u32 %v1953, 31
    %v1956 = vsub.s32 32, %v1955
    %v1957 = vshrl.u32 683565275, %v1956
    %v1958 = vshll.u32 683565275, %v1955
    %v1959 = vshrl.u32 2475754826, %v1956
    %v1960 = vor.u32 %v1958, %v1959
    %v1961 = vshll.u32 2475754826, %v1955
    %v1962 = vshrl.u32 2131351028, %v1956
    %v1963 = vor.u32 %v1961, %v1962
    %v1964 = vshll.u32 2131351028, %v1955
    %v1965 = vshrl.u32 2102212464, %v1956
    %v1966 = vor.u32 %v1964, %v1965
    %v1967 = vshll.u32 2102212464, %v1955
    %v1968 = vshrl.u32 920167782, %v1956
    %v1969 = vor.u32 %v1967, %v1968
    %v1970 = vshll.u32 920167782, %v1955
    %v1971 = vshrl.u32 1326507024, %v1956
    %v1972 = vor.u32 %v1970, %v1971
    %vm1973 = vcmp.lt.s32.totalorder %v1954, 1
    %vm1974 = vcmp.lt.s32.totalorder %v1954, 2
    %vm1975 = vcmp.lt.s32.totalorder %v1954, 3
    %vm1976 = vcmp.lt.s32.totalorder %v1954, 4
    %v1977 = vsel %vm1973, %v1957, %v1960
    %v1978 = vsel %vm1976, %v1966, 2102212464
    %v1979 = vsel %vm1975, %v1963, %v1978
    %v1980 = vsel %vm1974, %v1977, %v1979
    %v1981 = vsel %vm1973, %v1960, %v1963
    %v1982 = vsel %vm1976, %v1969, 920167782
    %v1983 = vsel %vm1975, %v1966, %v1982
    %v1984 = vsel %vm1974, %v1981, %v1983
    %v1985 = vsel %vm1973, %v1963, %v1966
    %v1986 = vsel %vm1976, %v1972, 1326507024
    %v1987 = vsel %vm1975, %v1969, %v1986
    %v1988 = vsel %vm1974, %v1985, %v1987
    %v1989 = vshll.u32 %v1949, 8
    %v1990 = vand.u32 %v1989, 65535
    %v1991 = vshrl.u32 %v1989, 16
    %v1992 = vand.u32 %v1988, 65535
    %v1993 = vshrl.u32 %v1988, 16
    %v1994 = vmul.u32 %v1990, %v1992
    %v1995 = vmul.u32 %v1990, %v1993
    %v1996 = vmul.u32 %v1991, %v1992
    %v1997 = vmul.u32 %v1991, %v1993
    %v1998 = vshll.u32 %v1995, 16
    %v1999 = vshrl.u32 %v1995, 16
    %v2000 = vshll.u32 %v1996, 16
    %v2001 = vshrl.u32 %v1996, 16
    %vm2002 = vc.u32 %v1994, %v1998
    %v2003 = vsel %vm2002, 1, 0
    %v2004 = vadd.s32 %v1994, %v1998
    %v2005 = vadd.s32 %v1997, %v2003
    %vm2006 = vc.u32 %v2004, %v2000
    %v2007 = vsel %vm2006, 1, 0
    %v2008 = vadd.s32 %v2004, %v2000
    %v2009 = vadd.s32 %v2005, %v2007
    %v2010 = vadd.s32 %v2009, %v1999
    %v2011 = vadd.s32 %v2010, %v2001
    %v2012 = vand.u32 %v1989, 65535
    %v2013 = vshrl.u32 %v1989, 16
    %v2014 = vand.u32 %v1984, 65535
    %v2015 = vshrl.u32 %v1984, 16
    %v2016 = vmul.u32 %v2012, %v2014
    %v2017 = vmul.u32 %v2012, %v2015
    %v2018 = vmul.u32 %v2013, %v2014
    %v2019 = vmul.u32 %v2013, %v2015
    %v2020 = vshll.u32 %v2017, 16
    %v2021 = vshrl.u32 %v2017, 16
    %v2022 = vshll.u32 %v2018, 16
    %v2023 = vshrl.u32 %v2018, 16
    %vm2024 = vc.u32 %v2016, %v2020
    %v2025 = vsel %vm2024, 1, 0
    %v2026 = vadd.s32 %v2016, %v2020
    %v2027 = vadd.s32 %v2019, %v2025
    %vm2028 = vc.u32 %v2026, %v2022
    %v2029 = vsel %vm2028, 1, 0
    %v2030 = vadd.s32 %v2026, %v2022
    %v2031 = vadd.s32 %v2027, %v2029
    %v2032 = vadd.s32 %v2031, %v2021
    %v2033 = vadd.s32 %v2032, %v2023
    %v2034 = vmul.u32 %v1989, %v1980
    %v2035 = vadd.s32 %v2011, %v2030
    %vm2036 = vc.u32 %v2011, %v2030
    %v2037 = vadd.s32 %v2033, 1
    %v2038 = vsel %vm2036, %v2037, %v2033
    %v2039 = vadd.s32 %v2034, %v2038
    %v2040 = vadd.s32 %v2039, 536870912
    %v2041 = vshrl.u32 %v2040, 30
    %v2042 = vshll.u32 %v2041, 30
    %v2043 = vsub.s32 %v2039, %v2042
    %vm2044 = vcmp.lt.s32.totalorder %v2043, 0
    %v2045 = vsub.s32 0, %v2043
    %v2046 = vsel %vm2044, %v2045, %v2043
    %v2047 = vclz %v2046
    %v2048 = vsub.s32 %v2047, 2
    %vm2049 = vcmp.gt.s32.totalorder 0, %v2048
    %v2050 = vsel %vm2049, 0, %v2048
    %v2051 = vsub.s32 32, %v2050
    %v2052 = vshll.u32 %v2043, %v2050
    %v2053 = vshrl.u32 %v2035, %v2051
    %v2054 = vor.u32 %v2052, %v2053
    %v2055 = vsub.s32 4294967266, %v2050
    %v2056 = vadd.s32 %v2055, 127
    %v2057 = vshll.u32 %v2056, 23
    %v2058 = vor.u32 4788187, %v2057
    %v2059 = vand.u32 2147483647, %v2058
    %v2061 = vcvt.s32.f32 %v2054
    %v2062 = vmul.f32 %v2061, %v2059
    %v2063 = vxor.u32 %v2062, 2147483648
    %v2064 = vsel %vm1943, %v2063, %v2062
    %v2065 = vsub.s32 4, %v2041
    %v2066 = vsel %vm1943, %v2065, %v2041
    %v2067 = vsel %vm1942, %v1321, %v2064
    %v2068 = vsel %vm1942, 0, %v2066
    %v2069 = vmul.f32 %v2067, %v2067
    %v2070 = vmul.f32 %v2069, -0.001358992
    %v2071 = vadd.f32 %v2070, 0.041655596
    %v2072 = vmul.f32 %v2069, %v2071
    %v2073 = vadd.f32 %v2072, -0.4999988
    %v2074 = vmul.f32 %v2069, %v2073
    %v2075 = vadd.f32 1.0, %v2074
    %v2076 = vmul.f32 %v2067, %v2067
    %v2077 = vmul.f32 %v2076, -0.00019511016
    %v2078 = vadd.f32 %v2077, 0.008332121
    %v2079 = vmul.f32 %v2076, %v2078
    %v2080 = vadd.f32 %v2079, -0.16666654
    %v2081 = vmul.f32 %v2076, %v2080
    %v2082 = vadd.f32 %v2081, 1.0
    %v2083 = vmul.f32 %v2082, %v2067
    %vm2084 = vweird.f32 %v1321
    %v2085 = vand.u32 %v2068, 3
    %vm2086 = vcmp.lt.s32.totalorder %v2085, 2
    %vm2087 = vcmp.eq.s32.totalorder %v2085, 0
    %v2088 = vxor.u32 %v2083, 2147483648
    %v2089 = vsel %vm2087, %v2075, %v2088
    %vm2090 = vcmp.eq.s32.totalorder %v2085, 2
    %v2091 = vxor.u32 %v2075, 2147483648
    %v2092 = vsel %vm2090, %v2091, %v2083
    %v2093 = vsel %vm2086, %v2089, %v2092
    %v2094 = vsel %vm2084, nan, %v2093
    %v2095 = vand.u32 2147483647, %v1322
    %vm2096 = vcmp.le.f32.partialorder %v2095, 0.7853982
    %vm2097 = vcmp.lt.s32.totalorder %v1322, 0
    %v2098 = vand.u32 %v1322, 2139095040
    %v2099 = vshrl.u32 %v2098, 23
    %v2100 = vsub.s32 %v2099, 127
    %v2101 = vand.u32 2147483647, %v1322
    %v2102 = vand.u32 %v2101, 8388607
    %v2103 = vor.u32 %v2102, 8388608
    %v2104 = vsub.s32 0, %v2103
    %v2105 = vadd.s32 %v2100, 1
    %vm2106 = vcmp.gt.s32.totalorder %v2105, 0
    %v2107 = vsel %vm2106, %v2105, 0
    %v2108 = vshrl.u32 %v2107, 5
    %v2109 = vand.u32 %v2107, 31
    %v2110 = vsub.s32 32, %v2109
    %v2111 = vshrl.u32 683565275, %v2110
    %v2112 = vshll.u32 683565275, %v2109
    %v2113 = vshrl.u32 2475754826, %v2110
    %v2114 = vor.u32 %v2112, %v2113
    %v2115 = vshll.u32 2475754826, %v2109
    %v2116 = vshrl.u32 2131351028, %v2110
    %v2117 = vor.u32 %v2115, %v2116
    %v2118 = vshll.u32 2131351028, %v2109
    %v2119 = vshrl.u32 2102212464, %v2110
    %v2120 = vor.u32 %v2118, %v2119
    %v2121 = vshll.u32 2102212464, %v2109
    %v2122 = vshrl.u32 920167782, %v2110
    %v2123 = vor.u32 %v2121, %v2122
    %v2124 = vshll.u32 920167782, %v2109
    %v2125 = vshrl.u32 1326507024, %v2110
    %v2126 = vor.u32 %v2124, %v2125
    %vm2127 = vcmp.lt.s32.totalorder %v2108, 1
    %vm2128 = vcmp.lt.s32.totalorder %v2108, 2
    %vm2129 = vcmp.lt.s32.totalorder %v2108, 3
    %vm2130 = vcmp.lt.s32.totalorder %v2108, 4
    %v2131 = vsel %vm2127, %v2111, %v2114
    %v2132 = vsel %vm2130, %v2120, 2102212464
    %v2133 = vsel %vm2129, %v2117, %v2132
    %v2134 = vsel %vm2128, %v2131, %v2133
    %v2135 = vsel %vm2127, %v2114, %v2117
    %v2136 = vsel %vm2130, %v2123, 920167782
    %v2137 = vsel %vm2129, %v2120, %v2136
    %v2138 = vsel %vm2128, %v2135, %v2137
    %v2139 = vsel %vm2127, %v2117, %v2120
    %v2140 = vsel %vm2130, %v2126, 1326507024
    %v2141 = vsel %vm2129, %v2123, %v2140
    %v2142 = vsel %vm2128, %v2139, %v2141
    %v2143 = vshll.u32 %v2103, 8
    %v2144 = vand.u32 %v2143, 65535
    %v2145 = vshrl.u32 %v2143, 16
    %v2146 = vand.u32 %v2142, 65535
    %v2147 = vshrl.u32 %v2142, 16
    %v2148 = vmul.u32 %v2144, %v2146
    %v2149 = vmul.u32 %v2144, %v2147
    %v2150 = vmul.u32 %v2145, %v2146
    %v2151 = vmul.u32 %v2145, %v2147
    %v2152 = vshll.u32 %v2149, 16
    %v2153 = vshrl.u32 %v2149, 16
    %v2154 = vshll.u32 %v2150, 16
    %v2155 = vshrl.u32 %v2150, 16
    %vm2156 = vc.u32 %v2148, %v2152
    %v2157 = vsel %vm2156, 1, 0
    %v2158 = vadd.s32 %v2148, %v2152
    %v2159 = vadd.s32 %v2151, %v2157
    %vm2160 = vc.u32 %v2158, %v2154
    %v2161 = vsel %vm2160, 1, 0
    %v2162 = vadd.s32 %v2158, %v2154
    %v2163 = vadd.s32 %v2159, %v2161
    %v2164 = vadd.s32 %v2163, %v2153
    %v2165 = vadd.s32 %v2164, %v2155
    %v2166 = vand.u32 %v2143, 65535
    %v2167 = vshrl.u32 %v2143, 16
    %v2168 = vand.u32 %v2138, 65535
    %v2169 = vshrl.u32 %v2138, 16
    %v2170 = vmul.u32 %v2166, %v2168
    %v2171 = vmul.u32 %v2166, %v2169
    %v2172 = vmul.u32 %v2167, %v2168
    %v2173 = vmul.u32 %v2167, %v2169
    %v2174 = vshll.u32 %v2171, 16
    %v2175 = vshrl.u32 %v2171, 16
    %v2176 = vshll.u32 %v2172, 16
    %v2177 = vshrl.u32 %v2172, 16
    %vm2178 = vc.u32 %v2170, %v2174
    %v2179 = vsel %vm2178, 1, 0
    %v2180 = vadd.s32 %v2170, %v2174
    %v2181 = vadd.s32 %v2173, %v2179
    %vm2182 = vc.u32 %v2180, %v2176
    %v2183 = vsel %vm2182, 1, 0
    %v2184 = vadd.s32 %v2180, %v2176
    %v2185 = vadd.s32 %v2181, %v2183
    %v2186 = vadd.s32 %v2185, %v2175
    %v2187 = vadd.s32 %v2186, %v2177
    %v2188 = vmul.u32 %v2143, %v2134
    %v2189 = vadd.s32 %v2165, %v2184
    %vm2190 = vc.u32 %v2165, %v2184
    %v2191 = vadd.s32 %v2187, 1
    %v2192 = vsel %vm2190, %v2191, %v2187
    %v2193 = vadd.s32 %v2188, %v2192
    %v2194 = vadd.s32 %v2193, 536870912
    %v2195 = vshrl.u32 %v2194, 30
    %v2196 = vshll.u32 %v2195, 30
    %v2197 = vsub.s32 %v2193, %v2196
    %vm2198 = vcmp.lt.s32.totalorder %v2197, 0
    %v2199 = vsub.s32 0, %v2197
    %v2200 = vsel %vm2198, %v2199, %v2197
    %v2201 = vclz %v2200
    %v2202 = vsub.s32 %v2201, 2
    %vm2203 = vcmp.gt.s32.totalorder 0, %v2202
    %v2204 = vsel %vm2203, 0, %v2202
    %v2205 = vsub.s32 32, %v2204
    %v2206 = vshll.u32 %v2197, %v2204
    %v2207 = vshrl.u32 %v2189, %v2205
    %v2208 = vor.u32 %v2206, %v2207
    %v2209 = vsub.s32 4294967266, %v2204
    %v2210 = vadd.s32 %v2209, 127
    %v2211 = vshll.u32 %v2210, 23
    %v2212 = vor.u32 4788187, %v2211
    %v2213 = vand.u32 2147483647, %v2212
    %v2215 = vcvt.s32.f32 %v2208
    %v2216 = vmul.f32 %v2215, %v2213
    %v2217 = vxor.u32 %v2216, 2147483648
    %v2218 = vsel %vm2097, %v2217, %v2216
    %v2219 = vsub.s32 4, %v2195
    %v2220 = vsel %vm2097, %v2219, %v2195
    %v2221 = vsel %vm2096, %v1322, %v2218
    %v2222 = vsel %vm2096, 0, %v2220
    %v2223 = vmul.f32 %v2221, %v2221
    %v2224 = vmul.f32 %v2223, -0.001358992
    %v2225 = vadd.f32 %v2224, 0.041655596
    %v2226 = vmul.f32 %v2223, %v2225
    %v2227 = vadd.f32 %v2226, -0.4999988
    %v2228 = vmul.f32 %v2223, %v2227
    %v2229 = vadd.f32 1.0, %v2228
    %v2230 = vmul.f32 %v2221, %v2221
    %v2231 = vmul.f32 %v2230, -0.00019511016
    %v2232 = vadd.f32 %v2231, 0.008332121
    %v2233 = vmul.f32 %v2230, %v2232
    %v2234 = vadd.f32 %v2233, -0.16666654
    %v2235 = vmul.f32 %v2230, %v2234
    %v2236 = vadd.f32 %v2235, 1.0
    %v2237 = vmul.f32 %v2236, %v2221
    %vm2238 = vweird.f32 %v1322
    %v2239 = vand.u32 %v2222, 3
    %vm2240 = vcmp.lt.s32.totalorder %v2239, 2
    %vm2241 = vcmp.eq.s32.totalorder %v2239, 0
    %v2242 = vxor.u32 %v2237, 2147483648
    %v2243 = vsel %vm2241, %v2229, %v2242
    %vm2244 = vcmp.eq.s32.totalorder %v2239, 2
    %v2245 = vxor.u32 %v2229, 2147483648
    %v2246 = vsel %vm2244, %v2245, %v2237
    %v2247 = vsel %vm2240, %v2243, %v2246
    %v2248 = vsel %vm2238, nan, %v2247
    %v2249 = vand.u32 2147483647, %v1323
    %vm2250 = vcmp.le.f32.partialorder %v2249, 0.7853982
    %vm2251 = vcmp.lt.s32.totalorder %v1323, 0
    %v2252 = vand.u32 %v1323, 2139095040
    %v2253 = vshrl.u32 %v2252, 23
    %v2254 = vsub.s32 %v2253, 127
    %v2255 = vand.u32 2147483647, %v1323
    %v2256 = vand.u32 %v2255, 8388607
    %v2257 = vor.u32 %v2256, 8388608
    %v2258 = vsub.s32 0, %v2257
    %v2259 = vadd.s32 %v2254, 1
    %vm2260 = vcmp.gt.s32.totalorder %v2259, 0
    %v2261 = vsel %vm2260, %v2259, 0
    %v2262 = vshrl.u32 %v2261, 5
    %v2263 = vand.u32 %v2261, 31
    %v2264 = vsub.s32 32, %v2263
    %v2265 = vshrl.u32 683565275, %v2264
    %v2266 = vshll.u32 683565275, %v2263
    %v2267 = vshrl.u32 2475754826, %v2264
    %v2268 = vor.u32 %v2266, %v2267
    %v2269 = vshll.u32 2475754826, %v2263
    %v2270 = vshrl.u32 2131351028, %v2264
    %v2271 = vor.u32 %v2269, %v2270
    %v2272 = vshll.u32 2131351028, %v2263
    %v2273 = vshrl.u32 2102212464, %v2264
    %v2274 = vor.u32 %v2272, %v2273
    %v2275 = vshll.u32 2102212464, %v2263
    %v2276 = vshrl.u32 920167782, %v2264
    %v2277 = vor.u32 %v2275, %v2276
    %v2278 = vshll.u32 920167782, %v2263
    %v2279 = vshrl.u32 1326507024, %v2264
    %v2280 = vor.u32 %v2278, %v2279
    %vm2281 = vcmp.lt.s32.totalorder %v2262, 1
    %vm2282 = vcmp.lt.s32.totalorder %v2262, 2
    %vm2283 = vcmp.lt.s32.totalorder %v2262, 3
    %vm2284 = vcmp.lt.s32.totalorder %v2262, 4
    %v2285 = vsel %vm2281, %v2265, %v2268
    %v2286 = vsel %vm2284, %v2274, 2102212464
    %v2287 = vsel %vm2283, %v2271, %v2286
    %v2288 = vsel %vm2282, %v2285, %v2287
    %v2289 = vsel %vm2281, %v2268, %v2271
    %v2290 = vsel %vm2284, %v2277, 920167782
    %v2291 = vsel %vm2283, %v2274, %v2290
    %v2292 = vsel %vm2282, %v2289, %v2291
    %v2293 = vsel %vm2281, %v2271, %v2274
    %v2294 = vsel %vm2284, %v2280, 1326507024
    %v2295 = vsel %vm2283, %v2277, %v2294
    %v2296 = vsel %vm2282, %v2293, %v2295
    %v2297 = vshll.u32 %v2257, 8
    %v2298 = vand.u32 %v2297, 65535
    %v2299 = vshrl.u32 %v2297, 16
    %v2300 = vand.u32 %v2296, 65535
    %v2301 = vshrl.u32 %v2296, 16
    %v2302 = vmul.u32 %v2298, %v2300
    %v2303 = vmul.u32 %v2298, %v2301
    %v2304 = vmul.u32 %v2299, %v2300
    %v2305 = vmul.u32 %v2299, %v2301
    %v2306 = vshll.u32 %v2303, 16
    %v2307 = vshrl.u32 %v2303, 16
    %v2308 = vshll.u32 %v2304, 16
    %v2309 = vshrl.u32 %v2304, 16
    %vm2310 = vc.u32 %v2302, %v2306
    %v2311 = vsel %vm2310, 1, 0
    %v2312 = vadd.s32 %v2302, %v2306
    %v2313 = vadd.s32 %v2305, %v2311
    %vm2314 = vc.u32 %v2312, %v2308
    %v2315 = vsel %vm2314, 1, 0
    %v2316 = vadd.s32 %v2312, %v2308
    %v2317 = vadd.s32 %v2313, %v2315
    %v2318 = vadd.s32 %v2317, %v2307
    %v2319 = vadd.s32 %v2318, %v2309
    %v2320 = vand.u32 %v2297, 65535
    %v2321 = vshrl.u32 %v2297, 16
    %v2322 = vand.u32 %v2292, 65535
    %v2323 = vshrl.u32 %v2292, 16
    %v2324 = vmul.u32 %v2320, %v2322
    %v2325 = vmul.u32 %v2320, %v2323
    %v2326 = vmul.u32 %v2321, %v2322
    %v2327 = vmul.u32 %v2321, %v2323
    %v2328 = vshll.u32 %v2325, 16
    %v2329 = vshrl.u32 %v2325, 16
    %v2330 = vshll.u32 %v2326, 16
    %v2331 = vshrl.u32 %v2326, 16
    %vm2332 = vc.u32 %v2324, %v2328
    %v2333 = vsel %vm2332, 1, 0
    %v2334 = vadd.s32 %v2324, %v2328
    %v2335 = vadd.s32 %v2327, %v2333
    %vm2336 = vc.u32 %v2334, %v2330
    %v2337 = vsel %vm2336, 1, 0
    %v2338 = vadd.s32 %v2334, %v2330
    %v2339 = vadd.s32 %v2335, %v2337
    %v2340 = vadd.s32 %v2339, %v2329
    %v2341 = vadd.s32 %v2340, %v2331
    %v2342 = vmul.u32 %v2297, %v2288
    %v2343 = vadd.s32 %v2319, %v2338
    %vm2344 = vc.u32 %v2319, %v2338
    %v2345 = vadd.s32 %v2341, 1
    %v2346 = vsel %vm2344, %v2345, %v2341
    %v2347 = vadd.s32 %v2342, %v2346
    %v2348 = vadd.s32 %v2347, 536870912
    %v2349 = vshrl.u32 %v2348, 30
    %v2350 = vshll.u32 %v2349, 30
    %v2351 = vsub.s32 %v2347, %v2350
    %vm2352 = vcmp.lt.s32.totalorder %v2351, 0
    %v2353 = vsub.s32 0, %v2351
    %v2354 = vsel %vm2352, %v2353, %v2351
    %v2355 = vclz %v2354
    %v2356 = vsub.s32 %v2355, 2
    %vm2357 = vcmp.gt.s32.totalorder 0, %v2356
    %v2358 = vsel %vm2357, 0, %v2356
    %v2359 = vsub.s32 32, %v2358
    %v2360 = vshll.u32 %v2351, %v2358
    %v2361 = vshrl.u32 %v2343, %v2359
    %v2362 = vor.u32 %v2360, %v2361
    %v2363 = vsub.s32 4294967266, %v2358
    %v2364 = vadd.s32 %v2363, 127
    %v2365 = vshll.u32 %v2364, 23
    %v2366 = vor.u32 4788187, %v2365
    %v2367 = vand.u32 2147483647, %v2366
    %v2369 = vcvt.s32.f32 %v2362
    %v2370 = vmul.f32 %v2369, %v2367
    %v2371 = vxor.u32 %v2370, 2147483648
    %v2372 = vsel %vm2251, %v2371, %v2370
    %v2373 = vsub.s32 4, %v2349
    %v2374 = vsel %vm2251, %v2373, %v2349
    %v2375 = vsel %vm2250, %v1323, %v2372
    %v2376 = vsel %vm2250, 0, %v2374
    %v2377 = vmul.f32 %v2375, %v2375
    %v2378 = vmul.f32 %v2377, -0.001358992
    %v2379 = vadd.f32 %v2378, 0.041655596
    %v2380 = vmul.f32 %v2377, %v2379
    %v2381 = vadd.f32 %v2380, -0.4999988
    %v2382 = vmul.f32 %v2377, %v2381
    %v2383 = vadd.f32 1.0, %v2382
    %v2384 = vmul.f32 %v2375, %v2375
    %v2385 = vmul.f32 %v2384, -0.00019511016
    %v2386 = vadd.f32 %v2385, 0.008332121
    %v2387 = vmul.f32 %v2384, %v2386
    %v2388 = vadd.f32 %v2387, -0.16666654
    %v2389 = vmul.f32 %v2384, %v2388
    %v2390 = vadd.f32 %v2389, 1.0
    %v2391 = vmul.f32 %v2390, %v2375
    %vm2392 = vweird.f32 %v1323
    %v2393 = vand.u32 %v2376, 3
    %vm2394 = vcmp.lt.s32.totalorder %v2393, 2
    %vm2395 = vcmp.eq.s32.totalorder %v2393, 0
    %v2396 = vxor.u32 %v2391, 2147483648
    %v2397 = vsel %vm2395, %v2383, %v2396
    %vm2398 = vcmp.eq.s32.totalorder %v2393, 2
    %v2399 = vxor.u32 %v2383, 2147483648
    %v2400 = vsel %vm2398, %v2399, %v2391
    %v2401 = vsel %vm2394, %v2397, %v2400
    %v2402 = vsel %vm2392, nan, %v2401
    %v2403 = vand.u32 2147483647, %v1324
    %vm2404 = vcmp.le.f32.partialorder %v2403, 0.7853982
    %vm2405 = vcmp.lt.s32.totalorder %v1324, 0
    %v2406 = vand.u32 %v1324, 2139095040
    %v2407 = vshrl.u32 %v2406, 23
    %v2408 = vsub.s32 %v2407, 127
    %v2409 = vand.u32 2147483647, %v1324
    %v2410 = vand.u32 %v2409, 8388607
    %v2411 = vor.u32 %v2410, 8388608
    %v2412 = vsub.s32 0, %v2411
    %v2413 = vadd.s32 %v2408, 1
    %vm2414 = vcmp.gt.s32.totalorder %v2413, 0
    %v2415 = vsel %vm2414, %v2413, 0
    %v2416 = vshrl.u32 %v2415, 5
    %v2417 = vand.u32 %v2415, 31
    %v2418 = vsub.s32 32, %v2417
    %v2419 = vshrl.u32 683565275, %v2418
    %v2420 = vshll.u32 683565275, %v2417
    %v2421 = vshrl.u32 2475754826, %v2418
    %v2422 = vor.u32 %v2420, %v2421
    %v2423 = vshll.u32 2475754826, %v2417
    %v2424 = vshrl.u32 2131351028, %v2418
    %v2425 = vor.u32 %v2423, %v2424
    %v2426 = vshll.u32 2131351028, %v2417
    %v2427 = vshrl.u32 2102212464, %v2418
    %v2428 = vor.u32 %v2426, %v2427
    %v2429 = vshll.u32 2102212464, %v2417
    %v2430 = vshrl.u32 920167782, %v2418
    %v2431 = vor.u32 %v2429, %v2430
    %v2432 = vshll.u32 920167782, %v2417
    %v2433 = vshrl.u32 1326507024, %v2418
    %v2434 = vor.u32 %v2432, %v2433
    %vm2435 = vcmp.lt.s32.totalorder %v2416, 1
    %vm2436 = vcmp.lt.s32.totalorder %v2416, 2
    %vm2437 = vcmp.lt.s32.totalorder %v2416, 3
    %vm2438 = vcmp.lt.s32.totalorder %v2416, 4
    %v2439 = vsel %vm2435, %v2419, %v2422
    %v2440 = vsel %vm2438, %v2428, 2102212464
    %v2441 = vsel %vm2437, %v2425, %v2440
    %v2442 = vsel %vm2436, %v2439, %v2441
    %v2443 = vsel %vm2435, %v2422, %v2425
    %v2444 = vsel %vm2438, %v2431, 920167782
    %v2445 = vsel %vm2437, %v2428, %v2444
    %v2446 = vsel %vm2436, %v2443, %v2445
    %v2447 = vsel %vm2435, %v2425, %v2428
    %v2448 = vsel %vm2438, %v2434, 1326507024
    %v2449 = vsel %vm2437, %v2431, %v2448
    %v2450 = vsel %vm2436, %v2447, %v2449
    %v2451 = vshll.u32 %v2411, 8
    %v2452 = vand.u32 %v2451, 65535
    %v2453 = vshrl.u32 %v2451, 16
    %v2454 = vand.u32 %v2450, 65535
    %v2455 = vshrl.u32 %v2450, 16
    %v2456 = vmul.u32 %v2452, %v2454
    %v2457 = vmul.u32 %v2452, %v2455
    %v2458 = vmul.u32 %v2453, %v2454
    %v2459 = vmul.u32 %v2453, %v2455
    %v2460 = vshll.u32 %v2457, 16
    %v2461 = vshrl.u32 %v2457, 16
    %v2462 = vshll.u32 %v2458, 16
    %v2463 = vshrl.u32 %v2458, 16
    %vm2464 = vc.u32 %v2456, %v2460
    %v2465 = vsel %vm2464, 1, 0
    %v2466 = vadd.s32 %v2456, %v2460
    %v2467 = vadd.s32 %v2459, %v2465
    %vm2468 = vc.u32 %v2466, %v2462
    %v2469 = vsel %vm2468, 1, 0
    %v2470 = vadd.s32 %v2466, %v2462
    %v2471 = vadd.s32 %v2467, %v2469
    %v2472 = vadd.s32 %v2471, %v2461
    %v2473 = vadd.s32 %v2472, %v2463
    %v2474 = vand.u32 %v2451, 65535
    %v2475 = vshrl.u32 %v2451, 16
    %v2476 = vand.u32 %v2446, 65535
    %v2477 = vshrl.u32 %v2446, 16
    %v2478 = vmul.u32 %v2474, %v2476
    %v2479 = vmul.u32 %v2474, %v2477
    %v2480 = vmul.u32 %v2475, %v2476
    %v2481 = vmul.u32 %v2475, %v2477
    %v2482 = vshll.u32 %v2479, 16
    %v2483 = vshrl.u32 %v2479, 16
    %v2484 = vshll.u32 %v2480, 16
    %v2485 = vshrl.u32 %v2480, 16
    %vm2486 = vc.u32 %v2478, %v2482
    %v2487 = vsel %vm2486, 1, 0
    %v2488 = vadd.s32 %v2478, %v2482
    %v2489 = vadd.s32 %v2481, %v2487
    %vm2490 = vc.u32 %v2488, %v2484
    %v2491 = vsel %vm2490, 1, 0
    %v2492 = vadd.s32 %v2488, %v2484
    %v2493 = vadd.s32 %v2489, %v2491
    %v2494 = vadd.s32 %v2493, %v2483
    %v2495 = vadd.s32 %v2494, %v2485
    %v2496 = vmul.u32 %v2451, %v2442
    %v2497 = vadd.s32 %v2473, %v2492
    %vm2498 = vc.u32 %v2473, %v2492
    %v2499 = vadd.s32 %v2495, 1
    %v2500 = vsel %vm2498, %v2499, %v2495
    %v2501 = vadd.s32 %v2496, %v2500
    %v2502 = vadd.s32 %v2501, 536870912
    %v2503 = vshrl.u32 %v2502, 30
    %v2504 = vshll.u32 %v2503, 30
    %v2505 = vsub.s32 %v2501, %v2504
    %vm2506 = vcmp.lt.s32.totalorder %v2505, 0
    %v2507 = vsub.s32 0, %v2505
    %v2508 = vsel %vm2506, %v2507, %v2505
    %v2509 = vclz %v2508
    %v2510 = vsub.s32 %v2509, 2
    %vm2511 = vcmp.gt.s32.totalorder 0, %v2510
    %v2512 = vsel %vm2511, 0, %v2510
    %v2513 = vsub.s32 32, %v2512
    %v2514 = vshll.u32 %v2505, %v2512
    %v2515 = vshrl.u32 %v2497, %v2513
    %v2516 = vor.u32 %v2514, %v2515
    %v2517 = vsub.s32 4294967266, %v2512
    %v2518 = vadd.s32 %v2517, 127
    %v2519 = vshll.u32 %v2518, 23
    %v2520 = vor.u32 4788187, %v2519
    %v2521 = vand.u32 2147483647, %v2520
    %v2523 = vcvt.s32.f32 %v2516
    %v2524 = vmul.f32 %v2523, %v2521
    %v2525 = vxor.u32 %v2524, 2147483648
    %v2526 = vsel %vm2405, %v2525, %v2524
    %v2527 = vsub.s32 4, %v2503
    %v2528 = vsel %vm2405, %v2527, %v2503
    %v2529 = vsel %vm2404, %v1324, %v2526
    %v2530 = vsel %vm2404, 0, %v2528
    %v2531 = vmul.f32 %v2529, %v2529
    %v2532 = vmul.f32 %v2531, -0.001358992
    %v2533 = vadd.f32 %v2532, 0.041655596
    %v2534 = vmul.f32 %v2531, %v2533
    %v2535 = vadd.f32 %v2534, -0.4999988
    %v2536 = vmul.f32 %v2531, %v2535
    %v2537 = vadd.f32 1.0, %v2536
    %v2538 = vmul.f32 %v2529, %v2529
    %v2539 = vmul.f32 %v2538, -0.00019511016
    %v2540 = vadd.f32 %v2539, 0.008332121
    %v2541 = vmul.f32 %v2538, %v2540
    %v2542 = vadd.f32 %v2541, -0.16666654
    %v2543 = vmul.f32 %v2538, %v2542
    %v2544 = vadd.f32 %v2543, 1.0
    %v2545 = vmul.f32 %v2544, %v2529
    %vm2546 = vweird.f32 %v1324
    %v2547 = vand.u32 %v2530, 3
    %vm2548 = vcmp.lt.s32.totalorder %v2547, 2
    %vm2549 = vcmp.eq.s32.totalorder %v2547, 0
    %v2550 = vxor.u32 %v2545, 2147483648
    %v2551 = vsel %vm2549, %v2537, %v2550
    %vm2552 = vcmp.eq.s32.totalorder %v2547, 2
    %v2553 = vxor.u32 %v2537, 2147483648
    %v2554 = vsel %vm2552, %v2553, %v2545
    %v2555 = vsel %vm2548, %v2551, %v2554
    %v2556 = vsel %vm2546, nan, %v2555
    %v2557 = vadd.f32 %v1478, 1.0
    %v2558 = vadd.f32 %v1632, 1.0
    %v2559 = vadd.f32 %v1786, 1.0
    %v2560 = vadd.f32 %v1940, 1.0
    %v2561 = vadd.f32 %v2094, 1.0
    %v2562 = vadd.f32 %v2248, 1.0
    %v2563 = vadd.f32 %v2402, 1.0
    %v2564 = vadd.f32 %v2556, 1.0
    %v2565 = vmul.f32 %v2557, 0.5
    %v2566 = vmul.f32 %v2558, 0.5
    %v2567 = vmul.f32 %v2559, 0.5
    %v2568 = vmul.f32 %v2560, 0.5
    %v2569 = vmul.f32 %v2561, 0.5
    %v2570 = vmul.f32 %v2562, 0.5
    %v2571 = vmul.f32 %v2563, 0.5
    %v2572 = vmul.f32 %v2564, 0.5
    %v2573 = vmul.f32 %v1169, %v1234
    %v2574 = vmul.f32 %v1171, %v1236
    %v2575 = vmul.f32 %v1174, %v1239
    %v2576 = vmul.f32 %v1176, %v1241
    %v2577 = vmul.f32 %v1179, %v1244
    %v2578 = vmul.f32 %v1181, %v1246
    %v2579 = vmul.f32 %v1184, %v1249
    %v2580 = vmul.f32 %v1186, %v1251
    %v2581 = vpack.c.bf16 %v2574, %v2573
    %v2582 = vpack.c.bf16 %v2576, %v2575
    %v2583 = vpack.c.bf16 %v2578, %v2577
    %v2584 = vpack.c.bf16 %v2580, %v2579
    %v2586 = vsel %vm197, %v179, 0
    %v2589 = vsel %vm197, %v2581, 0
    %v2592 = vsel %vm197, %v2582, 0
    %v2595 = vsel %vm197, %v2583, 0
    %v2598 = vsel %vm197, %v2584, 0
    %2600 = vmatpush.bf16.xpose.msra.mxu0 0
    %2601 = vmatpush.bf16.xpose.msra.mxu0 0
    %2602 = vmatpush.bf16.xpose.msra.mxu0 0
    %2603 = vmatpush.bf16.xpose.msra.mxu0 0
    %2604 = vmatpush.bf16.xpose.msra.mxu0 %v2598
    %2605 = vmatpush.bf16.xpose.msra.mxu0 %v2595
    %2606 = vmatpush.bf16.xpose.msra.mxu0 %v2592
    %2607 = vmatpush.bf16.xpose.msra.mxu0 %v2589
    %2608 = vmatmul.bf16.gmra.mxu0 %v2586
    %v2609 = vpop.f32.mrf.mxu0
    %v2610 = vadd.f32 0.0, %v2609
    %v2611 = vpop.f32.mrf.mxu0
    %2612 = vdwg.mxu0
    %v2613 = vmul.f32 %v2610, 0.35355338
    %vm2614 = vcmask 519168
    %v2615 = vsel %vm2614, %v2613, -inf
    %2616 = vmax.xlane.f32.xlu0 %v2615
    %v2617 = vpop.xlane.xlu0 %2616
    %vm2618 = vcmask 1043456
    %v2619 = vsel %vm2618, %v2617, -inf
    %v2620 = vrot.slane %v2619, 4
    %v2621 = vmax.f32 %v2619, %v2620
    %v2622 = vrot.slane %v2621, 2
    %v2623 = vmax.f32 %v2621, %v2622
    %v2624 = vrot.slane %v2623, 1
    %v2625 = vmax.f32 %v2623, %v2624
    %v2626 = vsub.f32 %v2613, %v2625
    %v2627 = vmul.f32 %v2626, 1.442695
    %v2628 = vpow.pop %v2627
    %v2629 = vpack.c.bf16 %v2628, %v2628
    %vm2634 = vcmask 523264
    %v2636 = vsel %vm2634, %v2629, 0
    %2638 = vmatpush.bf16.msra.mxu0 0
    %2639 = vmatpush.bf16.msra.mxu0 0
    %2640 = vmatpush.bf16.msra.mxu0 0
    %2641 = vmatpush.bf16.msra.mxu0 0
    %2642 = vmatpush.bf16.msra.mxu0 %v266
    %2643 = vmatpush.bf16.msra.mxu0 %v265
    %2644 = vmatpush.bf16.msra.mxu0 %v264
    %2645 = vmatpush.bf16.msra.mxu0 %v263
    %2646 = vmatmul.bf16.gmra.mxu0 %v2636
    %v2647 = vpop.f32.mrf.mxu0
    %v2648 = vadd.f32 0.0, %v2647
    %v2649 = vpop.f32.mrf.mxu0
    %2650 = vdwg.mxu0
    %v2651 = vpack.c.bf16 %v2648, %v2648
    %v2654 = vunpack.c.l.b16 %v161
    %v2655 = vunpack.c.l.b16 %v162
    %v2656 = vpack.c.b16 %v2655, %v2654
    %v2659 = vsel %vm267, %v2651, 0
    %2661 = vmatpush.bf16.msra.mxu0 0
    %2662 = vmatpush.bf16.msra.mxu0 0
    %2663 = vmatpush.bf16.msra.mxu0 0
    %2664 = vmatpush.bf16.msra.mxu0 0
    %2665 = vmatpush.bf16.msra.mxu0 0
    %2666 = vmatpush.bf16.msra.mxu0 0
    %2667 = vmatpush.bf16.msra.mxu0 0
    %2668 = vmatpush.bf16.msra.mxu0 %v2656
    %2669 = vmatmul.bf16.gmra.mxu0 %v2659
    %v2670 = vpop.f32.mrf.mxu0
    %v2671 = vadd.f32 0.0, %v2670
    %v2672 = vpop.f32.mrf.mxu0
    %2673 = vdwg.mxu0
    %v2674 = vmax.f32 %v2671, 1e-20
    %v2675 = vrcp.pop %v2674
    %v2676 = vmul.f32 %v2628, %v2675
    %v2677 = vpack.c.bf16 %v2676, %v2676
    %2678 = vxpose.xlu0.c.b16.start [1/8] %v2677, 128
    %2679 = vxpose.xlu0.c.b16.cont [2/8] 0, 128
    %2680 = vxpose.xlu0.c.b16.cont [3/8] 0, 128
    %2681 = vxpose.xlu0.c.b16.cont [4/8] 0, 128
    %2682 = vxpose.xlu0.c.b16.cont [5/8] 0, 128
    %2683 = vxpose.xlu0.c.b16.cont [6/8] 0, 128
    %2684 = vxpose.xlu0.c.b16.cont [7/8] 0, 128
    %2685 = vxpose.xlu0.c.b16.end [8/8] 0, 128
    %v2686 = vpop.trf.xlu0
    %v2687 = vpop.trf.xlu0
    %v2688 = vpop.trf.xlu0
    %v2689 = vpop.trf.xlu0
    %v2690 = vpop.trf.xlu0
    %v2691 = vpop.trf.xlu0
    %v2692 = vpop.trf.xlu0
    %v2693 = vpop.trf.xlu0
    %vm2694 = vcmask 31744
    %v2696 = vsel %vm2694, %v2686, 0
    %v2699 = vsel %vm2694, %v2687, 0
    %v2702 = vsel %vm2694, %v2688, 0
    %v2705 = vsel %vm2694, %v2689, 0
    %vm2707 = vcmask 1041408
    %v2708 = vsel %vm2707, %v179, 0
    %2710 = vmatpush.bf16.msra.mxu0 0
    %2711 = vmatpush.bf16.msra.mxu0 0
    %2712 = vmatpush.bf16.msra.mxu0 0
    %2713 = vmatpush.bf16.msra.mxu0 0
    %2714 = vmatpush.bf16.msra.mxu0 0
    %2715 = vmatpush.bf16.msra.mxu0 0
    %2716 = vmatpush.bf16.msra.mxu0 0
    %2717 = vmatpush.bf16.msra.mxu0 %v2708
    %2718 = vmatmul.bf16.gmra.mxu0 %v2696
    %v2719 = vpop.f32.mrf.mxu0
    %v2720 = vadd.f32 0.0, %v2719
    %v2721 = vpop.f32.mrf.mxu0
    %v2722 = vadd.f32 0.0, %v2721
    %2723 = vmatmul.bf16.gmra.mxu0 %v2699
    %v2724 = vpop.f32.mrf.mxu0
    %v2725 = vadd.f32 0.0, %v2724
    %v2726 = vpop.f32.mrf.mxu0
    %v2727 = vadd.f32 0.0, %v2726
    %2728 = vmatmul.bf16.gmra.mxu0 %v2702
    %v2729 = vpop.f32.mrf.mxu0
    %v2730 = vadd.f32 0.0, %v2729
    %v2731 = vpop.f32.mrf.mxu0
    %v2732 = vadd.f32 0.0, %v2731
    %2733 = vmatmul.bf16.gmra.mxu0 %v2705
    %v2734 = vpop.f32.mrf.mxu0
    %v2735 = vadd.f32 0.0, %v2734
    %v2736 = vpop.f32.mrf.mxu0
    %v2737 = vadd.f32 0.0, %v2736
    %2738 = vdwg.mxu0
    %v2739 = vmul.f32 %v2720, %v1283
    %v2740 = vmul.f32 %v2722, %v1285
    %v2741 = vmul.f32 %v2725, %v1288
    %v2742 = vmul.f32 %v2727, %v1290
    %v2743 = vmul.f32 %v2730, %v1293
    %v2744 = vmul.f32 %v2732, %v1295
    %v2745 = vmul.f32 %v2735, %v1298
    %v2746 = vmul.f32 %v2737, %v1300
    %2748 = vset.pattern.permute.xlu0 0
    %2749 = vperm.xlu0 %2748, %v2565
    %v2750 = vpop.permute.xlu0 %2749
    %2753 = vset.pattern.permute.xlu0 0
    %2754 = vperm.xlu0 %2753, %v2566
    %v2755 = vpop.permute.xlu0 %2754
    %2758 = vset.pattern.permute.xlu0 0
    %2759 = vperm.xlu0 %2758, %v2567
    %v2760 = vpop.permute.xlu0 %2759
    %2763 = vset.pattern.permute.xlu0 0
    %2764 = vperm.xlu0 %2763, %v2568
    %v2765 = vpop.permute.xlu0 %2764
    %2768 = vset.pattern.permute.xlu0 0
    %2769 = vperm.xlu0 %2768, %v2569
    %v2770 = vpop.permute.xlu0 %2769
    %2773 = vset.pattern.permute.xlu0 0
    %2774 = vperm.xlu0 %2773, %v2570
    %v2775 = vpop.permute.xlu0 %2774
    %2778 = vset.pattern.permute.xlu0 0
    %2779 = vperm.xlu0 %2778, %v2571
    %v2780 = vpop.permute.xlu0 %2779
    %2783 = vset.pattern.permute.xlu0 0
    %2784 = vperm.xlu0 %2783, %v2572
    %v2785 = vpop.permute.xlu0 %2784
    %v2787 = vmul.f32 %v2739, %v2750
    %v2788 = vmul.f32 %v2740, %v2755
    %v2789 = vmul.f32 %v2741, %v2760
    %v2790 = vmul.f32 %v2742, %v2765
    %v2791 = vmul.f32 %v2743, %v2770
    %v2792 = vmul.f32 %v2744, %v2775
    %v2793 = vmul.f32 %v2745, %v2780
    %v2794 = vmul.f32 %v2746, %v2785
    %v2795 = vpack.c.bf16 %v2788, %v2787
    %v2796 = vpack.c.bf16 %v2790, %v2789
    %v2797 = vpack.c.bf16 %v2792, %v2791
    %v2798 = vpack.c.bf16 %v2794, %v2793
    %v2800 = vsel %vm2634, %v2656, 0
    %2802 = vmatpush.bf16.msra.mxu0 0
    %2803 = vmatpush.bf16.msra.mxu0 0
    %2804 = vmatpush.bf16.msra.mxu0 0
    %2805 = vmatpush.bf16.msra.mxu0 0
    %2806 = vmatpush.bf16.msra.mxu0 %v2798
    %2807 = vmatpush.bf16.msra.mxu0 %v2797
    %2808 = vmatpush.bf16.msra.mxu0 %v2796
    %2809 = vmatpush.bf16.msra.mxu0 %v2795
    %2810 = vmatmul.bf16.gmra.mxu0 %v2800
    %v2811 = vpop.f32.mrf.mxu0
    %v2812 = vadd.f32 0.0, %v2811
    %v2813 = vpop.f32.mrf.mxu0
    %v2814 = vadd.f32 0.0, %v2813
    %2815 = vdwg.mxu0
    %v2816 = vld [vmem:[%s47] sm:$0xf]
    %v2817 = vld [vmem:[%s47 + $0x4] sm:$0xf]
    %v2818 = vld [vmem:[%s47 + $0x8] sm:$0xf]
    %v2819 = vld [vmem:[%s47 + $0xc] sm:$0xf]
    %v2820 = vpack.c.bf16 %v2814, %v2812
    %v2821 = vld [vmem:[%s49] sm:$0x1]
    %v2823 = vperm.slane %v2821, 0
    %v2829 = vunpack.c.l.b16 %v2816
    %v2830 = vunpack.c.l.b16 %v2817
    %v2831 = vunpack.c.l.b16 %v2818
    %v2832 = vunpack.c.l.b16 %v2819
    %v2833 = vpack.c.b16 %v2830, %v2829
    %v2834 = vpack.c.b16 %v2832, %v2831
    %v2838 = vsel %vm197, %v2820, 0
    %2840 = vmatpush.bf16.msra.mxu0 0
    %2841 = vmatpush.bf16.msra.mxu0 0
    %2842 = vmatpush.bf16.msra.mxu0 0
    %2843 = vmatpush.bf16.msra.mxu0 0
    %2844 = vmatpush.bf16.msra.mxu0 0
    %2845 = vmatpush.bf16.msra.mxu0 0
    %2846 = vmatpush.bf16.msra.mxu0 %v2834
    %2847 = vmatpush.bf16.msra.mxu0 %v2833
    %2848 = vmatmul.bf16.gmra.mxu0 %v2838
    %v2849 = vpop.f32.mrf.mxu0
    %v2850 = vadd.f32 %v2823, %v2849
    %v2851 = vpop.f32.mrf.mxu0
    %v2852 = vadd.f32 %v2823, %v2851
    %2853 = vdwg.mxu0
    %v2854 = vadd.f32 %v143, %v2850
    %v2855 = vadd.f32 %v144, %v2852
    %v2856 = vld [vmem:[%s51] sm:$0x1]
    %v2857 = vld [vmem:[%s53] sm:$0x1]
    %v2858 = vsel %vm197, %v2854, 0.0
    %2859 = vadd.xlane.f32.xlu0 %v2858
    %v2860 = vpop.xlane.xlu0 %2859
    %v2861 = vsel %vm197, %v2855, 0.0
    %2862 = vadd.xlane.f32.xlu0 %v2861
    %v2863 = vpop.xlane.xlu0 %2862
    %v2864 = vmul.f32 %v2860, %v933
    %v2865 = vmul.f32 %v2863, %v933
    %v2866 = vsub.f32 %v2854, %v2864
    %v2867 = vsub.f32 %v2855, %v2865
    %v2868 = vmul.f32 %v2866, %v2866
    %v2869 = vmul.f32 %v2867, %v2867
    %v2870 = vsel %vm197, %v2868, 0.0
    %2871 = vadd.xlane.f32.xlu0 %v2870
    %v2872 = vpop.xlane.xlu0 %2871
    %v2873 = vsel %vm197, %v2869, 0.0
    %2874 = vadd.xlane.f32.xlu0 %v2873
    %v2875 = vpop.xlane.xlu0 %2874
    %v2876 = vmul.f32 %v2872, %v933
    %v2877 = vmul.f32 %v2875, %v933
    %v2878 = vadd.f32 %v2876, 1e-05
    %v2879 = vadd.f32 %v2877, 1e-05
    %v2880 = vrsqrt.pop %v2878
    %v2881 = vmul.f32 %v2880, %v2878
    %v2882 = vmul.f32 %v2881, %v2880
    %v2883 = vmul.f32 0.5, %v2882
    %v2884 = vsub.f32 1.5, %v2883
    %v2885 = vmul.f32 %v2880, %v2884
    %vm2886 = vweird.f32 %v2878
    %vm2887 = vweird.f32 %v2880
    %vm2888 = vmor %vm2886, %vm2887
    %v2889 = vsel %vm2888, %v2880, %v2885
    %v2890 = vrsqrt.pop %v2879
    %v2891 = vmul.f32 %v2890, %v2879
    %v2892 = vmul.f32 %v2891, %v2890
    %v2893 = vmul.f32 0.5, %v2892
    %v2894 = vsub.f32 1.5, %v2893
    %v2895 = vmul.f32 %v2890, %v2894
    %vm2896 = vweird.f32 %v2879
    %vm2897 = vweird.f32 %v2890
    %vm2898 = vmor %vm2896, %vm2897
    %v2899 = vsel %vm2898, %v2890, %v2895
    %v2900 = vmul.f32 %v2866, %v2889
    %v2901 = vmul.f32 %v2867, %v2899
    %v2903 = vperm.slane %v2856, 0
    %v2905 = vmul.f32 %v2900, %v2903
    %v2906 = vmul.f32 %v2901, %v2903
    %v2908 = vperm.slane %v2857, 0
    %v2910 = vadd.f32 %v2905, %v2908
    %v2911 = vadd.f32 %v2906, %v2908
    %v2912 = vld [vmem:[%s55] sm:$0xf]
    %v2913 = vld [vmem:[%s55 + $0x4] sm:$0xf]
    %v2914 = vld [vmem:[%s55 + $0x8] sm:$0xf]
    %v2915 = vld [vmem:[%s55 + $0xc] sm:$0xf]
    %v2916 = vpack.c.bf16 %v2911, %v2910
    %v2917 = vld [vmem:[%s57] sm:$0x1]
    %v2919 = vperm.slane %v2917, 0
    %v2925 = vunpack.c.l.b16 %v2912
    %v2926 = vunpack.c.l.b16 %v2913
    %v2927 = vunpack.c.l.b16 %v2914
    %v2928 = vunpack.c.l.b16 %v2915
    %v2929 = vpack.c.b16 %v2926, %v2925
    %v2930 = vpack.c.b16 %v2928, %v2927
    %v2934 = vsel %vm197, %v2916, 0
    %2936 = vmatpush.bf16.msra.mxu0 0
    %2937 = vmatpush.bf16.msra.mxu0 0
    %2938 = vmatpush.bf16.msra.mxu0 0
    %2939 = vmatpush.bf16.msra.mxu0 0
    %2940 = vmatpush.bf16.msra.mxu0 0
    %2941 = vmatpush.bf16.msra.mxu0 0
    %2942 = vmatpush.bf16.msra.mxu0 %v2930
    %2943 = vmatpush.bf16.msra.mxu0 %v2929
    %2944 = vmatmul.bf16.gmra.mxu0 %v2934
    %v2945 = vpop.f32.mrf.mxu0
    %v2946 = vadd.f32 %v2919, %v2945
    %v2947 = vpop.f32.mrf.mxu0
    %v2948 = vadd.f32 %v2919, %v2947
    %2949 = vdwg.mxu0
    %v2950 = vxor.u32 %v2946, 2147483648
    %v2951 = vxor.u32 %v2948, 2147483648
    %v2952 = vmul.f32 %v2950, 1.442695
    %v2953 = vpow.pop %v2952
    %v2954 = vmul.f32 %v2951, 1.442695
    %v2955 = vpow.pop %v2954
    %v2956 = vadd.f32 %v2953, 1.0
    %v2957 = vadd.f32 %v2955, 1.0
    %v2958 = vrcp.pop %v2956
    %v2959 = vmul.f32 %v2956, %v2958
    %v2960 = vsub.f32 1.0, %v2959
    %v2961 = vmul.f32 %v2958, %v2960
    %v2962 = vadd.f32 %v2958, %v2961
    %vm2963 = vweird.f32 %v2956
    %vm2964 = vweird.f32 %v2958
    %vm2965 = vmor %vm2963, %vm2964
    %v2966 = vsel %vm2965, %v2958, %v2962
    %v2967 = vand.u32 2147483647, %v2956
    %vm2968 = vcmp.eq.f32.partialorder %v2967, 8.507059e+37
    %v2969 = vand.u32 %v2956, 2147483648
    %v2970 = vor.u32 1.1754944e-38, %v2969
    %v2971 = vsel %vm2968, %v2970, %v2966
    %v2972 = vmul.f32 1.0, %v2971
    %v2973 = vrcp.pop %v2957
    %v2974 = vmul.f32 %v2957, %v2973
    %v2975 = vsub.f32 1.0, %v2974
    %v2976 = vmul.f32 %v2973, %v2975
    %v2977 = vadd.f32 %v2973, %v2976
    %vm2978 = vweird.f32 %v2957
    %vm2979 = vweird.f32 %v2973
    %vm2980 = vmor %vm2978, %vm2979
    %v2981 = vsel %vm2980, %v2973, %v2977
    %v2982 = vand.u32 2147483647, %v2957
    %vm2983 = vcmp.eq.f32.partialorder %v2982, 8.507059e+37
    %v2984 = vand.u32 %v2957, 2147483648
    %v2985 = vor.u32 1.1754944e-38, %v2984
    %v2986 = vsel %vm2983, %v2985, %v2981
    %v2987 = vmul.f32 1.0, %v2986
    %v2988 = vmul.f32 %v2946, %v2972
    %v2989 = vmul.f32 %v2948, %v2987
    %v2990 = vld [vmem:[%s59] sm:$0xf]
    %v2991 = vld [vmem:[%s59 + $0x4] sm:$0xf]
    %v2992 = vld [vmem:[%s59 + $0x8] sm:$0xf]
    %v2993 = vld [vmem:[%s59 + $0xc] sm:$0xf]
    %v2994 = vld [vmem:[%s59 + $0x10] sm:$0xf]
    %v2995 = vld [vmem:[%s59 + $0x14] sm:$0xf]
    %v2996 = vld [vmem:[%s59 + $0x18] sm:$0xf]
    %v2997 = vld [vmem:[%s59 + $0x1c] sm:$0xf]
    %v2998 = vpack.c.bf16 %v2989, %v2988
    %v2999 = vld [vmem:[%s61] sm:$0x1]
    %v3001 = vperm.slane %v2999, 0
    %v3011 = vunpack.c.l.b16 %v2990
    %v3012 = vunpack.c.l.b16 %v2991
    %v3013 = vunpack.c.l.b16 %v2992
    %v3014 = vunpack.c.l.b16 %v2993
    %v3015 = vunpack.c.l.b16 %v2994
    %v3016 = vunpack.c.l.b16 %v2995
    %v3017 = vunpack.c.l.b16 %v2996
    %v3018 = vunpack.c.l.b16 %v2997
    %v3019 = vpack.c.b16 %v3012, %v3011
    %v3020 = vpack.c.b16 %v3014, %v3013
    %v3021 = vpack.c.b16 %v3016, %v3015
    %v3022 = vpack.c.b16 %v3018, %v3017
    %v3028 = vsel %vm2634, %v2998, 0
    %3030 = vmatpush.bf16.msra.mxu0 0
    %3031 = vmatpush.bf16.msra.mxu0 0
    %3032 = vmatpush.bf16.msra.mxu0 0
    %3033 = vmatpush.bf16.msra.mxu0 0
    %3034 = vmatpush.bf16.msra.mxu0 %v3022
    %3035 = vmatpush.bf16.msra.mxu0 %v3021
    %3036 = vmatpush.bf16.msra.mxu0 %v3020
    %3037 = vmatpush.bf16.msra.mxu0 %v3019
    %3038 = vmatmul.bf16.gmra.mxu0 %v3028
    %v3039 = vpop.f32.mrf.mxu0
    %v3040 = vadd.f32 %v3001, %v3039
    %v3041 = vpop.f32.mrf.mxu0
    %v3042 = vadd.f32 %v3001, %v3041
    %3043 = vdwg.mxu0
    %v3044 = vadd.f32 %v2910, %v3040
    %v3045 = vadd.f32 %v2911, %v3042
    %v3046 = vld [vmem:[%s63] sm:$0x1]
    %v3047 = vld [vmem:[%s65] sm:$0x1]
    %v3048 = vsel %vm197, %v3044, 0.0
    %3049 = vadd.xlane.f32.xlu0 %v3048
    %v3050 = vpop.xlane.xlu0 %3049
    %v3051 = vsel %vm197, %v3045, 0.0
    %3052 = vadd.xlane.f32.xlu0 %v3051
    %v3053 = vpop.xlane.xlu0 %3052
    %v3054 = vmul.f32 %v3050, %v933
    %v3055 = vmul.f32 %v3053, %v933
    %v3056 = vsub.f32 %v3044, %v3054
    %v3057 = vsub.f32 %v3045, %v3055
    %v3058 = vmul.f32 %v3056, %v3056
    %v3059 = vmul.f32 %v3057, %v3057
    %v3060 = vsel %vm197, %v3058, 0.0
    %3061 = vadd.xlane.f32.xlu0 %v3060
    %v3062 = vpop.xlane.xlu0 %3061
    %v3063 = vsel %vm197, %v3059, 0.0
    %3064 = vadd.xlane.f32.xlu0 %v3063
    %v3065 = vpop.xlane.xlu0 %3064
    %v3066 = vmul.f32 %v3062, %v933
    %v3067 = vmul.f32 %v3065, %v933
    %v3068 = vadd.f32 %v3066, 1e-05
    %v3069 = vadd.f32 %v3067, 1e-05
    %v3070 = vrsqrt.pop %v3068
    %v3071 = vmul.f32 %v3070, %v3068
    %v3072 = vmul.f32 %v3071, %v3070
    %v3073 = vmul.f32 0.5, %v3072
    %v3074 = vsub.f32 1.5, %v3073
    %v3075 = vmul.f32 %v3070, %v3074
    %vm3076 = vweird.f32 %v3068
    %vm3077 = vweird.f32 %v3070
    %vm3078 = vmor %vm3076, %vm3077
    %v3079 = vsel %vm3078, %v3070, %v3075
    %v3080 = vrsqrt.pop %v3069
    %v3081 = vmul.f32 %v3080, %v3069
    %v3082 = vmul.f32 %v3081, %v3080
    %v3083 = vmul.f32 0.5, %v3082
    %v3084 = vsub.f32 1.5, %v3083
    %v3085 = vmul.f32 %v3080, %v3084
    %vm3086 = vweird.f32 %v3069
    %vm3087 = vweird.f32 %v3080
    %vm3088 = vmor %vm3086, %vm3087
    %v3089 = vsel %vm3088, %v3080, %v3085
    %v3090 = vmul.f32 %v3056, %v3079
    %v3091 = vmul.f32 %v3057, %v3089
    %v3093 = vperm.slane %v3046, 0
    %v3095 = vmul.f32 %v3090, %v3093
    %v3096 = vmul.f32 %v3091, %v3093
    %v3098 = vperm.slane %v3047, 0
    %v3100 = vadd.f32 %v3095, %v3098
    %v3101 = vadd.f32 %v3096, %v3098
    %3102 = vst.msk [vmem:[#allocation2] sm:$0xff] %vm197, %v3100
    %3103 = vst.msk [vmem:[#allocation2 + $0x8] sm:$0xff] %vm197, %v3101
    // Predicated region
    $region134: #{tpu_custom_call.1} parent=1 // pred_check
      _
    $region135: #{tpu_custom_call.1} parent=1 // pred_check_branch
      %3105 = sbr.rel (0) target = $region137
    $region136: #{tpu_custom_call.1} parent=1 // pred_region
      %3107 = vsyncadd [#allocation3], 0
      %s3108 = sshll.u32 [#allocation2], 4
      %s3109 = int_to_ptr.vmem [resolvable:$true] %s3108
      %s3110 = sshll.u32 %s67, 4
      %s3111 = int_to_ptr.hbm [resolvable:$true] %s3110
      %3116 = dma.vmem_to_hbm [thread:$0]  %s3109, 256, %s3111, [#allocation3], 128, 128, 8
    $region137: #{tpu_custom_call.1} parent=1 // pred_fallthru
      _
    // Predicated region
    $region138: #{tpu_custom_call.1} parent=1 // pred_check
      _
    $region139: #{tpu_custom_call.1} parent=1 // pred_check_branch
      %3118 = sbr.rel (0) target = $region141
    $region140: #{tpu_custom_call.1} parent=1 // pred_region
      _
    $region141: #{tpu_custom_call.1} parent=1 // pred_fallthru
      _
    // Predicated region
    $region142: #{tpu_custom_call.1} parent=1 // pred_check
      _
    $region143: #{tpu_custom_call.1} parent=1 // pred_check_branch
      %3120 = sbr.rel (0) target = $region145
    $region144: #{tpu_custom_call.1} parent=1 // pred_region
      %3122 = dma.done [#allocation3], 256
    $region145: #{tpu_custom_call.1} parent=1 // pred_fallthru
      _
    // Predicated region
    $region146: #{tpu_custom_call.1} parent=1 // pred_check
      _
    $region147: #{tpu_custom_call.1} parent=1 // pred_check_branch
      %3124 = sbr.rel (0) target = $region149
    $region148: #{tpu_custom_call.1} parent=1 // pred_region
      _
    $region149: #{tpu_custom_call.1} parent=1 // pred_fallthru
      _
    %3125 = vsyncpa [#allocation3], 1

</llo_original>
